<compile_context>
chip_gen: v6e
topology: v6e:2x2x1
jax: 0.10.0
libtpu: 0.0.40
codegen_flags: <defaults>
</compile_context>

<pallas_src>
import math

import jax
import jax.numpy as jnp
from jax.experimental import pallas as pl
from jax.experimental.pallas import tpu as pltpu


# 48 MiB: <= v7x's 64 MiB physical VMEM per TC, plenty on v5e/v6e (128 MiB).
_VMEM_LIMIT = 48 * 1024 * 1024

# Large-but-finite negative for masking (exp(mask - m) underflows cleanly to 0).
_MASK_VALUE = -0.7 * float(jnp.finfo(jnp.float32).max)


def _pick_tile(dim, preferred):
    """Largest tile <= preferred that divides dim and is TPU-layout legal
    (multiple of 128, or the full dim)."""
    t = min(preferred, dim)
    if dim % t == 0 and (t == dim or t % 128 == 0):
        return t
    t = (t // 128) * 128
    while t >= 128:
        if dim % t == 0:
            return t
        t -= 128
    return dim  # fall back to no tiling along this dim (always legal)


# -----------------------------------------------------------------------------
# Kernel 1: tiled matmul with f32 accumulator (W_pack and o_proj, no bias)
# -----------------------------------------------------------------------------
def _matmul_kernel(x_ref, w_ref, o_ref, acc_ref):
    @pl.when(pl.program_id(2) == 0)
    def _():
        acc_ref[...] = jnp.zeros_like(acc_ref)

    acc_ref[...] += jnp.dot(
        x_ref[...], w_ref[...], preferred_element_type=jnp.float32
    )

    @pl.when(pl.program_id(2) == pl.num_programs(2) - 1)
    def _():
        o_ref[...] = acc_ref[...].astype(o_ref.dtype)


def pallas_matmul(x, w, *, tm=512, tn=512, tk=1024):
    """x: (M, K), w: (K, N) -> (M, N). bf16-friendly, tiled, f32 accumulation."""
    M, K = x.shape
    K2, N = w.shape
    assert K == K2
    tm = _pick_tile(M, tm)
    tn = _pick_tile(N, tn)
    tk = _pick_tile(K, tk)
    grid = (M // tm, N // tn, K // tk)

    itemsize = jnp.dtype(x.dtype).itemsize
    cost = pl.CostEstimate(
        flops=2 * M * N * K,
        transcendentals=0,
        bytes_accessed=(M * K + K * N + M * N) * itemsize,
    )

    return pl.pallas_call(
        _matmul_kernel,
        out_shape=jax.ShapeDtypeStruct((M, N), x.dtype),
        grid=grid,
        in_specs=[
            pl.BlockSpec((tm, tk), lambda i, j, k: (i, k)),
            pl.BlockSpec((tk, tn), lambda i, j, k: (k, j)),
        ],
        out_specs=pl.BlockSpec((tm, tn), lambda i, j, k: (i, j)),
        scratch_shapes=[pltpu.VMEM((tm, tn), jnp.float32)],
        compiler_params=pltpu.CompilerParams(
            dimension_semantics=("parallel", "parallel", "arbitrary"),
            vmem_limit_bytes=_VMEM_LIMIT,
        ),
        cost_estimate=cost,
    )(x, w)


# -----------------------------------------------------------------------------
# Kernel 2: flash attention (online softmax, in-kernel causal mask)
# -----------------------------------------------------------------------------
def _flash_attn_kernel(q_ref, k_ref, v_ref, o_ref, m_sc, l_sc, acc_sc):
    qi = pl.program_id(2)
    ki = pl.program_id(3)
    tq = q_ref.shape[1]
    tkv = k_ref.shape[1]

    @pl.when(ki == 0)
    def _():
        m_sc[...] = jnp.full_like(m_sc, -jnp.inf)
        l_sc[...] = jnp.zeros_like(l_sc)
        acc_sc[...] = jnp.zeros_like(acc_sc)

    q_start = qi * tq
    k_start = ki * tkv
    # Some column of this kv tile is causally visible to some row of the q tile.
    visible = k_start < q_start + tq
    # Every column of the tile is visible to every row (fully below the diagonal).
    fully_visible = k_start + tkv - 1 <= q_start

    def _scores():
        # QK^T without an explicit transpose: contract the last dims of both.
        # 1/sqrt(head_dim) is pre-folded into the Q columns of W_pack.
        return jax.lax.dot_general(
            q_ref[0], k_ref[0], (((1,), (1,)), ((), ())),
            preferred_element_type=jnp.float32,
        )  # (tq, tkv) f32

    def _online_softmax_update(s):
        m_prev = m_sc[...]
        m_new = jnp.maximum(m_prev, jnp.max(s, axis=-1, keepdims=True))
        alpha = jnp.exp(m_prev - m_new)               # 0 on the first tile
        p = jnp.exp(s - m_new)
        l_sc[...] = alpha * l_sc[...] + jnp.sum(p, axis=-1, keepdims=True)
        acc_sc[...] = alpha * acc_sc[...] + jnp.dot(
            p.astype(v_ref.dtype), v_ref[0], preferred_element_type=jnp.float32
        )
        m_sc[...] = m_new

    # Fast path: tile entirely in the causal past — no mask VPU work at all.
    @pl.when(fully_visible)
    def _():
        _online_softmax_update(_scores())

    # Diagonal tile: build the causal mask in-kernel (no (S,S) mask in HBM/VMEM).
    @pl.when(visible & jnp.logical_not(fully_visible))
    def _():
        s = _scores()
        row = q_start + jax.lax.broadcasted_iota(jnp.int32, (tq, tkv), 0)
        col = k_start + jax.lax.broadcasted_iota(jnp.int32, (tq, tkv), 1)
        s = jnp.where(col <= row, s, _MASK_VALUE)
        _online_softmax_update(s)

    @pl.when(ki == pl.num_programs(3) - 1)
    def _():
        inv_l = pl.reciprocal(l_sc[...], approx=True)
        o_ref[0] = (acc_sc[...] * inv_l).astype(o_ref.dtype)


def pallas_flash_attention(qkv, *, batch, seq, num_heads, head_dim,
                           q_block=256, kv_block=256):
    """qkv: (B, S, 3*H) packed [q|k|v] projections -> (B, S, H) attn output.

    BlockSpec index_maps slice each head's (seq_tile, head_dim) q/k/v tile
    directly out of the packed projection (no wrapper transposes), and the kv
    block index is clamped to the last causally visible block so skipped kv
    tiles are never DMA'd (Pallas dedups the unchanged block index).
    """
    hidden = num_heads * head_dim
    assert qkv.shape == (batch, seq, 3 * hidden)
    tq = min(q_block, seq)
    tkv = min(kv_block, seq)
    assert seq % tq == 0 and seq % tkv == 0, (seq, tq, tkv)
    nq, nkv = seq // tq, seq // tkv

    def _last_visible(qi):
        # Last kv block containing any causally visible column for this q tile.
        return ((qi + 1) * tq - 1) // tkv

    q_map = lambda b, h, qi, ki: (b, qi, h)                                  # cols [0, H)
    k_map = lambda b, h, qi, ki: (b, jnp.minimum(ki, _last_visible(qi)),
                                  num_heads + h)                             # cols [H, 2H)
    v_map = lambda b, h, qi, ki: (b, jnp.minimum(ki, _last_visible(qi)),
                                  2 * num_heads + h)                         # cols [2H, 3H)
    o_map = lambda b, h, qi, ki: (b, qi, h)

    itemsize = jnp.dtype(qkv.dtype).itemsize
    cost = pl.CostEstimate(
        flops=2 * batch * num_heads * seq * seq * head_dim,   # causal: ~half of 2 matmuls
        transcendentals=batch * num_heads * seq * seq // 2,
        bytes_accessed=4 * batch * seq * hidden * itemsize,   # q,k,v read + out write
    )

    return pl.pallas_call(
        _flash_attn_kernel,
        out_shape=jax.ShapeDtypeStruct((batch, seq, hidden), qkv.dtype),
        grid=(batch, num_heads, nq, nkv),
        in_specs=[
            pl.BlockSpec((1, tq, head_dim), q_map),
            pl.BlockSpec((1, tkv, head_dim), k_map),
            pl.BlockSpec((1, tkv, head_dim), v_map),
        ],
        out_specs=pl.BlockSpec((1, tq, head_dim), o_map),
        scratch_shapes=[
            pltpu.VMEM((tq, 1), jnp.float32),          # running max m
            pltpu.VMEM((tq, 1), jnp.float32),          # running denom l
            pltpu.VMEM((tq, head_dim), jnp.float32),   # output accumulator
        ],
        compiler_params=pltpu.CompilerParams(
            dimension_semantics=("parallel", "parallel", "parallel", "arbitrary"),
            vmem_limit_bytes=_VMEM_LIMIT,
        ),
        cost_estimate=cost,
    )(qkv, qkv, qkv)


# -----------------------------------------------------------------------------
# BaichuanAttention forward
# -----------------------------------------------------------------------------
class BaichuanAttentionPallas:
    def __init__(self, hidden_size, num_heads, key, *, param_dtype=jnp.bfloat16,
                 q_block=256, kv_block=256):
        self.hidden_size = hidden_size
        self.num_heads = num_heads
        self.head_dim = hidden_size // num_heads
        if self.head_dim * num_heads != hidden_size:
            raise ValueError(
                f"hidden_size {hidden_size} not divisible by num_heads {num_heads}")
        # Attention BlockSpecs slice head_dim-wide lane blocks out of hidden;
        # Baichuan uses head_dim == 128, exactly lane-dense.
        assert self.head_dim % 128 == 0, "head_dim must be a multiple of 128"
        self.q_block = q_block
        self.kv_block = kv_block
        self.compute_dtype = param_dtype

        k1, k2 = jax.random.split(key)
        # nn.Linear(hidden, 3*hidden, bias=False): forward is x @ W.T; we store
        # the transposed weights directly. f32 masters, bf16 compute copies.
        init_scale = 1.0 / math.sqrt(hidden_size)
        w_pack_f32 = (
            jax.random.normal(k1, (hidden_size, 3 * hidden_size), jnp.float32)
            * init_scale)
        w_o_f32 = (
            jax.random.normal(k2, (hidden_size, hidden_size), jnp.float32)
            * init_scale)

        # Logical (unscaled) weights — used by the pure-JAX reference.
        self.w_pack = w_pack_f32.astype(param_dtype)
        self.w_o = w_o_f32.astype(param_dtype)

        # Kernel weights: fold 1/sqrt(head_dim) into the Q output columns once,
        # so the flash-attention kernel never multiplies q by sm_scale.
        sm_scale = 1.0 / math.sqrt(self.head_dim)
        col_scale = jnp.concatenate([
            jnp.full((hidden_size,), sm_scale, jnp.float32),
            jnp.ones((2 * hidden_size,), jnp.float32),
        ])
        self.w_pack_scaled = (w_pack_f32 * col_scale[None, :]).astype(param_dtype)

    def __call__(self, hidden_states, attention_mask=None):
        # TODO(synk): past_key_value / use_cache / output_attentions paths and
        # arbitrary additive attention_mask (e.g. padding masks) are not
        # implemented; the causal decoder mask is generated in-kernel.
        B, S, H = hidden_states.shape
        x2d = hidden_states.astype(self.compute_dtype).reshape(B * S, H)

        # QKV projection: tiled bf16 Pallas matmul -> packed (B, S, 3H).
        proj = pallas_matmul(x2d, self.w_pack_scaled).reshape(B, S, 3 * H)

        # Flash attention (causal); output already in (B, S, H) layout.
        attn = pallas_flash_attention(
            proj, batch=B, seq=S, num_heads=self.num_heads,
            head_dim=self.head_dim, q_block=self.q_block, kv_block=self.kv_block)

        # Output projection.
        out = pallas_matmul(attn.reshape(B * S, H), self.w_o)
        return out.reshape(B, S, H).astype(hidden_states.dtype)


# -----------------------------------------------------------------------------
# Pure-JAX reference (mirrors the PyTorch math) for a correctness check
# -----------------------------------------------------------------------------
def _reference_forward(module, hidden_states):
    B, S, H = hidden_states.shape
    nH, D = module.num_heads, module.head_dim
    # Match the kernel's bf16 activation cast so the comparison isolates the
    # kernel math (weights are already the bf16 copies the kernel uses).
    x = hidden_states.astype(jnp.bfloat16).astype(jnp.float32)
    w_pack = module.w_pack.astype(jnp.float32)
    w_o = module.w_o.astype(jnp.float32)

    proj = x.reshape(B * S, H) @ w_pack                              # (B*S, 3H)
    proj = proj.reshape(B, S, 3, nH, D)
    q = jnp.transpose(proj[:, :, 0], (0, 2, 1, 3))                   # (B,nH,S,D)
    k = jnp.transpose(proj[:, :, 1], (0, 2, 1, 3))
    v = jnp.transpose(proj[:, :, 2], (0, 2, 1, 3))
    scores = jnp.einsum("bhqd,bhkd->bhqk", q, k) / math.sqrt(D)
    causal = jnp.tril(jnp.ones((S, S), dtype=bool))
    scores = jnp.where(causal[None, None], scores, jnp.finfo(scores.dtype).min)
    probs = jax.nn.softmax(scores, axis=-1)
    ctx = jnp.einsum("bhqk,bhkd->bhqd", probs, v)
    ctx = jnp.transpose(ctx, (0, 2, 1, 3)).reshape(B * S, H)
    return (ctx @ w_o).reshape(B, S, H)


if __name__ == "__main__":
    key = jax.random.PRNGKey(0)
    k_param, k_input = jax.random.split(key)

    # Small but TPU-tile-aligned shapes: head_dim=128, two q tiles and two kv
    # tiles so the online-softmax accumulation, the diagonal/full-tile split
    # and the clamped (dedup'd) KV DMA path are all exercised.
    batch, seq, hidden, num_heads = 2, 512, 256, 2
    module = BaichuanAttentionPallas(hidden, num_heads, k_param,
                                     q_block=256, kv_block=256)

    hidden_states = jax.random.normal(k_input, (batch, seq, hidden), jnp.float32)

    out = module(hidden_states)
    out = jax.block_until_ready(out)
    assert out.shape == (batch, seq, hidden)
    assert out.dtype == hidden_states.dtype

    ref = _reference_forward(module, hidden_states)
    max_err = float(jnp.max(jnp.abs(out - ref)))
    mean_err = float(jnp.mean(jnp.abs(out - ref)))
    # bf16 end-to-end vs f32 reference: loose max-abs bound plus a tight mean
    # bound (a masking/scaling bug would blow both up by orders of magnitude).
    assert max_err < 1e-1, f"max abs error vs reference: {max_err}"
    assert mean_err < 1e-2, f"mean abs error vs reference: {mean_err}"

    print("KERNEL_OK")
</pallas_src>

<mosaic_0001>
module attributes {stable_mosaic.version = 11 : i64} {
  func.func @_matmul_kernel(%arg0: i32, %arg1: i32, %arg2: i32, %arg3: memref<512x256xbf16, #tpu.memory_space<vmem>>, %arg4: memref<256x384xbf16, #tpu.memory_space<vmem>>, %arg5: memref<512x384xbf16, #tpu.memory_space<vmem>>, %arg6: memref<512x384xf32, #tpu.memory_space<vmem>>) attributes {dimension_semantics = [#tpu.dimension_semantics<parallel>, #tpu.dimension_semantics<parallel>, #tpu.dimension_semantics<arbitrary>], iteration_bounds = array<i64: 2, 2, 1>, scalar_prefetch = 0 : i64, scratch_operands = 1 : i64, tpu.core_type = #tpu.core_type<tc>, window_params = [{transform_indices = @transform_0, window_bounds = array<i64: 512, 256>}, {transform_indices = @transform_1, window_bounds = array<i64: 256, 384>}, {transform_indices = @transform_2, window_bounds = array<i64: 512, 384>}]} {
    %c0_i32 = arith.constant 0 : i32
    %0 = arith.cmpi eq, %arg2, %c0_i32 : i32
    %1 = arith.extui %0 : i1 to i32
    %c0_i32_0 = arith.constant 0 : i32
    %2 = arith.cmpi ne, %1, %c0_i32_0 : i32
    scf.if %2 {
      %cst_10 = arith.constant 0.000000e+00 : f32
      %12 = vector.broadcast %cst_10 : f32 to vector<512x384xf32>
      %c0_11 = arith.constant 0 : index
      %c0_12 = arith.constant 0 : index
      %13 = vector.load %arg6[%c0_11, %c0_12] : memref<512x384xf32, #tpu.memory_space<vmem>>, vector<512x384xf32>
      tpu.vector_store %arg6[%c0_11, %c0_12], %12 {strides = array<i32>} : memref<512x384xf32, #tpu.memory_space<vmem>>, vector<512x384xf32>,
    } else {
    }
    %c0 = arith.constant 0 : index
    %c0_1 = arith.constant 0 : index
    %3 = vector.load %arg6[%c0, %c0_1] : memref<512x384xf32, #tpu.memory_space<vmem>>, vector<512x384xf32>
    %c0_2 = arith.constant 0 : index
    %c0_3 = arith.constant 0 : index
    %4 = vector.load %arg3[%c0_2, %c0_3] : memref<512x256xbf16, #tpu.memory_space<vmem>>, vector<512x256xbf16>
    %c0_4 = arith.constant 0 : index
    %c0_5 = arith.constant 0 : index
    %5 = vector.load %arg4[%c0_4, %c0_5] : memref<256x384xbf16, #tpu.memory_space<vmem>>, vector<256x384xbf16>
    %cst = arith.constant dense<0.000000e+00> : vector<512x384xf32>
    %6 = tpu.matmul %4, %5, %cst {dimension_numbers = #tpu.dot_dimension_numbers<[1], [0], [0], [1], [0, 0, 1, 1], [], []>} : vector<512x256xbf16>, vector<256x384xbf16>, vector<512x384xf32> -> vector<512x384xf32>
    %7 = arith.addf %3, %6 : vector<512x384xf32>
    %c0_6 = arith.constant 0 : index
    %c0_7 = arith.constant 0 : index
    %8 = vector.load %arg6[%c0_6, %c0_7] : memref<512x384xf32, #tpu.memory_space<vmem>>, vector<512x384xf32>
    tpu.vector_store %arg6[%c0_6, %c0_7], %7 {strides = array<i32>} : memref<512x384xf32, #tpu.memory_space<vmem>>, vector<512x384xf32>,
    %c0_i32_8 = arith.constant 0 : i32
    %9 = arith.cmpi eq, %arg2, %c0_i32_8 : i32
    %10 = arith.extui %9 : i1 to i32
    %c0_i32_9 = arith.constant 0 : i32
    %11 = arith.cmpi ne, %10, %c0_i32_9 : i32
    scf.if %11 {
      %c0_10 = arith.constant 0 : index
      %c0_11 = arith.constant 0 : index
      %12 = vector.load %arg6[%c0_10, %c0_11] : memref<512x384xf32, #tpu.memory_space<vmem>>, vector<512x384xf32>
      %13 = arith.truncf %12 : vector<512x384xf32> to vector<512x384xbf16>
      %c0_12 = arith.constant 0 : index
      %c0_13 = arith.constant 0 : index
      %14 = vector.load %arg5[%c0_12, %c0_13] : memref<512x384xbf16, #tpu.memory_space<vmem>>, vector<512x384xbf16>
      tpu.vector_store %arg5[%c0_12, %c0_13], %13 {strides = array<i32>} : memref<512x384xbf16, #tpu.memory_space<vmem>>, vector<512x384xbf16>,
    } else {
    }
    return
  }
  func.func @transform_0(%arg0: i32, %arg1: i32, %arg2: i32) -> (i32, i32) {
    %c0_i32 = arith.constant 0 : i32
    return %arg0, %arg2 : i32, i32
  }
  func.func @transform_1(%arg0: i32, %arg1: i32, %arg2: i32) -> (i32, i32) {
    %c0_i32 = arith.constant 0 : i32
    return %arg2, %arg1 : i32, i32
  }
  func.func @transform_2(%arg0: i32, %arg1: i32, %arg2: i32) -> (i32, i32) {
    %c0_i32 = arith.constant 0 : i32
    return %arg0, %arg1 : i32, i32
  }
}

</mosaic_0001>

<llo_original>
// kernel: tpu_custom_call.1
$region0: #{tpu_custom_call.1}
  #allocation0 [shape = 'u32[]', space=smem, size = 0x4, offset = 0x4, fixed_abs, tag = 'smem constant byte address 0x4 - core index']
  #allocation1 [shape = 'u32[144,128]{1,0:T(1,128)}', space=vmem, size = 0x12000, scoped, tag = 'internal scratch']
  #allocation2 [shape = 'f32[512,384]{1,0:T(8,128)}', space=vmem, size = 0xc0000, scoped, tag = 'scratch operand']
  %s0 = inlined_call_operand.hbm [shape: bf16[1024,256], index: 0, kind: input, shape index: {}]
  %s1 = inlined_call_operand.hbm [shape: bf16[256,768], index: 1, kind: input, shape index: {}]
  %s2 = inlined_call_operand.hbm [shape: bf16[1024,768], index: 2, kind: output, shape index: {}]
  %s3 = sld [smem:[#allocation0]]
  $region57: #{tpu_custom_call.1} parent=0
    _
  %s5 = ssub.s32 1, %s3
  %s6 = scalar_select 0, %s5, %s3
  $region1: #{tpu_custom_call.1} parent=0
    #allocation3 [shape = 'u8[524288]{0}', space=vmem, size = 0x80000, scoped, tag = 'input window, operand 0']
    #allocation4 [shape = 's32[2]{0}', space=sflag, size = 0x8, scoped, tag = 'scoped memory for tpu_custom_call.1']
    #allocation5 [shape = 's32[2]{0}', space=sflag, size = 0x8, scoped, tag = 'scoped memory for tpu_custom_call.1']
    #allocation6 [shape = 'u8[393216]{0}', space=vmem, size = 0x60000, scoped, tag = 'input window, operand 1']
    #allocation7 [shape = 's32[2]{0}', space=sflag, size = 0x8, scoped, tag = 'scoped memory for tpu_custom_call.1']
    #allocation8 [shape = 'u8[786432]{0}', space=vmem, size = 0xc0000, scoped, tag = 'output window, operand 0']
    %7 = vsyncpa [#allocation4], 0
    %s8 = scalar_lea.sflag [#allocation4], 1
    %9 = vsyncpa %s8, 0
    %10 = vsyncpa [#allocation7], 0
    %s11 = scalar_lea.sflag [#allocation7], 1
    %12 = vsyncpa %s11, 0
    %13 = vsyncpa [#allocation5], 0
    %s14 = scalar_lea.sflag [#allocation5], 1
    %15 = vsyncpa %s14, 0
    loop: start=0, step=1, limit=6
    $region2: #{tpu_custom_call.1} parent=1 // loop_pre_header
      _
    $region3: #{tpu_custom_call.1} parent=1 // loop_header
      %s17 = sphi 0, %s21
      %p18 = scmp.ge.s32.totalorder %s17, 6
      %s24 = sphi 0, %s43
      %s25 = sphi 0, %s39
      %s26 = sphi 0, %s35
      %s27 = sphi 0, %s24
      %s28 = sphi 0, %s25
      %s29 = sphi 0, %s26
      %s30 = sphi 0, %s27
      %s31 = sphi 0, %s28
      %s32 = sphi 0, %s29
      %s48 = sphi 0, %s50
      %s51 = sphi 0, %s48
      %s52 = sphi 0, %s51
      %s68 = sphi 0, %s52
      %s76 = sphi 0, %s78
      %s79 = sphi 0, %s76
      %s80 = sphi 0, %s79
      %s96 = sphi 0, %s80
      %s104 = sphi 0, %s106
      %s107 = sphi 0, %s104
      %s108 = sphi 0, %s107
      %s124 = sphi 0, %s108
    $region4: #{tpu_custom_call.1} parent=1 // loop_header_branch
      %20 = sbr.rel (%p18) target = $region8
    $region5: #{tpu_custom_call.1} parent=1 // loop_body
      %s22 = ssub.s32 %s17, 1
      %s23 = ssub.s32 %s17, 2
      %s33 = sadd.s32 1, %s26
      %p34 = scmp.ge.s32.totalorder %s33, 1
      %s35 = scalar_select %p34, 0, %s33
      %s36 = sadd.s32 1, %s25
      %s37 = scalar_select %p34, %s36, %s25
      %p38 = scmp.ge.s32.totalorder %s37, 2
      %s39 = scalar_select %p38, 0, %s37
      %s40 = sadd.s32 1, %s24
      %s41 = scalar_select %p38, %s40, %s24
      %p42 = scmp.ge.s32.totalorder %s41, 2
      %s43 = scalar_select %p42, 0, %s41
      %s44 = ssub.s32 %s24, %s43
      %s45 = ssub.s32 %s26, %s35
      %s46 = sor.u32 %s44, %s45
      %p47 = scmp.eq.s32.totalorder %s46, 0
      %s49 = sadd.s32 %s48, 1
      %s50 = scalar_select %p47, %s48, %s49
      %p53 = pneg %p47
      %p54 = scmp.eq.s32.totalorder %s17, 3
      %p55 = por %p53, %p54
      %p56 = scmp.ne.s32.totalorder %s48, %s51
      %p57 = scmp.eq.s32.totalorder %s17, 0
      %p58 = por %p56, %p57
      %p59 = scmp.ne.s32.totalorder %s48, %s51
      %p60 = scmp.eq.s32.totalorder %s22, 3
      %p61 = por %p59, %p60
      %p62 = scmp.ne.s32.totalorder %s51, %s52
      %p63 = scmp.eq.s32.totalorder %s22, 0
      %p64 = por %p62, %p63
      %p65 = scmp.ne.s32.totalorder %s51, %s52
      %p66 = scmp.eq.s32.totalorder %s23, 3
      %p67 = por %p65, %p66
      %p69 = scmp.ne.s32.totalorder %s52, %s68
      %p70 = scmp.eq.s32.totalorder %s23, 0
      %p71 = por %p69, %p70
      %s72 = ssub.s32 %s26, %s35
      %s73 = ssub.s32 %s25, %s39
      %s74 = sor.u32 %s72, %s73
      %p75 = scmp.eq.s32.totalorder %s74, 0
      %s77 = sadd.s32 %s76, 1
      %s78 = scalar_select %p75, %s76, %s77
      %p81 = pneg %p75
      %p82 = scmp.eq.s32.totalorder %s17, 3
      %p83 = por %p81, %p82
      %p84 = scmp.ne.s32.totalorder %s76, %s79
      %p85 = scmp.eq.s32.totalorder %s17, 0
      %p86 = por %p84, %p85
      %p87 = scmp.ne.s32.totalorder %s76, %s79
      %p88 = scmp.eq.s32.totalorder %s22, 3
      %p89 = por %p87, %p88
      %p90 = scmp.ne.s32.totalorder %s79, %s80
      %p91 = scmp.eq.s32.totalorder %s22, 0
      %p92 = por %p90, %p91
      %p93 = scmp.ne.s32.totalorder %s79, %s80
      %p94 = scmp.eq.s32.totalorder %s23, 3
      %p95 = por %p93, %p94
      %p97 = scmp.ne.s32.totalorder %s80, %s96
      %p98 = scmp.eq.s32.totalorder %s23, 0
      %p99 = por %p97, %p98
      %s100 = ssub.s32 %s24, %s43
      %s101 = ssub.s32 %s25, %s39
      %s102 = sor.u32 %s100, %s101
      %p103 = scmp.eq.s32.totalorder %s102, 0
      %s105 = sadd.s32 %s104, 1
      %s106 = scalar_select %p103, %s104, %s105
      %p109 = pneg %p103
      %p110 = scmp.eq.s32.totalorder %s17, 3
      %p111 = por %p109, %p110
      %p112 = scmp.ne.s32.totalorder %s104, %s107
      %p113 = scmp.eq.s32.totalorder %s17, 0
      %p114 = por %p112, %p113
      %p115 = scmp.ne.s32.totalorder %s104, %s107
      %p116 = scmp.eq.s32.totalorder %s22, 3
      %p117 = por %p115, %p116
      %p118 = scmp.ne.s32.totalorder %s107, %s108
      %p119 = scmp.eq.s32.totalorder %s22, 0
      %p120 = por %p118, %p119
      %p121 = scmp.ne.s32.totalorder %s107, %s108
      %p122 = scmp.eq.s32.totalorder %s23, 3
      %p123 = por %p121, %p122
      %p125 = scmp.ne.s32.totalorder %s108, %s124
      %p126 = scmp.eq.s32.totalorder %s23, 0
      %p127 = por %p125, %p126
      %p128 = scmp.le.s32.totalorder 1, %s17
      %p129 = scmp.lt.s32.totalorder %s17, 5
      %p130 = pnand %p128, %p129
      %p131 = pneg %p130
      // Predicated region
      $region9: #{tpu_custom_call.1} parent=5 // pred_check
        _
      $region10: #{tpu_custom_call.1} parent=5 // pred_check_branch
        %133 = sbr.rel (%p130) target = $region12
      $region11: #{tpu_custom_call.1} parent=5 // pred_region
        %s134 = ssub.s32 %s17, 1
      $region12: #{tpu_custom_call.1} parent=5 // pred_fallthru
        _
      %p135 = scmp.lt.s32.totalorder %s17, 4
      // Predicated region
      $region13: #{tpu_custom_call.1} parent=5 // pred_check
        %p136 = pneg %p135
      $region14: #{tpu_custom_call.1} parent=5 // pred_check_branch
        %138 = sbr.rel (%p136) target = $region16
      $region15: #{tpu_custom_call.1} parent=5 // pred_region
        // Predicated region
        $region17: #{tpu_custom_call.1} parent=15 // pred_check
          %p139 = pneg %p58
        $region18: #{tpu_custom_call.1} parent=15 // pred_check_branch
          %141 = sbr.rel (%p139) target = $region20
        $region19: #{tpu_custom_call.1} parent=15 // pred_region
          %s142 = sand.u32 %s48, 1
          %s143 = scalar_lea.sflag [#allocation4], %s142
          %s144 = sand.u32 %s48, 1
          %s145 = smul.addr %s144, 512
          %s146 = scalar_lea.vmem [#allocation3], %s145
          %s147 = smul.u32 64, %s24
          %s148 = smul.u32 2, %s26
          %s150 = ssub.s32 8192, 8192
          %151 = vsyncadd %s143, %s150
          %s152 = smul.addr %s147, 2
          %s153 = sadd.s32 %s148, %s152
          %s154 = smul.addr %s153, 64
          %s155 = scalar_lea.hbm %s0, %s154
          %s156 = sshll.u32 %s146, 4
          %s157 = int_to_ptr.vmem [resolvable:$true] %s156
          %162 = dma.hbm_to_vmem [thread:$0]  %s155, 8192, %s157, %s143, 128, 128, 8
        $region20: #{tpu_custom_call.1} parent=15 // pred_fallthru
          _
        // Predicated region
        $region21: #{tpu_custom_call.1} parent=15 // pred_check
          %p163 = pneg %p86
        $region22: #{tpu_custom_call.1} parent=15 // pred_check_branch
          %165 = sbr.rel (%p163) target = $region24
        $region23: #{tpu_custom_call.1} parent=15 // pred_region
          %s166 = sand.u32 %s76, 1
          %s167 = scalar_lea.sflag [#allocation7], %s166
          %s168 = sand.u32 %s76, 1
          %s169 = smul.addr %s168, 384
          %s170 = scalar_lea.vmem [#allocation6], %s169
          %s171 = smul.u32 32, %s26
          %s172 = smul.u32 3, %s25
          %s174 = ssub.s32 6144, 6144
          %175 = vsyncadd %s167, %s174
          %s176 = smul.addr %s171, 6
          %s177 = sadd.s32 %s172, %s176
          %s178 = smul.addr %s177, 64
          %s179 = scalar_lea.hbm %s1, %s178
          %s180 = sshll.u32 %s170, 4
          %s181 = int_to_ptr.vmem [resolvable:$true] %s180
          %186 = dma.hbm_to_vmem [thread:$0]  %s179, 6144, %s181, %s167, 384, 192, 12
        $region24: #{tpu_custom_call.1} parent=15 // pred_fallthru
          _
      $region16: #{tpu_custom_call.1} parent=5 // pred_fallthru
        _
      %p187 = scmp.le.s32.totalorder 1, %s17
      %p188 = scmp.lt.s32.totalorder %s17, 5
      %p189 = pnand %p187, %p188
      %p190 = pneg %p189
      // Predicated region
      $region25: #{tpu_custom_call.1} parent=5 // pred_check
        _
      $region26: #{tpu_custom_call.1} parent=5 // pred_check_branch
        %192 = sbr.rel (%p189) target = $region28
      $region27: #{tpu_custom_call.1} parent=5 // pred_region
        %s193 = ssub.s32 %s17, 1
        %s194 = sand.u32 %s51, 1
        %s195 = scalar_lea.sflag [#allocation4], %s194
        %s196 = sand.u32 %s51, 1
        %s197 = smul.addr %s196, 512
        %s198 = scalar_lea.vmem [#allocation3], %s197
        // Predicated region
        $region29: #{tpu_custom_call.1} parent=27 // pred_check
          %p199 = pneg %p64
        $region30: #{tpu_custom_call.1} parent=27 // pred_check_branch
          %201 = sbr.rel (%p199) target = $region32
        $region31: #{tpu_custom_call.1} parent=27 // pred_region
          %202 = dma.done %s195, 8192
        $region32: #{tpu_custom_call.1} parent=27 // pred_fallthru
          _
        %s203 = sand.u32 %s79, 1
        %s204 = scalar_lea.sflag [#allocation7], %s203
        %s205 = sand.u32 %s79, 1
        %s206 = smul.addr %s205, 384
        %s207 = scalar_lea.vmem [#allocation6], %s206
        // Predicated region
        $region33: #{tpu_custom_call.1} parent=27 // pred_check
          %p208 = pneg %p92
        $region34: #{tpu_custom_call.1} parent=27 // pred_check_branch
          %210 = sbr.rel (%p208) target = $region36
        $region35: #{tpu_custom_call.1} parent=27 // pred_region
          %211 = dma.done %s204, 6144
        $region36: #{tpu_custom_call.1} parent=27 // pred_fallthru
          _
        %s212 = sand.u32 %s51, 1
        %s213 = scalar_lea.sflag [#allocation4], %s212
        %s214 = sand.u32 %s51, 1
        %s215 = smul.addr %s214, 512
        %s216 = scalar_lea.vmem [#allocation3], %s215
        %p217 = pneg %p64
        %p218 = pneg %p61
        %s219 = sand.u32 %s79, 1
        %s220 = scalar_lea.sflag [#allocation7], %s219
        %s221 = sand.u32 %s79, 1
        %s222 = smul.addr %s221, 384
        %s223 = scalar_lea.vmem [#allocation6], %s222
        %p224 = pneg %p92
        %p225 = pneg %p89
        %p226 = pneg %p120
        %p227 = pneg %p117
        %s228 = sand.u32 %s107, 1
        %s229 = scalar_lea.sflag [#allocation5], %s228
        %s230 = sand.u32 %s107, 1
        %s231 = smul.addr %s230, 768
        %s232 = scalar_lea.vmem [#allocation8], %s231
        %s233 = smul.u32 64, %s27
        %s234 = smul.u32 2, %s29
        %s235 = smul.u32 32, %s29
        %s236 = smul.u32 3, %s28
        %s237 = smul.u32 64, %s27
        %s238 = smul.u32 3, %s28
        %p240 = scmp.eq.s32.totalorder %s29, 0
        // Predicated region
        $region37: #{tpu_custom_call.1} parent=27 // pred_check
          %p241 = pneg %p240
        $region38: #{tpu_custom_call.1} parent=27 // pred_check_branch
          %243 = sbr.rel (%p241) target = $region40
        $region39: #{tpu_custom_call.1} parent=27 // pred_region
          %244 = vst [vmem:[#allocation2] sm:$0xff] 0.0
          %245 = vst [vmem:[#allocation2 + $0x8] sm:$0xff] 0.0
          %246 = vst [vmem:[#allocation2 + $0x10] sm:$0xff] 0.0
          %247 = vst [vmem:[#allocation2 + $0x18] sm:$0xff] 0.0
          %248 = vst [vmem:[#allocation2 + $0x20] sm:$0xff] 0.0
          %249 = vst [vmem:[#allocation2 + $0x28] sm:$0xff] 0.0
          %250 = vst [vmem:[#allocation2 + $0x30] sm:$0xff] 0.0
          %251 = vst [vmem:[#allocation2 + $0x38] sm:$0xff] 0.0
          %252 = vst [vmem:[#allocation2 + $0x40] sm:$0xff] 0.0
          %253 = vst [vmem:[#allocation2 + $0x48] sm:$0xff] 0.0
          %254 = vst [vmem:[#allocation2 + $0x50] sm:$0xff] 0.0
          %255 = vst [vmem:[#allocation2 + $0x58] sm:$0xff] 0.0
          %256 = vst [vmem:[#allocation2 + $0x60] sm:$0xff] 0.0
          %257 = vst [vmem:[#allocation2 + $0x68] sm:$0xff] 0.0
          %258 = vst [vmem:[#allocation2 + $0x70] sm:$0xff] 0.0
          %259 = vst [vmem:[#allocation2 + $0x78] sm:$0xff] 0.0
          %260 = vst [vmem:[#allocation2 + $0x80] sm:$0xff] 0.0
          %261 = vst [vmem:[#allocation2 + $0x88] sm:$0xff] 0.0
          %262 = vst [vmem:[#allocation2 + $0x90] sm:$0xff] 0.0
          %263 = vst [vmem:[#allocation2 + $0x98] sm:$0xff] 0.0
          %264 = vst [vmem:[#allocation2 + $0xa0] sm:$0xff] 0.0
          %265 = vst [vmem:[#allocation2 + $0xa8] sm:$0xff] 0.0
          %266 = vst [vmem:[#allocation2 + $0xb0] sm:$0xff] 0.0
          %267 = vst [vmem:[#allocation2 + $0xb8] sm:$0xff] 0.0
          %268 = vst [vmem:[#allocation2 + $0xc0] sm:$0xff] 0.0
          %269 = vst [vmem:[#allocation2 + $0xc8] sm:$0xff] 0.0
          %270 = vst [vmem:[#allocation2 + $0xd0] sm:$0xff] 0.0
          %271 = vst [vmem:[#allocation2 + $0xd8] sm:$0xff] 0.0
          %272 = vst [vmem:[#allocation2 + $0xe0] sm:$0xff] 0.0
          %273 = vst [vmem:[#allocation2 + $0xe8] sm:$0xff] 0.0
          %274 = vst [vmem:[#allocation2 + $0xf0] sm:$0xff] 0.0
          %275 = vst [vmem:[#allocation2 + $0xf8] sm:$0xff] 0.0
          %276 = vst [vmem:[#allocation2 + $0x100] sm:$0xff] 0.0
          %277 = vst [vmem:[#allocation2 + $0x108] sm:$0xff] 0.0
          %278 = vst [vmem:[#allocation2 + $0x110] sm:$0xff] 0.0
          %279 = vst [vmem:[#allocation2 + $0x118] sm:$0xff] 0.0
          %280 = vst [vmem:[#allocation2 + $0x120] sm:$0xff] 0.0
          %281 = vst [vmem:[#allocation2 + $0x128] sm:$0xff] 0.0
          %282 = vst [vmem:[#allocation2 + $0x130] sm:$0xff] 0.0
          %283 = vst [vmem:[#allocation2 + $0x138] sm:$0xff] 0.0
          %284 = vst [vmem:[#allocation2 + $0x140] sm:$0xff] 0.0
          %285 = vst [vmem:[#allocation2 + $0x148] sm:$0xff] 0.0
          %286 = vst [vmem:[#allocation2 + $0x150] sm:$0xff] 0.0
          %287 = vst [vmem:[#allocation2 + $0x158] sm:$0xff] 0.0
          %288 = vst [vmem:[#allocation2 + $0x160] sm:$0xff] 0.0
          %289 = vst [vmem:[#allocation2 + $0x168] sm:$0xff] 0.0
          %290 = vst [vmem:[#allocation2 + $0x170] sm:$0xff] 0.0
          %291 = vst [vmem:[#allocation2 + $0x178] sm:$0xff] 0.0
          %292 = vst [vmem:[#allocation2 + $0x180] sm:$0xff] 0.0
          %293 = vst [vmem:[#allocation2 + $0x188] sm:$0xff] 0.0
          %294 = vst [vmem:[#allocation2 + $0x190] sm:$0xff] 0.0
          %295 = vst [vmem:[#allocation2 + $0x198] sm:$0xff] 0.0
          %296 = vst [vmem:[#allocation2 + $0x1a0] sm:$0xff] 0.0
          %297 = vst [vmem:[#allocation2 + $0x1a8] sm:$0xff] 0.0
          %298 = vst [vmem:[#allocation2 + $0x1b0] sm:$0xff] 0.0
          %299 = vst [vmem:[#allocation2 + $0x1b8] sm:$0xff] 0.0
          %300 = vst [vmem:[#allocation2 + $0x1c0] sm:$0xff] 0.0
          %301 = vst [vmem:[#allocation2 + $0x1c8] sm:$0xff] 0.0
          %302 = vst [vmem:[#allocation2 + $0x1d0] sm:$0xff] 0.0
          %303 = vst [vmem:[#allocation2 + $0x1d8] sm:$0xff] 0.0
          %304 = vst [vmem:[#allocation2 + $0x1e0] sm:$0xff] 0.0
          %305 = vst [vmem:[#allocation2 + $0x1e8] sm:$0xff] 0.0
          %306 = vst [vmem:[#allocation2 + $0x1f0] sm:$0xff] 0.0
          %307 = vst [vmem:[#allocation2 + $0x1f8] sm:$0xff] 0.0
          %308 = vst [vmem:[#allocation2 + $0x200] sm:$0xff] 0.0
          %309 = vst [vmem:[#allocation2 + $0x208] sm:$0xff] 0.0
          %310 = vst [vmem:[#allocation2 + $0x210] sm:$0xff] 0.0
          %311 = vst [vmem:[#allocation2 + $0x218] sm:$0xff] 0.0
          %312 = vst [vmem:[#allocation2 + $0x220] sm:$0xff] 0.0
          %313 = vst [vmem:[#allocation2 + $0x228] sm:$0xff] 0.0
          %314 = vst [vmem:[#allocation2 + $0x230] sm:$0xff] 0.0
          %315 = vst [vmem:[#allocation2 + $0x238] sm:$0xff] 0.0
          %316 = vst [vmem:[#allocation2 + $0x240] sm:$0xff] 0.0
          %317 = vst [vmem:[#allocation2 + $0x248] sm:$0xff] 0.0
          %318 = vst [vmem:[#allocation2 + $0x250] sm:$0xff] 0.0
          %319 = vst [vmem:[#allocation2 + $0x258] sm:$0xff] 0.0
          %320 = vst [vmem:[#allocation2 + $0x260] sm:$0xff] 0.0
          %321 = vst [vmem:[#allocation2 + $0x268] sm:$0xff] 0.0
          %322 = vst [vmem:[#allocation2 + $0x270] sm:$0xff] 0.0
          %323 = vst [vmem:[#allocation2 + $0x278] sm:$0xff] 0.0
          %324 = vst [vmem:[#allocation2 + $0x280] sm:$0xff] 0.0
          %325 = vst [vmem:[#allocation2 + $0x288] sm:$0xff] 0.0
          %326 = vst [vmem:[#allocation2 + $0x290] sm:$0xff] 0.0
          %327 = vst [vmem:[#allocation2 + $0x298] sm:$0xff] 0.0
          %328 = vst [vmem:[#allocation2 + $0x2a0] sm:$0xff] 0.0
          %329 = vst [vmem:[#allocation2 + $0x2a8] sm:$0xff] 0.0
          %330 = vst [vmem:[#allocation2 + $0x2b0] sm:$0xff] 0.0
          %331 = vst [vmem:[#allocation2 + $0x2b8] sm:$0xff] 0.0
          %332 = vst [vmem:[#allocation2 + $0x2c0] sm:$0xff] 0.0
          %333 = vst [vmem:[#allocation2 + $0x2c8] sm:$0xff] 0.0
          %334 = vst [vmem:[#allocation2 + $0x2d0] sm:$0xff] 0.0
          %335 = vst [vmem:[#allocation2 + $0x2d8] sm:$0xff] 0.0
          %336 = vst [vmem:[#allocation2 + $0x2e0] sm:$0xff] 0.0
          %337 = vst [vmem:[#allocation2 + $0x2e8] sm:$0xff] 0.0
          %338 = vst [vmem:[#allocation2 + $0x2f0] sm:$0xff] 0.0
          %339 = vst [vmem:[#allocation2 + $0x2f8] sm:$0xff] 0.0
          %340 = vst [vmem:[#allocation2 + $0x300] sm:$0xff] 0.0
          %341 = vst [vmem:[#allocation2 + $0x308] sm:$0xff] 0.0
          %342 = vst [vmem:[#allocation2 + $0x310] sm:$0xff] 0.0
          %343 = vst [vmem:[#allocation2 + $0x318] sm:$0xff] 0.0
          %344 = vst [vmem:[#allocation2 + $0x320] sm:$0xff] 0.0
          %345 = vst [vmem:[#allocation2 + $0x328] sm:$0xff] 0.0
          %346 = vst [vmem:[#allocation2 + $0x330] sm:$0xff] 0.0
          %347 = vst [vmem:[#allocation2 + $0x338] sm:$0xff] 0.0
          %348 = vst [vmem:[#allocation2 + $0x340] sm:$0xff] 0.0
          %349 = vst [vmem:[#allocation2 + $0x348] sm:$0xff] 0.0
          %350 = vst [vmem:[#allocation2 + $0x350] sm:$0xff] 0.0
          %351 = vst [vmem:[#allocation2 + $0x358] sm:$0xff] 0.0
          %352 = vst [vmem:[#allocation2 + $0x360] sm:$0xff] 0.0
          %353 = vst [vmem:[#allocation2 + $0x368] sm:$0xff] 0.0
          %354 = vst [vmem:[#allocation2 + $0x370] sm:$0xff] 0.0
          %355 = vst [vmem:[#allocation2 + $0x378] sm:$0xff] 0.0
          %356 = vst [vmem:[#allocation2 + $0x380] sm:$0xff] 0.0
          %357 = vst [vmem:[#allocation2 + $0x388] sm:$0xff] 0.0
          %358 = vst [vmem:[#allocation2 + $0x390] sm:$0xff] 0.0
          %359 = vst [vmem:[#allocation2 + $0x398] sm:$0xff] 0.0
          %360 = vst [vmem:[#allocation2 + $0x3a0] sm:$0xff] 0.0
          %361 = vst [vmem:[#allocation2 + $0x3a8] sm:$0xff] 0.0
          %362 = vst [vmem:[#allocation2 + $0x3b0] sm:$0xff] 0.0
          %363 = vst [vmem:[#allocation2 + $0x3b8] sm:$0xff] 0.0
          %364 = vst [vmem:[#allocation2 + $0x3c0] sm:$0xff] 0.0
          %365 = vst [vmem:[#allocation2 + $0x3c8] sm:$0xff] 0.0
          %366 = vst [vmem:[#allocation2 + $0x3d0] sm:$0xff] 0.0
          %367 = vst [vmem:[#allocation2 + $0x3d8] sm:$0xff] 0.0
          %368 = vst [vmem:[#allocation2 + $0x3e0] sm:$0xff] 0.0
          %369 = vst [vmem:[#allocation2 + $0x3e8] sm:$0xff] 0.0
          %370 = vst [vmem:[#allocation2 + $0x3f0] sm:$0xff] 0.0
          %371 = vst [vmem:[#allocation2 + $0x3f8] sm:$0xff] 0.0
          %372 = vst [vmem:[#allocation2 + $0x400] sm:$0xff] 0.0
          %373 = vst [vmem:[#allocation2 + $0x408] sm:$0xff] 0.0
          %374 = vst [vmem:[#allocation2 + $0x410] sm:$0xff] 0.0
          %375 = vst [vmem:[#allocation2 + $0x418] sm:$0xff] 0.0
          %376 = vst [vmem:[#allocation2 + $0x420] sm:$0xff] 0.0
          %377 = vst [vmem:[#allocation2 + $0x428] sm:$0xff] 0.0
          %378 = vst [vmem:[#allocation2 + $0x430] sm:$0xff] 0.0
          %379 = vst [vmem:[#allocation2 + $0x438] sm:$0xff] 0.0
          %380 = vst [vmem:[#allocation2 + $0x440] sm:$0xff] 0.0
          %381 = vst [vmem:[#allocation2 + $0x448] sm:$0xff] 0.0
          %382 = vst [vmem:[#allocation2 + $0x450] sm:$0xff] 0.0
          %383 = vst [vmem:[#allocation2 + $0x458] sm:$0xff] 0.0
          %384 = vst [vmem:[#allocation2 + $0x460] sm:$0xff] 0.0
          %385 = vst [vmem:[#allocation2 + $0x468] sm:$0xff] 0.0
          %386 = vst [vmem:[#allocation2 + $0x470] sm:$0xff] 0.0
          %387 = vst [vmem:[#allocation2 + $0x478] sm:$0xff] 0.0
          %388 = vst [vmem:[#allocation2 + $0x480] sm:$0xff] 0.0
          %389 = vst [vmem:[#allocation2 + $0x488] sm:$0xff] 0.0
          %390 = vst [vmem:[#allocation2 + $0x490] sm:$0xff] 0.0
          %391 = vst [vmem:[#allocation2 + $0x498] sm:$0xff] 0.0
          %392 = vst [vmem:[#allocation2 + $0x4a0] sm:$0xff] 0.0
          %393 = vst [vmem:[#allocation2 + $0x4a8] sm:$0xff] 0.0
          %394 = vst [vmem:[#allocation2 + $0x4b0] sm:$0xff] 0.0
          %395 = vst [vmem:[#allocation2 + $0x4b8] sm:$0xff] 0.0
          %396 = vst [vmem:[#allocation2 + $0x4c0] sm:$0xff] 0.0
          %397 = vst [vmem:[#allocation2 + $0x4c8] sm:$0xff] 0.0
          %398 = vst [vmem:[#allocation2 + $0x4d0] sm:$0xff] 0.0
          %399 = vst [vmem:[#allocation2 + $0x4d8] sm:$0xff] 0.0
          %400 = vst [vmem:[#allocation2 + $0x4e0] sm:$0xff] 0.0
          %401 = vst [vmem:[#allocation2 + $0x4e8] sm:$0xff] 0.0
          %402 = vst [vmem:[#allocation2 + $0x4f0] sm:$0xff] 0.0
          %403 = vst [vmem:[#allocation2 + $0x4f8] sm:$0xff] 0.0
          %404 = vst [vmem:[#allocation2 + $0x500] sm:$0xff] 0.0
          %405 = vst [vmem:[#allocation2 + $0x508] sm:$0xff] 0.0
          %406 = vst [vmem:[#allocation2 + $0x510] sm:$0xff] 0.0
          %407 = vst [vmem:[#allocation2 + $0x518] sm:$0xff] 0.0
          %408 = vst [vmem:[#allocation2 + $0x520] sm:$0xff] 0.0
          %409 = vst [vmem:[#allocation2 + $0x528] sm:$0xff] 0.0
          %410 = vst [vmem:[#allocation2 + $0x530] sm:$0xff] 0.0
          %411 = vst [vmem:[#allocation2 + $0x538] sm:$0xff] 0.0
          %412 = vst [vmem:[#allocation2 + $0x540] sm:$0xff] 0.0
          %413 = vst [vmem:[#allocation2 + $0x548] sm:$0xff] 0.0
          %414 = vst [vmem:[#allocation2 + $0x550] sm:$0xff] 0.0
          %415 = vst [vmem:[#allocation2 + $0x558] sm:$0xff] 0.0
          %416 = vst [vmem:[#allocation2 + $0x560] sm:$0xff] 0.0
          %417 = vst [vmem:[#allocation2 + $0x568] sm:$0xff] 0.0
          %418 = vst [vmem:[#allocation2 + $0x570] sm:$0xff] 0.0
          %419 = vst [vmem:[#allocation2 + $0x578] sm:$0xff] 0.0
          %420 = vst [vmem:[#allocation2 + $0x580] sm:$0xff] 0.0
          %421 = vst [vmem:[#allocation2 + $0x588] sm:$0xff] 0.0
          %422 = vst [vmem:[#allocation2 + $0x590] sm:$0xff] 0.0
          %423 = vst [vmem:[#allocation2 + $0x598] sm:$0xff] 0.0
          %424 = vst [vmem:[#allocation2 + $0x5a0] sm:$0xff] 0.0
          %425 = vst [vmem:[#allocation2 + $0x5a8] sm:$0xff] 0.0
          %426 = vst [vmem:[#allocation2 + $0x5b0] sm:$0xff] 0.0
          %427 = vst [vmem:[#allocation2 + $0x5b8] sm:$0xff] 0.0
          %428 = vst [vmem:[#allocation2 + $0x5c0] sm:$0xff] 0.0
          %429 = vst [vmem:[#allocation2 + $0x5c8] sm:$0xff] 0.0
          %430 = vst [vmem:[#allocation2 + $0x5d0] sm:$0xff] 0.0
          %431 = vst [vmem:[#allocation2 + $0x5d8] sm:$0xff] 0.0
          %432 = vst [vmem:[#allocation2 + $0x5e0] sm:$0xff] 0.0
          %433 = vst [vmem:[#allocation2 + $0x5e8] sm:$0xff] 0.0
          %434 = vst [vmem:[#allocation2 + $0x5f0] sm:$0xff] 0.0
          %435 = vst [vmem:[#allocation2 + $0x5f8] sm:$0xff] 0.0
        $region40: #{tpu_custom_call.1} parent=27 // pred_fallthru
          _
        %v436 = vld [vmem:[#allocation2] sm:$0xff]
        %v437 = vld [vmem:[#allocation2 + $0x8] sm:$0xff]
        %v438 = vld [vmem:[#allocation2 + $0x10] sm:$0xff]
        %v439 = vld [vmem:[#allocation2 + $0x18] sm:$0xff]
        %v440 = vld [vmem:[#allocation2 + $0x20] sm:$0xff]
        %v441 = vld [vmem:[#allocation2 + $0x28] sm:$0xff]
        %v442 = vld [vmem:[#allocation2 + $0x30] sm:$0xff]
        %v443 = vld [vmem:[#allocation2 + $0x38] sm:$0xff]
        %v444 = vld [vmem:[#allocation2 + $0x40] sm:$0xff]
        %v445 = vld [vmem:[#allocation2 + $0x48] sm:$0xff]
        %v446 = vld [vmem:[#allocation2 + $0x50] sm:$0xff]
        %v447 = vld [vmem:[#allocation2 + $0x58] sm:$0xff]
        %v448 = vld [vmem:[#allocation2 + $0x60] sm:$0xff]
        %v449 = vld [vmem:[#allocation2 + $0x68] sm:$0xff]
        %v450 = vld [vmem:[#allocation2 + $0x70] sm:$0xff]
        %v451 = vld [vmem:[#allocation2 + $0x78] sm:$0xff]
        %v452 = vld [vmem:[#allocation2 + $0x80] sm:$0xff]
        %v453 = vld [vmem:[#allocation2 + $0x88] sm:$0xff]
        %v454 = vld [vmem:[#allocation2 + $0x90] sm:$0xff]
        %v455 = vld [vmem:[#allocation2 + $0x98] sm:$0xff]
        %v456 = vld [vmem:[#allocation2 + $0xa0] sm:$0xff]
        %v457 = vld [vmem:[#allocation2 + $0xa8] sm:$0xff]
        %v458 = vld [vmem:[#allocation2 + $0xb0] sm:$0xff]
        %v459 = vld [vmem:[#allocation2 + $0xb8] sm:$0xff]
        %v460 = vld [vmem:[#allocation2 + $0xc0] sm:$0xff]
        %v461 = vld [vmem:[#allocation2 + $0xc8] sm:$0xff]
        %v462 = vld [vmem:[#allocation2 + $0xd0] sm:$0xff]
        %v463 = vld [vmem:[#allocation2 + $0xd8] sm:$0xff]
        %v464 = vld [vmem:[#allocation2 + $0xe0] sm:$0xff]
        %v465 = vld [vmem:[#allocation2 + $0xe8] sm:$0xff]
        %v466 = vld [vmem:[#allocation2 + $0xf0] sm:$0xff]
        %v467 = vld [vmem:[#allocation2 + $0xf8] sm:$0xff]
        %v468 = vld [vmem:[#allocation2 + $0x100] sm:$0xff]
        %v469 = vld [vmem:[#allocation2 + $0x108] sm:$0xff]
        %v470 = vld [vmem:[#allocation2 + $0x110] sm:$0xff]
        %v471 = vld [vmem:[#allocation2 + $0x118] sm:$0xff]
        %v472 = vld [vmem:[#allocation2 + $0x120] sm:$0xff]
        %v473 = vld [vmem:[#allocation2 + $0x128] sm:$0xff]
        %v474 = vld [vmem:[#allocation2 + $0x130] sm:$0xff]
        %v475 = vld [vmem:[#allocation2 + $0x138] sm:$0xff]
        %v476 = vld [vmem:[#allocation2 + $0x140] sm:$0xff]
        %v477 = vld [vmem:[#allocation2 + $0x148] sm:$0xff]
        %v478 = vld [vmem:[#allocation2 + $0x150] sm:$0xff]
        %v479 = vld [vmem:[#allocation2 + $0x158] sm:$0xff]
        %v480 = vld [vmem:[#allocation2 + $0x160] sm:$0xff]
        %v481 = vld [vmem:[#allocation2 + $0x168] sm:$0xff]
        %v482 = vld [vmem:[#allocation2 + $0x170] sm:$0xff]
        %v483 = vld [vmem:[#allocation2 + $0x178] sm:$0xff]
        %v484 = vld [vmem:[#allocation2 + $0x180] sm:$0xff]
        %v485 = vld [vmem:[#allocation2 + $0x188] sm:$0xff]
        %v486 = vld [vmem:[#allocation2 + $0x190] sm:$0xff]
        %v487 = vld [vmem:[#allocation2 + $0x198] sm:$0xff]
        %v488 = vld [vmem:[#allocation2 + $0x1a0] sm:$0xff]
        %v489 = vld [vmem:[#allocation2 + $0x1a8] sm:$0xff]
        %v490 = vld [vmem:[#allocation2 + $0x1b0] sm:$0xff]
        %v491 = vld [vmem:[#allocation2 + $0x1b8] sm:$0xff]
        %v492 = vld [vmem:[#allocation2 + $0x1c0] sm:$0xff]
        %v493 = vld [vmem:[#allocation2 + $0x1c8] sm:$0xff]
        %v494 = vld [vmem:[#allocation2 + $0x1d0] sm:$0xff]
        %v495 = vld [vmem:[#allocation2 + $0x1d8] sm:$0xff]
        %v496 = vld [vmem:[#allocation2 + $0x1e0] sm:$0xff]
        %v497 = vld [vmem:[#allocation2 + $0x1e8] sm:$0xff]
        %v498 = vld [vmem:[#allocation2 + $0x1f0] sm:$0xff]
        %v499 = vld [vmem:[#allocation2 + $0x1f8] sm:$0xff]
        %v500 = vld [vmem:[#allocation2 + $0x200] sm:$0xff]
        %v501 = vld [vmem:[#allocation2 + $0x208] sm:$0xff]
        %v502 = vld [vmem:[#allocation2 + $0x210] sm:$0xff]
        %v503 = vld [vmem:[#allocation2 + $0x218] sm:$0xff]
        %v504 = vld [vmem:[#allocation2 + $0x220] sm:$0xff]
        %v505 = vld [vmem:[#allocation2 + $0x228] sm:$0xff]
        %v506 = vld [vmem:[#allocation2 + $0x230] sm:$0xff]
        %v507 = vld [vmem:[#allocation2 + $0x238] sm:$0xff]
        %v508 = vld [vmem:[#allocation2 + $0x240] sm:$0xff]
        %v509 = vld [vmem:[#allocation2 + $0x248] sm:$0xff]
        %v510 = vld [vmem:[#allocation2 + $0x250] sm:$0xff]
        %v511 = vld [vmem:[#allocation2 + $0x258] sm:$0xff]
        %v512 = vld [vmem:[#allocation2 + $0x260] sm:$0xff]
        %v513 = vld [vmem:[#allocation2 + $0x268] sm:$0xff]
        %v514 = vld [vmem:[#allocation2 + $0x270] sm:$0xff]
        %v515 = vld [vmem:[#allocation2 + $0x278] sm:$0xff]
        %v516 = vld [vmem:[#allocation2 + $0x280] sm:$0xff]
        %v517 = vld [vmem:[#allocation2 + $0x288] sm:$0xff]
        %v518 = vld [vmem:[#allocation2 + $0x290] sm:$0xff]
        %v519 = vld [vmem:[#allocation2 + $0x298] sm:$0xff]
        %v520 = vld [vmem:[#allocation2 + $0x2a0] sm:$0xff]
        %v521 = vld [vmem:[#allocation2 + $0x2a8] sm:$0xff]
        %v522 = vld [vmem:[#allocation2 + $0x2b0] sm:$0xff]
        %v523 = vld [vmem:[#allocation2 + $0x2b8] sm:$0xff]
        %v524 = vld [vmem:[#allocation2 + $0x2c0] sm:$0xff]
        %v525 = vld [vmem:[#allocation2 + $0x2c8] sm:$0xff]
        %v526 = vld [vmem:[#allocation2 + $0x2d0] sm:$0xff]
        %v527 = vld [vmem:[#allocation2 + $0x2d8] sm:$0xff]
        %v528 = vld [vmem:[#allocation2 + $0x2e0] sm:$0xff]
        %v529 = vld [vmem:[#allocation2 + $0x2e8] sm:$0xff]
        %v530 = vld [vmem:[#allocation2 + $0x2f0] sm:$0xff]
        %v531 = vld [vmem:[#allocation2 + $0x2f8] sm:$0xff]
        %v532 = vld [vmem:[#allocation2 + $0x300] sm:$0xff]
        %v533 = vld [vmem:[#allocation2 + $0x308] sm:$0xff]
        %v534 = vld [vmem:[#allocation2 + $0x310] sm:$0xff]
        %v535 = vld [vmem:[#allocation2 + $0x318] sm:$0xff]
        %v536 = vld [vmem:[#allocation2 + $0x320] sm:$0xff]
        %v537 = vld [vmem:[#allocation2 + $0x328] sm:$0xff]
        %v538 = vld [vmem:[#allocation2 + $0x330] sm:$0xff]
        %v539 = vld [vmem:[#allocation2 + $0x338] sm:$0xff]
        %v540 = vld [vmem:[#allocation2 + $0x340] sm:$0xff]
        %v541 = vld [vmem:[#allocation2 + $0x348] sm:$0xff]
        %v542 = vld [vmem:[#allocation2 + $0x350] sm:$0xff]
        %v543 = vld [vmem:[#allocation2 + $0x358] sm:$0xff]
        %v544 = vld [vmem:[#allocation2 + $0x360] sm:$0xff]
        %v545 = vld [vmem:[#allocation2 + $0x368] sm:$0xff]
        %v546 = vld [vmem:[#allocation2 + $0x370] sm:$0xff]
        %v547 = vld [vmem:[#allocation2 + $0x378] sm:$0xff]
        %v548 = vld [vmem:[#allocation2 + $0x380] sm:$0xff]
        %v549 = vld [vmem:[#allocation2 + $0x388] sm:$0xff]
        %v550 = vld [vmem:[#allocation2 + $0x390] sm:$0xff]
        %v551 = vld [vmem:[#allocation2 + $0x398] sm:$0xff]
        %v552 = vld [vmem:[#allocation2 + $0x3a0] sm:$0xff]
        %v553 = vld [vmem:[#allocation2 + $0x3a8] sm:$0xff]
        %v554 = vld [vmem:[#allocation2 + $0x3b0] sm:$0xff]
        %v555 = vld [vmem:[#allocation2 + $0x3b8] sm:$0xff]
        %v556 = vld [vmem:[#allocation2 + $0x3c0] sm:$0xff]
        %v557 = vld [vmem:[#allocation2 + $0x3c8] sm:$0xff]
        %v558 = vld [vmem:[#allocation2 + $0x3d0] sm:$0xff]
        %v559 = vld [vmem:[#allocation2 + $0x3d8] sm:$0xff]
        %v560 = vld [vmem:[#allocation2 + $0x3e0] sm:$0xff]
        %v561 = vld [vmem:[#allocation2 + $0x3e8] sm:$0xff]
        %v562 = vld [vmem:[#allocation2 + $0x3f0] sm:$0xff]
        %v563 = vld [vmem:[#allocation2 + $0x3f8] sm:$0xff]
        %v564 = vld [vmem:[#allocation2 + $0x400] sm:$0xff]
        %v565 = vld [vmem:[#allocation2 + $0x408] sm:$0xff]
        %v566 = vld [vmem:[#allocation2 + $0x410] sm:$0xff]
        %v567 = vld [vmem:[#allocation2 + $0x418] sm:$0xff]
        %v568 = vld [vmem:[#allocation2 + $0x420] sm:$0xff]
        %v569 = vld [vmem:[#allocation2 + $0x428] sm:$0xff]
        %v570 = vld [vmem:[#allocation2 + $0x430] sm:$0xff]
        %v571 = vld [vmem:[#allocation2 + $0x438] sm:$0xff]
        %v572 = vld [vmem:[#allocation2 + $0x440] sm:$0xff]
        %v573 = vld [vmem:[#allocation2 + $0x448] sm:$0xff]
        %v574 = vld [vmem:[#allocation2 + $0x450] sm:$0xff]
        %v575 = vld [vmem:[#allocation2 + $0x458] sm:$0xff]
        %v576 = vld [vmem:[#allocation2 + $0x460] sm:$0xff]
        %v577 = vld [vmem:[#allocation2 + $0x468] sm:$0xff]
        %v578 = vld [vmem:[#allocation2 + $0x470] sm:$0xff]
        %v579 = vld [vmem:[#allocation2 + $0x478] sm:$0xff]
        %v580 = vld [vmem:[#allocation2 + $0x480] sm:$0xff]
        %v581 = vld [vmem:[#allocation2 + $0x488] sm:$0xff]
        %v582 = vld [vmem:[#allocation2 + $0x490] sm:$0xff]
        %v583 = vld [vmem:[#allocation2 + $0x498] sm:$0xff]
        %v584 = vld [vmem:[#allocation2 + $0x4a0] sm:$0xff]
        %v585 = vld [vmem:[#allocation2 + $0x4a8] sm:$0xff]
        %v586 = vld [vmem:[#allocation2 + $0x4b0] sm:$0xff]
        %v587 = vld [vmem:[#allocation2 + $0x4b8] sm:$0xff]
        %v588 = vld [vmem:[#allocation2 + $0x4c0] sm:$0xff]
        %v589 = vld [vmem:[#allocation2 + $0x4c8] sm:$0xff]
        %v590 = vld [vmem:[#allocation2 + $0x4d0] sm:$0xff]
        %v591 = vld [vmem:[#allocation2 + $0x4d8] sm:$0xff]
        %v592 = vld [vmem:[#allocation2 + $0x4e0] sm:$0xff]
        %v593 = vld [vmem:[#allocation2 + $0x4e8] sm:$0xff]
        %v594 = vld [vmem:[#allocation2 + $0x4f0] sm:$0xff]
        %v595 = vld [vmem:[#allocation2 + $0x4f8] sm:$0xff]
        %v596 = vld [vmem:[#allocation2 + $0x500] sm:$0xff]
        %v597 = vld [vmem:[#allocation2 + $0x508] sm:$0xff]
        %v598 = vld [vmem:[#allocation2 + $0x510] sm:$0xff]
        %v599 = vld [vmem:[#allocation2 + $0x518] sm:$0xff]
        %v600 = vld [vmem:[#allocation2 + $0x520] sm:$0xff]
        %v601 = vld [vmem:[#allocation2 + $0x528] sm:$0xff]
        %v602 = vld [vmem:[#allocation2 + $0x530] sm:$0xff]
        %v603 = vld [vmem:[#allocation2 + $0x538] sm:$0xff]
        %v604 = vld [vmem:[#allocation2 + $0x540] sm:$0xff]
        %v605 = vld [vmem:[#allocation2 + $0x548] sm:$0xff]
        %v606 = vld [vmem:[#allocation2 + $0x550] sm:$0xff]
        %v607 = vld [vmem:[#allocation2 + $0x558] sm:$0xff]
        %v608 = vld [vmem:[#allocation2 + $0x560] sm:$0xff]
        %v609 = vld [vmem:[#allocation2 + $0x568] sm:$0xff]
        %v610 = vld [vmem:[#allocation2 + $0x570] sm:$0xff]
        %v611 = vld [vmem:[#allocation2 + $0x578] sm:$0xff]
        %v612 = vld [vmem:[#allocation2 + $0x580] sm:$0xff]
        %v613 = vld [vmem:[#allocation2 + $0x588] sm:$0xff]
        %v614 = vld [vmem:[#allocation2 + $0x590] sm:$0xff]
        %v615 = vld [vmem:[#allocation2 + $0x598] sm:$0xff]
        %v616 = vld [vmem:[#allocation2 + $0x5a0] sm:$0xff]
        %v617 = vld [vmem:[#allocation2 + $0x5a8] sm:$0xff]
        %v618 = vld [vmem:[#allocation2 + $0x5b0] sm:$0xff]
        %v619 = vld [vmem:[#allocation2 + $0x5b8] sm:$0xff]
        %v620 = vld [vmem:[#allocation2 + $0x5c0] sm:$0xff]
        %v621 = vld [vmem:[#allocation2 + $0x5c8] sm:$0xff]
        %v622 = vld [vmem:[#allocation2 + $0x5d0] sm:$0xff]
        %v623 = vld [vmem:[#allocation2 + $0x5d8] sm:$0xff]
        %v624 = vld [vmem:[#allocation2 + $0x5e0] sm:$0xff]
        %v625 = vld [vmem:[#allocation2 + $0x5e8] sm:$0xff]
        %v626 = vld [vmem:[#allocation2 + $0x5f0] sm:$0xff]
        %v627 = vld [vmem:[#allocation2 + $0x5f8] sm:$0xff]
        %v628 = vld [vmem:[%s198] sm:$0xff]
        %v629 = vld [vmem:[%s198 + $0x8] sm:$0xff]
        %v630 = vld [vmem:[%s198 + $0x10] sm:$0xff]
        %v631 = vld [vmem:[%s198 + $0x18] sm:$0xff]
        %v632 = vld [vmem:[%s198 + $0x20] sm:$0xff]
        %v633 = vld [vmem:[%s198 + $0x28] sm:$0xff]
        %v634 = vld [vmem:[%s198 + $0x30] sm:$0xff]
        %v635 = vld [vmem:[%s198 + $0x38] sm:$0xff]
        %v636 = vld [vmem:[%s198 + $0x40] sm:$0xff]
        %v637 = vld [vmem:[%s198 + $0x48] sm:$0xff]
        %v638 = vld [vmem:[%s198 + $0x50] sm:$0xff]
        %v639 = vld [vmem:[%s198 + $0x58] sm:$0xff]
        %v640 = vld [vmem:[%s198 + $0x60] sm:$0xff]
        %v641 = vld [vmem:[%s198 + $0x68] sm:$0xff]
        %v642 = vld [vmem:[%s198 + $0x70] sm:$0xff]
        %v643 = vld [vmem:[%s198 + $0x78] sm:$0xff]
        %v644 = vld [vmem:[%s198 + $0x80] sm:$0xff]
        %v645 = vld [vmem:[%s198 + $0x88] sm:$0xff]
        %v646 = vld [vmem:[%s198 + $0x90] sm:$0xff]
        %v647 = vld [vmem:[%s198 + $0x98] sm:$0xff]
        %v648 = vld [vmem:[%s198 + $0xa0] sm:$0xff]
        %v649 = vld [vmem:[%s198 + $0xa8] sm:$0xff]
        %v650 = vld [vmem:[%s198 + $0xb0] sm:$0xff]
        %v651 = vld [vmem:[%s198 + $0xb8] sm:$0xff]
        %v652 = vld [vmem:[%s198 + $0xc0] sm:$0xff]
        %v653 = vld [vmem:[%s198 + $0xc8] sm:$0xff]
        %v654 = vld [vmem:[%s198 + $0xd0] sm:$0xff]
        %v655 = vld [vmem:[%s198 + $0xd8] sm:$0xff]
        %v656 = vld [vmem:[%s198 + $0xe0] sm:$0xff]
        %v657 = vld [vmem:[%s198 + $0xe8] sm:$0xff]
        %v658 = vld [vmem:[%s198 + $0xf0] sm:$0xff]
        %v659 = vld [vmem:[%s198 + $0xf8] sm:$0xff]
        %v660 = vld [vmem:[%s198 + $0x100] sm:$0xff]
        %v661 = vld [vmem:[%s198 + $0x108] sm:$0xff]
        %v662 = vld [vmem:[%s198 + $0x110] sm:$0xff]
        %v663 = vld [vmem:[%s198 + $0x118] sm:$0xff]
        %v664 = vld [vmem:[%s198 + $0x120] sm:$0xff]
        %v665 = vld [vmem:[%s198 + $0x128] sm:$0xff]
        %v666 = vld [vmem:[%s198 + $0x130] sm:$0xff]
        %v667 = vld [vmem:[%s198 + $0x138] sm:$0xff]
        %v668 = vld [vmem:[%s198 + $0x140] sm:$0xff]
        %v669 = vld [vmem:[%s198 + $0x148] sm:$0xff]
        %v670 = vld [vmem:[%s198 + $0x150] sm:$0xff]
        %v671 = vld [vmem:[%s198 + $0x158] sm:$0xff]
        %v672 = vld [vmem:[%s198 + $0x160] sm:$0xff]
        %v673 = vld [vmem:[%s198 + $0x168] sm:$0xff]
        %v674 = vld [vmem:[%s198 + $0x170] sm:$0xff]
        %v675 = vld [vmem:[%s198 + $0x178] sm:$0xff]
        %v676 = vld [vmem:[%s198 + $0x180] sm:$0xff]
        %v677 = vld [vmem:[%s198 + $0x188] sm:$0xff]
        %v678 = vld [vmem:[%s198 + $0x190] sm:$0xff]
        %v679 = vld [vmem:[%s198 + $0x198] sm:$0xff]
        %v680 = vld [vmem:[%s198 + $0x1a0] sm:$0xff]
        %v681 = vld [vmem:[%s198 + $0x1a8] sm:$0xff]
        %v682 = vld [vmem:[%s198 + $0x1b0] sm:$0xff]
        %v683 = vld [vmem:[%s198 + $0x1b8] sm:$0xff]
        %v684 = vld [vmem:[%s198 + $0x1c0] sm:$0xff]
        %v685 = vld [vmem:[%s198 + $0x1c8] sm:$0xff]
        %v686 = vld [vmem:[%s198 + $0x1d0] sm:$0xff]
        %v687 = vld [vmem:[%s198 + $0x1d8] sm:$0xff]
        %v688 = vld [vmem:[%s198 + $0x1e0] sm:$0xff]
        %v689 = vld [vmem:[%s198 + $0x1e8] sm:$0xff]
        %v690 = vld [vmem:[%s198 + $0x1f0] sm:$0xff]
        %v691 = vld [vmem:[%s198 + $0x1f8] sm:$0xff]
        %v692 = vld [vmem:[%s207] sm:$0xff]
        %v693 = vld [vmem:[%s207 + $0x8] sm:$0xf]
        %v694 = vld [vmem:[%s207 + $0xc] sm:$0xff]
        %v695 = vld [vmem:[%s207 + $0x14] sm:$0xf]
        %v696 = vld [vmem:[%s207 + $0x18] sm:$0xff]
        %v697 = vld [vmem:[%s207 + $0x20] sm:$0xf]
        %v698 = vld [vmem:[%s207 + $0x24] sm:$0xff]
        %v699 = vld [vmem:[%s207 + $0x2c] sm:$0xf]
        %v700 = vld [vmem:[%s207 + $0x30] sm:$0xff]
        %v701 = vld [vmem:[%s207 + $0x38] sm:$0xf]
        %v702 = vld [vmem:[%s207 + $0x3c] sm:$0xff]
        %v703 = vld [vmem:[%s207 + $0x44] sm:$0xf]
        %v704 = vld [vmem:[%s207 + $0x48] sm:$0xff]
        %v705 = vld [vmem:[%s207 + $0x50] sm:$0xf]
        %v706 = vld [vmem:[%s207 + $0x54] sm:$0xff]
        %v707 = vld [vmem:[%s207 + $0x5c] sm:$0xf]
        %v708 = vld [vmem:[%s207 + $0x60] sm:$0xff]
        %v709 = vld [vmem:[%s207 + $0x68] sm:$0xf]
        %v710 = vld [vmem:[%s207 + $0x6c] sm:$0xff]
        %v711 = vld [vmem:[%s207 + $0x74] sm:$0xf]
        %v712 = vld [vmem:[%s207 + $0x78] sm:$0xff]
        %v713 = vld [vmem:[%s207 + $0x80] sm:$0xf]
        %v714 = vld [vmem:[%s207 + $0x84] sm:$0xff]
        %v715 = vld [vmem:[%s207 + $0x8c] sm:$0xf]
        %v716 = vld [vmem:[%s207 + $0x90] sm:$0xff]
        %v717 = vld [vmem:[%s207 + $0x98] sm:$0xf]
        %v718 = vld [vmem:[%s207 + $0x9c] sm:$0xff]
        %v719 = vld [vmem:[%s207 + $0xa4] sm:$0xf]
        %v720 = vld [vmem:[%s207 + $0xa8] sm:$0xff]
        %v721 = vld [vmem:[%s207 + $0xb0] sm:$0xf]
        %v722 = vld [vmem:[%s207 + $0xb4] sm:$0xff]
        %v723 = vld [vmem:[%s207 + $0xbc] sm:$0xf]
        %v724 = vld [vmem:[%s207 + $0xc0] sm:$0xff]
        %v725 = vld [vmem:[%s207 + $0xc8] sm:$0xf]
        %v726 = vld [vmem:[%s207 + $0xcc] sm:$0xff]
        %v727 = vld [vmem:[%s207 + $0xd4] sm:$0xf]
        %v728 = vld [vmem:[%s207 + $0xd8] sm:$0xff]
        %v729 = vld [vmem:[%s207 + $0xe0] sm:$0xf]
        %v730 = vld [vmem:[%s207 + $0xe4] sm:$0xff]
        %v731 = vld [vmem:[%s207 + $0xec] sm:$0xf]
        %v732 = vld [vmem:[%s207 + $0xf0] sm:$0xff]
        %v733 = vld [vmem:[%s207 + $0xf8] sm:$0xf]
        %v734 = vld [vmem:[%s207 + $0xfc] sm:$0xff]
        %v735 = vld [vmem:[%s207 + $0x104] sm:$0xf]
        %v736 = vld [vmem:[%s207 + $0x108] sm:$0xff]
        %v737 = vld [vmem:[%s207 + $0x110] sm:$0xf]
        %v738 = vld [vmem:[%s207 + $0x114] sm:$0xff]
        %v739 = vld [vmem:[%s207 + $0x11c] sm:$0xf]
        %v740 = vld [vmem:[%s207 + $0x120] sm:$0xff]
        %v741 = vld [vmem:[%s207 + $0x128] sm:$0xf]
        %v742 = vld [vmem:[%s207 + $0x12c] sm:$0xff]
        %v743 = vld [vmem:[%s207 + $0x134] sm:$0xf]
        %v744 = vld [vmem:[%s207 + $0x138] sm:$0xff]
        %v745 = vld [vmem:[%s207 + $0x140] sm:$0xf]
        %v746 = vld [vmem:[%s207 + $0x144] sm:$0xff]
        %v747 = vld [vmem:[%s207 + $0x14c] sm:$0xf]
        %v748 = vld [vmem:[%s207 + $0x150] sm:$0xff]
        %v749 = vld [vmem:[%s207 + $0x158] sm:$0xf]
        %v750 = vld [vmem:[%s207 + $0x15c] sm:$0xff]
        %v751 = vld [vmem:[%s207 + $0x164] sm:$0xf]
        %v752 = vld [vmem:[%s207 + $0x168] sm:$0xff]
        %v753 = vld [vmem:[%s207 + $0x170] sm:$0xf]
        %v754 = vld [vmem:[%s207 + $0x174] sm:$0xff]
        %v755 = vld [vmem:[%s207 + $0x17c] sm:$0xf]
        %v820 = vunpack.c.l.b16 %v628
        %v821 = vunpack.c.h.b16 %v628
        %v822 = vunpack.c.l.b16 %v629
        %v823 = vunpack.c.h.b16 %v629
        %v824 = vunpack.c.l.b16 %v630
        %v825 = vunpack.c.h.b16 %v630
        %v826 = vunpack.c.l.b16 %v631
        %v827 = vunpack.c.h.b16 %v631
        %v828 = vunpack.c.l.b16 %v632
        %v829 = vunpack.c.h.b16 %v632
        %v830 = vunpack.c.l.b16 %v633
        %v831 = vunpack.c.h.b16 %v633
        %v832 = vunpack.c.l.b16 %v634
        %v833 = vunpack.c.h.b16 %v634
        %v834 = vunpack.c.l.b16 %v635
        %v835 = vunpack.c.h.b16 %v635
        %v836 = vunpack.c.l.b16 %v636
        %v837 = vunpack.c.h.b16 %v636
        %v838 = vunpack.c.l.b16 %v637
        %v839 = vunpack.c.h.b16 %v637
        %v840 = vunpack.c.l.b16 %v638
        %v841 = vunpack.c.h.b16 %v638
        %v842 = vunpack.c.l.b16 %v639
        %v843 = vunpack.c.h.b16 %v639
        %v844 = vunpack.c.l.b16 %v640
        %v845 = vunpack.c.h.b16 %v640
        %v846 = vunpack.c.l.b16 %v641
        %v847 = vunpack.c.h.b16 %v641
        %v848 = vunpack.c.l.b16 %v642
        %v849 = vunpack.c.h.b16 %v642
        %v850 = vunpack.c.l.b16 %v643
        %v851 = vunpack.c.h.b16 %v643
        %v852 = vunpack.c.l.b16 %v644
        %v853 = vunpack.c.h.b16 %v644
        %v854 = vunpack.c.l.b16 %v645
        %v855 = vunpack.c.h.b16 %v645
        %v856 = vunpack.c.l.b16 %v646
        %v857 = vunpack.c.h.b16 %v646
        %v858 = vunpack.c.l.b16 %v647
        %v859 = vunpack.c.h.b16 %v647
        %v860 = vunpack.c.l.b16 %v648
        %v861 = vunpack.c.h.b16 %v648
        %v862 = vunpack.c.l.b16 %v649
        %v863 = vunpack.c.h.b16 %v649
        %v864 = vunpack.c.l.b16 %v650
        %v865 = vunpack.c.h.b16 %v650
        %v866 = vunpack.c.l.b16 %v651
        %v867 = vunpack.c.h.b16 %v651
        %v868 = vunpack.c.l.b16 %v652
        %v869 = vunpack.c.h.b16 %v652
        %v870 = vunpack.c.l.b16 %v653
        %v871 = vunpack.c.h.b16 %v653
        %v872 = vunpack.c.l.b16 %v654
        %v873 = vunpack.c.h.b16 %v654
        %v874 = vunpack.c.l.b16 %v655
        %v875 = vunpack.c.h.b16 %v655
        %v876 = vunpack.c.l.b16 %v656
        %v877 = vunpack.c.h.b16 %v656
        %v878 = vunpack.c.l.b16 %v657
        %v879 = vunpack.c.h.b16 %v657
        %v880 = vunpack.c.l.b16 %v658
        %v881 = vunpack.c.h.b16 %v658
        %v882 = vunpack.c.l.b16 %v659
        %v883 = vunpack.c.h.b16 %v659
        %v884 = vunpack.c.l.b16 %v660
        %v885 = vunpack.c.h.b16 %v660
        %v886 = vunpack.c.l.b16 %v661
        %v887 = vunpack.c.h.b16 %v661
        %v888 = vunpack.c.l.b16 %v662
        %v889 = vunpack.c.h.b16 %v662
        %v890 = vunpack.c.l.b16 %v663
        %v891 = vunpack.c.h.b16 %v663
        %v892 = vunpack.c.l.b16 %v664
        %v893 = vunpack.c.h.b16 %v664
        %v894 = vunpack.c.l.b16 %v665
        %v895 = vunpack.c.h.b16 %v665
        %v896 = vunpack.c.l.b16 %v666
        %v897 = vunpack.c.h.b16 %v666
        %v898 = vunpack.c.l.b16 %v667
        %v899 = vunpack.c.h.b16 %v667
        %v900 = vunpack.c.l.b16 %v668
        %v901 = vunpack.c.h.b16 %v668
        %v902 = vunpack.c.l.b16 %v669
        %v903 = vunpack.c.h.b16 %v669
        %v904 = vunpack.c.l.b16 %v670
        %v905 = vunpack.c.h.b16 %v670
        %v906 = vunpack.c.l.b16 %v671
        %v907 = vunpack.c.h.b16 %v671
        %v908 = vunpack.c.l.b16 %v672
        %v909 = vunpack.c.h.b16 %v672
        %v910 = vunpack.c.l.b16 %v673
        %v911 = vunpack.c.h.b16 %v673
        %v912 = vunpack.c.l.b16 %v674
        %v913 = vunpack.c.h.b16 %v674
        %v914 = vunpack.c.l.b16 %v675
        %v915 = vunpack.c.h.b16 %v675
        %v916 = vunpack.c.l.b16 %v676
        %v917 = vunpack.c.h.b16 %v676
        %v918 = vunpack.c.l.b16 %v677
        %v919 = vunpack.c.h.b16 %v677
        %v920 = vunpack.c.l.b16 %v678
        %v921 = vunpack.c.h.b16 %v678
        %v922 = vunpack.c.l.b16 %v679
        %v923 = vunpack.c.h.b16 %v679
        %v924 = vunpack.c.l.b16 %v680
        %v925 = vunpack.c.h.b16 %v680
        %v926 = vunpack.c.l.b16 %v681
        %v927 = vunpack.c.h.b16 %v681
        %v928 = vunpack.c.l.b16 %v682
        %v929 = vunpack.c.h.b16 %v682
        %v930 = vunpack.c.l.b16 %v683
        %v931 = vunpack.c.h.b16 %v683
        %v932 = vunpack.c.l.b16 %v684
        %v933 = vunpack.c.h.b16 %v684
        %v934 = vunpack.c.l.b16 %v685
        %v935 = vunpack.c.h.b16 %v685
        %v936 = vunpack.c.l.b16 %v686
        %v937 = vunpack.c.h.b16 %v686
        %v938 = vunpack.c.l.b16 %v687
        %v939 = vunpack.c.h.b16 %v687
        %v940 = vunpack.c.l.b16 %v688
        %v941 = vunpack.c.h.b16 %v688
        %v942 = vunpack.c.l.b16 %v689
        %v943 = vunpack.c.h.b16 %v689
        %v944 = vunpack.c.l.b16 %v690
        %v945 = vunpack.c.h.b16 %v690
        %v946 = vunpack.c.l.b16 %v691
        %v947 = vunpack.c.h.b16 %v691
        %v948 = vpack.c.b16 %v822, %v820
        %v949 = vpack.c.b16 %v823, %v821
        %v950 = vpack.c.b16 %v826, %v824
        %v951 = vpack.c.b16 %v827, %v825
        %v952 = vpack.c.b16 %v830, %v828
        %v953 = vpack.c.b16 %v831, %v829
        %v954 = vpack.c.b16 %v834, %v832
        %v955 = vpack.c.b16 %v835, %v833
        %v956 = vpack.c.b16 %v838, %v836
        %v957 = vpack.c.b16 %v839, %v837
        %v958 = vpack.c.b16 %v842, %v840
        %v959 = vpack.c.b16 %v843, %v841
        %v960 = vpack.c.b16 %v846, %v844
        %v961 = vpack.c.b16 %v847, %v845
        %v962 = vpack.c.b16 %v850, %v848
        %v963 = vpack.c.b16 %v851, %v849
        %v964 = vpack.c.b16 %v854, %v852
        %v965 = vpack.c.b16 %v855, %v853
        %v966 = vpack.c.b16 %v858, %v856
        %v967 = vpack.c.b16 %v859, %v857
        %v968 = vpack.c.b16 %v862, %v860
        %v969 = vpack.c.b16 %v863, %v861
        %v970 = vpack.c.b16 %v866, %v864
        %v971 = vpack.c.b16 %v867, %v865
        %v972 = vpack.c.b16 %v870, %v868
        %v973 = vpack.c.b16 %v871, %v869
        %v974 = vpack.c.b16 %v874, %v872
        %v975 = vpack.c.b16 %v875, %v873
        %v976 = vpack.c.b16 %v878, %v876
        %v977 = vpack.c.b16 %v879, %v877
        %v978 = vpack.c.b16 %v882, %v880
        %v979 = vpack.c.b16 %v883, %v881
        %v980 = vpack.c.b16 %v886, %v884
        %v981 = vpack.c.b16 %v887, %v885
        %v982 = vpack.c.b16 %v890, %v888
        %v983 = vpack.c.b16 %v891, %v889
        %v984 = vpack.c.b16 %v894, %v892
        %v985 = vpack.c.b16 %v895, %v893
        %v986 = vpack.c.b16 %v898, %v896
        %v987 = vpack.c.b16 %v899, %v897
        %v988 = vpack.c.b16 %v902, %v900
        %v989 = vpack.c.b16 %v903, %v901
        %v990 = vpack.c.b16 %v906, %v904
        %v991 = vpack.c.b16 %v907, %v905
        %v992 = vpack.c.b16 %v910, %v908
        %v993 = vpack.c.b16 %v911, %v909
        %v994 = vpack.c.b16 %v914, %v912
        %v995 = vpack.c.b16 %v915, %v913
        %v996 = vpack.c.b16 %v918, %v916
        %v997 = vpack.c.b16 %v919, %v917
        %v998 = vpack.c.b16 %v922, %v920
        %v999 = vpack.c.b16 %v923, %v921
        %v1000 = vpack.c.b16 %v926, %v924
        %v1001 = vpack.c.b16 %v927, %v925
        %v1002 = vpack.c.b16 %v930, %v928
        %v1003 = vpack.c.b16 %v931, %v929
        %v1004 = vpack.c.b16 %v934, %v932
        %v1005 = vpack.c.b16 %v935, %v933
        %v1006 = vpack.c.b16 %v938, %v936
        %v1007 = vpack.c.b16 %v939, %v937
        %v1008 = vpack.c.b16 %v942, %v940
        %v1009 = vpack.c.b16 %v943, %v941
        %v1010 = vpack.c.b16 %v946, %v944
        %v1011 = vpack.c.b16 %v947, %v945
        %v1140 = vunpack.c.l.b16 %v692
        %v1141 = vunpack.c.h.b16 %v692
        %v1142 = vunpack.c.l.b16 %v693
        %v1143 = vunpack.c.l.b16 %v694
        %v1144 = vunpack.c.h.b16 %v694
        %v1145 = vunpack.c.l.b16 %v695
        %v1146 = vunpack.c.l.b16 %v696
        %v1147 = vunpack.c.h.b16 %v696
        %v1148 = vunpack.c.l.b16 %v697
        %v1149 = vunpack.c.l.b16 %v698
        %v1150 = vunpack.c.h.b16 %v698
        %v1151 = vunpack.c.l.b16 %v699
        %v1152 = vunpack.c.l.b16 %v700
        %v1153 = vunpack.c.h.b16 %v700
        %v1154 = vunpack.c.l.b16 %v701
        %v1155 = vunpack.c.l.b16 %v702
        %v1156 = vunpack.c.h.b16 %v702
        %v1157 = vunpack.c.l.b16 %v703
        %v1158 = vunpack.c.l.b16 %v704
        %v1159 = vunpack.c.h.b16 %v704
        %v1160 = vunpack.c.l.b16 %v705
        %v1161 = vunpack.c.l.b16 %v706
        %v1162 = vunpack.c.h.b16 %v706
        %v1163 = vunpack.c.l.b16 %v707
        %v1164 = vunpack.c.l.b16 %v708
        %v1165 = vunpack.c.h.b16 %v708
        %v1166 = vunpack.c.l.b16 %v709
        %v1167 = vunpack.c.l.b16 %v710
        %v1168 = vunpack.c.h.b16 %v710
        %v1169 = vunpack.c.l.b16 %v711
        %v1170 = vunpack.c.l.b16 %v712
        %v1171 = vunpack.c.h.b16 %v712
        %v1172 = vunpack.c.l.b16 %v713
        %v1173 = vunpack.c.l.b16 %v714
        %v1174 = vunpack.c.h.b16 %v714
        %v1175 = vunpack.c.l.b16 %v715
        %v1176 = vunpack.c.l.b16 %v716
        %v1177 = vunpack.c.h.b16 %v716
        %v1178 = vunpack.c.l.b16 %v717
        %v1179 = vunpack.c.l.b16 %v718
        %v1180 = vunpack.c.h.b16 %v718
        %v1181 = vunpack.c.l.b16 %v719
        %v1182 = vunpack.c.l.b16 %v720
        %v1183 = vunpack.c.h.b16 %v720
        %v1184 = vunpack.c.l.b16 %v721
        %v1185 = vunpack.c.l.b16 %v722
        %v1186 = vunpack.c.h.b16 %v722
        %v1187 = vunpack.c.l.b16 %v723
        %v1188 = vunpack.c.l.b16 %v724
        %v1189 = vunpack.c.h.b16 %v724
        %v1190 = vunpack.c.l.b16 %v725
        %v1191 = vunpack.c.l.b16 %v726
        %v1192 = vunpack.c.h.b16 %v726
        %v1193 = vunpack.c.l.b16 %v727
        %v1194 = vunpack.c.l.b16 %v728
        %v1195 = vunpack.c.h.b16 %v728
        %v1196 = vunpack.c.l.b16 %v729
        %v1197 = vunpack.c.l.b16 %v730
        %v1198 = vunpack.c.h.b16 %v730
        %v1199 = vunpack.c.l.b16 %v731
        %v1200 = vunpack.c.l.b16 %v732
        %v1201 = vunpack.c.h.b16 %v732
        %v1202 = vunpack.c.l.b16 %v733
        %v1203 = vunpack.c.l.b16 %v734
        %v1204 = vunpack.c.h.b16 %v734
        %v1205 = vunpack.c.l.b16 %v735
        %v1206 = vunpack.c.l.b16 %v736
        %v1207 = vunpack.c.h.b16 %v736
        %v1208 = vunpack.c.l.b16 %v737
        %v1209 = vunpack.c.l.b16 %v738
        %v1210 = vunpack.c.h.b16 %v738
        %v1211 = vunpack.c.l.b16 %v739
        %v1212 = vunpack.c.l.b16 %v740
        %v1213 = vunpack.c.h.b16 %v740
        %v1214 = vunpack.c.l.b16 %v741
        %v1215 = vunpack.c.l.b16 %v742
        %v1216 = vunpack.c.h.b16 %v742
        %v1217 = vunpack.c.l.b16 %v743
        %v1218 = vunpack.c.l.b16 %v744
        %v1219 = vunpack.c.h.b16 %v744
        %v1220 = vunpack.c.l.b16 %v745
        %v1221 = vunpack.c.l.b16 %v746
        %v1222 = vunpack.c.h.b16 %v746
        %v1223 = vunpack.c.l.b16 %v747
        %v1224 = vunpack.c.l.b16 %v748
        %v1225 = vunpack.c.h.b16 %v748
        %v1226 = vunpack.c.l.b16 %v749
        %v1227 = vunpack.c.l.b16 %v750
        %v1228 = vunpack.c.h.b16 %v750
        %v1229 = vunpack.c.l.b16 %v751
        %v1230 = vunpack.c.l.b16 %v752
        %v1231 = vunpack.c.h.b16 %v752
        %v1232 = vunpack.c.l.b16 %v753
        %v1233 = vunpack.c.l.b16 %v754
        %v1234 = vunpack.c.h.b16 %v754
        %v1235 = vunpack.c.l.b16 %v755
        %v1236 = vpack.c.b16 %v1143, %v1140
        %v1237 = vpack.c.b16 %v1144, %v1141
        %v1238 = vpack.c.b16 %v1145, %v1142
        %v1239 = vpack.c.b16 %v1149, %v1146
        %v1240 = vpack.c.b16 %v1150, %v1147
        %v1241 = vpack.c.b16 %v1151, %v1148
        %v1242 = vpack.c.b16 %v1155, %v1152
        %v1243 = vpack.c.b16 %v1156, %v1153
        %v1244 = vpack.c.b16 %v1157, %v1154
        %v1245 = vpack.c.b16 %v1161, %v1158
        %v1246 = vpack.c.b16 %v1162, %v1159
        %v1247 = vpack.c.b16 %v1163, %v1160
        %v1248 = vpack.c.b16 %v1167, %v1164
        %v1249 = vpack.c.b16 %v1168, %v1165
        %v1250 = vpack.c.b16 %v1169, %v1166
        %v1251 = vpack.c.b16 %v1173, %v1170
        %v1252 = vpack.c.b16 %v1174, %v1171
        %v1253 = vpack.c.b16 %v1175, %v1172
        %v1254 = vpack.c.b16 %v1179, %v1176
        %v1255 = vpack.c.b16 %v1180, %v1177
        %v1256 = vpack.c.b16 %v1181, %v1178
        %v1257 = vpack.c.b16 %v1185, %v1182
        %v1258 = vpack.c.b16 %v1186, %v1183
        %v1259 = vpack.c.b16 %v1187, %v1184
        %v1260 = vpack.c.b16 %v1191, %v1188
        %v1261 = vpack.c.b16 %v1192, %v1189
        %v1262 = vpack.c.b16 %v1193, %v1190
        %v1263 = vpack.c.b16 %v1197, %v1194
        %v1264 = vpack.c.b16 %v1198, %v1195
        %v1265 = vpack.c.b16 %v1199, %v1196
        %v1266 = vpack.c.b16 %v1203, %v1200
        %v1267 = vpack.c.b16 %v1204, %v1201
        %v1268 = vpack.c.b16 %v1205, %v1202
        %v1269 = vpack.c.b16 %v1209, %v1206
        %v1270 = vpack.c.b16 %v1210, %v1207
        %v1271 = vpack.c.b16 %v1211, %v1208
        %v1272 = vpack.c.b16 %v1215, %v1212
        %v1273 = vpack.c.b16 %v1216, %v1213
        %v1274 = vpack.c.b16 %v1217, %v1214
        %v1275 = vpack.c.b16 %v1221, %v1218
        %v1276 = vpack.c.b16 %v1222, %v1219
        %v1277 = vpack.c.b16 %v1223, %v1220
        %v1278 = vpack.c.b16 %v1227, %v1224
        %v1279 = vpack.c.b16 %v1228, %v1225
        %v1280 = vpack.c.b16 %v1229, %v1226
        %v1281 = vpack.c.b16 %v1233, %v1230
        %v1282 = vpack.c.b16 %v1234, %v1231
        %v1283 = vpack.c.b16 %v1235, %v1232
        %1332 = vmatprep.subr.bf16.mxu0 %v1258
        %1333 = vmatpush1.bf16.msra.mxu0 %v1257
        %1334 = vmatprep.subr.bf16.mxu0 %v1255
        %1335 = vmatpush1.bf16.msra.mxu0 %v1254
        %1336 = vmatprep.subr.bf16.mxu0 %v1252
        %1337 = vmatpush1.bf16.msra.mxu0 %v1251
        %1338 = vmatprep.subr.bf16.mxu0 %v1249
        %1339 = vmatpush1.bf16.msra.mxu0 %v1248
        %1340 = vmatprep.subr.bf16.mxu0 %v1246
        %1341 = vmatpush1.bf16.msra.mxu0 %v1245
        %1342 = vmatprep.subr.bf16.mxu0 %v1243
        %1343 = vmatpush1.bf16.msra.mxu0 %v1242
        %1344 = vmatprep.subr.bf16.mxu0 %v1240
        %1345 = vmatpush1.bf16.msra.mxu0 %v1239
        %1346 = vmatprep.subr.bf16.mxu0 %v1237
        %1347 = vmatpush1.bf16.msra.mxu0 %v1236
        %1348 = vmatprep.subr.bf16.mxu0 %v1282
        %1349 = vmatpush2.bf16.msra.mxu0 %v1281
        %1350 = vmatprep.subr.bf16.mxu0 %v1279
        %1351 = vmatpush2.bf16.msra.mxu0 %v1278
        %1352 = vmatprep.subr.bf16.mxu0 %v1276
        %1353 = vmatpush2.bf16.msra.mxu0 %v1275
        %1354 = vmatprep.subr.bf16.mxu0 %v1273
        %1355 = vmatpush2.bf16.msra.mxu0 %v1272
        %1356 = vmatprep.subr.bf16.mxu0 %v1270
        %1357 = vmatpush2.bf16.msra.mxu0 %v1269
        %1358 = vmatprep.subr.bf16.mxu0 %v1267
        %1359 = vmatpush2.bf16.msra.mxu0 %v1266
        %1360 = vmatprep.subr.bf16.mxu0 %v1264
        %1361 = vmatpush2.bf16.msra.mxu0 %v1263
        %1362 = vmatprep.subr.bf16.mxu0 %v1261
        %1363 = vmatpush2.bf16.msra.mxu0 %v1260
        %1364 = vmatprep.mubr.bf16.mxu0 %v949
        %1365 = vmatmul.mubr.bf16.gmra.mxu0 %v948
        %v1366 = vpop.f32.mrf.mxu0
        %v1367 = vadd.f32 0.0, %v1366
        %v1368 = vpop.f32.mrf.mxu0
        %v1369 = vadd.f32 0.0, %v1368
        %v1370 = vpop.f32.mrf.mxu0
        %v1371 = vadd.f32 0.0, %v1370
        %v1372 = vpop.f32.mrf.mxu0
        %v1373 = vadd.f32 0.0, %v1372
        %1374 = vmatprep.mubr.bf16.mxu0 %v951
        %1375 = vmatmul.mubr.bf16.gmra.mxu0 %v950
        %v1376 = vpop.f32.mrf.mxu0
        %v1377 = vadd.f32 0.0, %v1376
        %v1378 = vpop.f32.mrf.mxu0
        %v1379 = vadd.f32 0.0, %v1378
        %v1380 = vpop.f32.mrf.mxu0
        %v1381 = vadd.f32 0.0, %v1380
        %v1382 = vpop.f32.mrf.mxu0
        %v1383 = vadd.f32 0.0, %v1382
        %1384 = vmatprep.mubr.bf16.mxu0 %v953
        %1385 = vmatmul.mubr.bf16.gmra.mxu0 %v952
        %v1386 = vpop.f32.mrf.mxu0
        %v1387 = vadd.f32 0.0, %v1386
        %v1388 = vpop.f32.mrf.mxu0
        %v1389 = vadd.f32 0.0, %v1388
        %v1390 = vpop.f32.mrf.mxu0
        %v1391 = vadd.f32 0.0, %v1390
        %v1392 = vpop.f32.mrf.mxu0
        %v1393 = vadd.f32 0.0, %v1392
        %1394 = vmatprep.mubr.bf16.mxu0 %v955
        %1395 = vmatmul.mubr.bf16.gmra.mxu0 %v954
        %v1396 = vpop.f32.mrf.mxu0
        %v1397 = vadd.f32 0.0, %v1396
        %v1398 = vpop.f32.mrf.mxu0
        %v1399 = vadd.f32 0.0, %v1398
        %v1400 = vpop.f32.mrf.mxu0
        %v1401 = vadd.f32 0.0, %v1400
        %v1402 = vpop.f32.mrf.mxu0
        %v1403 = vadd.f32 0.0, %v1402
        %1404 = vmatprep.mubr.bf16.mxu0 %v957
        %1405 = vmatmul.mubr.bf16.gmra.mxu0 %v956
        %v1406 = vpop.f32.mrf.mxu0
        %v1407 = vadd.f32 0.0, %v1406
        %v1408 = vpop.f32.mrf.mxu0
        %v1409 = vadd.f32 0.0, %v1408
        %v1410 = vpop.f32.mrf.mxu0
        %v1411 = vadd.f32 0.0, %v1410
        %v1412 = vpop.f32.mrf.mxu0
        %v1413 = vadd.f32 0.0, %v1412
        %1414 = vmatprep.mubr.bf16.mxu0 %v959
        %1415 = vmatmul.mubr.bf16.gmra.mxu0 %v958
        %v1416 = vpop.f32.mrf.mxu0
        %v1417 = vadd.f32 0.0, %v1416
        %v1418 = vpop.f32.mrf.mxu0
        %v1419 = vadd.f32 0.0, %v1418
        %v1420 = vpop.f32.mrf.mxu0
        %v1421 = vadd.f32 0.0, %v1420
        %v1422 = vpop.f32.mrf.mxu0
        %v1423 = vadd.f32 0.0, %v1422
        %1424 = vmatprep.mubr.bf16.mxu0 %v961
        %1425 = vmatmul.mubr.bf16.gmra.mxu0 %v960
        %v1426 = vpop.f32.mrf.mxu0
        %v1427 = vadd.f32 0.0, %v1426
        %v1428 = vpop.f32.mrf.mxu0
        %v1429 = vadd.f32 0.0, %v1428
        %v1430 = vpop.f32.mrf.mxu0
        %v1431 = vadd.f32 0.0, %v1430
        %v1432 = vpop.f32.mrf.mxu0
        %v1433 = vadd.f32 0.0, %v1432
        %1434 = vmatprep.mubr.bf16.mxu0 %v963
        %1435 = vmatmul.mubr.bf16.gmra.mxu0 %v962
        %v1436 = vpop.f32.mrf.mxu0
        %v1437 = vadd.f32 0.0, %v1436
        %v1438 = vpop.f32.mrf.mxu0
        %v1439 = vadd.f32 0.0, %v1438
        %v1440 = vpop.f32.mrf.mxu0
        %v1441 = vadd.f32 0.0, %v1440
        %v1442 = vpop.f32.mrf.mxu0
        %v1443 = vadd.f32 0.0, %v1442
        %1444 = vmatprep.mubr.bf16.mxu0 %v965
        %1445 = vmatmul.mubr.bf16.gmra.mxu0 %v964
        %v1446 = vpop.f32.mrf.mxu0
        %v1447 = vadd.f32 0.0, %v1446
        %v1448 = vpop.f32.mrf.mxu0
        %v1449 = vadd.f32 0.0, %v1448
        %v1450 = vpop.f32.mrf.mxu0
        %v1451 = vadd.f32 0.0, %v1450
        %v1452 = vpop.f32.mrf.mxu0
        %v1453 = vadd.f32 0.0, %v1452
        %1454 = vmatprep.mubr.bf16.mxu0 %v967
        %1455 = vmatmul.mubr.bf16.gmra.mxu0 %v966
        %v1456 = vpop.f32.mrf.mxu0
        %v1457 = vadd.f32 0.0, %v1456
        %v1458 = vpop.f32.mrf.mxu0
        %v1459 = vadd.f32 0.0, %v1458
        %v1460 = vpop.f32.mrf.mxu0
        %v1461 = vadd.f32 0.0, %v1460
        %v1462 = vpop.f32.mrf.mxu0
        %v1463 = vadd.f32 0.0, %v1462
        %1464 = vmatprep.mubr.bf16.mxu0 %v969
        %1465 = vmatmul.mubr.bf16.gmra.mxu0 %v968
        %v1466 = vpop.f32.mrf.mxu0
        %v1467 = vadd.f32 0.0, %v1466
        %v1468 = vpop.f32.mrf.mxu0
        %v1469 = vadd.f32 0.0, %v1468
        %v1470 = vpop.f32.mrf.mxu0
        %v1471 = vadd.f32 0.0, %v1470
        %v1472 = vpop.f32.mrf.mxu0
        %v1473 = vadd.f32 0.0, %v1472
        %1474 = vmatprep.mubr.bf16.mxu0 %v971
        %1475 = vmatmul.mubr.bf16.gmra.mxu0 %v970
        %v1476 = vpop.f32.mrf.mxu0
        %v1477 = vadd.f32 0.0, %v1476
        %v1478 = vpop.f32.mrf.mxu0
        %v1479 = vadd.f32 0.0, %v1478
        %v1480 = vpop.f32.mrf.mxu0
        %v1481 = vadd.f32 0.0, %v1480
        %v1482 = vpop.f32.mrf.mxu0
        %v1483 = vadd.f32 0.0, %v1482
        %1484 = vmatprep.mubr.bf16.mxu0 %v973
        %1485 = vmatmul.mubr.bf16.gmra.mxu0 %v972
        %v1486 = vpop.f32.mrf.mxu0
        %v1487 = vadd.f32 0.0, %v1486
        %v1488 = vpop.f32.mrf.mxu0
        %v1489 = vadd.f32 0.0, %v1488
        %v1490 = vpop.f32.mrf.mxu0
        %v1491 = vadd.f32 0.0, %v1490
        %v1492 = vpop.f32.mrf.mxu0
        %v1493 = vadd.f32 0.0, %v1492
        %1494 = vmatprep.mubr.bf16.mxu0 %v975
        %1495 = vmatmul.mubr.bf16.gmra.mxu0 %v974
        %v1496 = vpop.f32.mrf.mxu0
        %v1497 = vadd.f32 0.0, %v1496
        %v1498 = vpop.f32.mrf.mxu0
        %v1499 = vadd.f32 0.0, %v1498
        %v1500 = vpop.f32.mrf.mxu0
        %v1501 = vadd.f32 0.0, %v1500
        %v1502 = vpop.f32.mrf.mxu0
        %v1503 = vadd.f32 0.0, %v1502
        %1504 = vmatprep.mubr.bf16.mxu0 %v977
        %1505 = vmatmul.mubr.bf16.gmra.mxu0 %v976
        %v1506 = vpop.f32.mrf.mxu0
        %v1507 = vadd.f32 0.0, %v1506
        %v1508 = vpop.f32.mrf.mxu0
        %v1509 = vadd.f32 0.0, %v1508
        %v1510 = vpop.f32.mrf.mxu0
        %v1511 = vadd.f32 0.0, %v1510
        %v1512 = vpop.f32.mrf.mxu0
        %v1513 = vadd.f32 0.0, %v1512
        %1514 = vmatprep.mubr.bf16.mxu0 %v979
        %1515 = vmatmul.mubr.bf16.gmra.mxu0 %v978
        %v1516 = vpop.f32.mrf.mxu0
        %v1517 = vadd.f32 0.0, %v1516
        %v1518 = vpop.f32.mrf.mxu0
        %v1519 = vadd.f32 0.0, %v1518
        %v1520 = vpop.f32.mrf.mxu0
        %v1521 = vadd.f32 0.0, %v1520
        %v1522 = vpop.f32.mrf.mxu0
        %v1523 = vadd.f32 0.0, %v1522
        %1524 = vmatprep.mubr.bf16.mxu0 %v981
        %1525 = vmatmul.mubr.bf16.gmra.mxu0 %v980
        %v1526 = vpop.f32.mrf.mxu0
        %v1527 = vadd.f32 0.0, %v1526
        %v1528 = vpop.f32.mrf.mxu0
        %v1529 = vadd.f32 0.0, %v1528
        %v1530 = vpop.f32.mrf.mxu0
        %v1531 = vadd.f32 0.0, %v1530
        %v1532 = vpop.f32.mrf.mxu0
        %v1533 = vadd.f32 0.0, %v1532
        %1534 = vmatprep.mubr.bf16.mxu0 %v983
        %1535 = vmatmul.mubr.bf16.gmra.mxu0 %v982
        %v1536 = vpop.f32.mrf.mxu0
        %v1537 = vadd.f32 0.0, %v1536
        %v1538 = vpop.f32.mrf.mxu0
        %v1539 = vadd.f32 0.0, %v1538
        %v1540 = vpop.f32.mrf.mxu0
        %v1541 = vadd.f32 0.0, %v1540
        %v1542 = vpop.f32.mrf.mxu0
        %v1543 = vadd.f32 0.0, %v1542
        %1544 = vmatprep.mubr.bf16.mxu0 %v985
        %1545 = vmatmul.mubr.bf16.gmra.mxu0 %v984
        %v1546 = vpop.f32.mrf.mxu0
        %v1547 = vadd.f32 0.0, %v1546
        %v1548 = vpop.f32.mrf.mxu0
        %v1549 = vadd.f32 0.0, %v1548
        %v1550 = vpop.f32.mrf.mxu0
        %v1551 = vadd.f32 0.0, %v1550
        %v1552 = vpop.f32.mrf.mxu0
        %v1553 = vadd.f32 0.0, %v1552
        %1554 = vmatprep.mubr.bf16.mxu0 %v987
        %1555 = vmatmul.mubr.bf16.gmra.mxu0 %v986
        %v1556 = vpop.f32.mrf.mxu0
        %v1557 = vadd.f32 0.0, %v1556
        %v1558 = vpop.f32.mrf.mxu0
        %v1559 = vadd.f32 0.0, %v1558
        %v1560 = vpop.f32.mrf.mxu0
        %v1561 = vadd.f32 0.0, %v1560
        %v1562 = vpop.f32.mrf.mxu0
        %v1563 = vadd.f32 0.0, %v1562
        %1564 = vmatprep.mubr.bf16.mxu0 %v989
        %1565 = vmatmul.mubr.bf16.gmra.mxu0 %v988
        %v1566 = vpop.f32.mrf.mxu0
        %v1567 = vadd.f32 0.0, %v1566
        %v1568 = vpop.f32.mrf.mxu0
        %v1569 = vadd.f32 0.0, %v1568
        %v1570 = vpop.f32.mrf.mxu0
        %v1571 = vadd.f32 0.0, %v1570
        %v1572 = vpop.f32.mrf.mxu0
        %v1573 = vadd.f32 0.0, %v1572
        %1574 = vmatprep.mubr.bf16.mxu0 %v991
        %1575 = vmatmul.mubr.bf16.gmra.mxu0 %v990
        %v1576 = vpop.f32.mrf.mxu0
        %v1577 = vadd.f32 0.0, %v1576
        %v1578 = vpop.f32.mrf.mxu0
        %v1579 = vadd.f32 0.0, %v1578
        %v1580 = vpop.f32.mrf.mxu0
        %v1581 = vadd.f32 0.0, %v1580
        %v1582 = vpop.f32.mrf.mxu0
        %v1583 = vadd.f32 0.0, %v1582
        %1584 = vmatprep.mubr.bf16.mxu0 %v993
        %1585 = vmatmul.mubr.bf16.gmra.mxu0 %v992
        %v1586 = vpop.f32.mrf.mxu0
        %v1587 = vadd.f32 0.0, %v1586
        %v1588 = vpop.f32.mrf.mxu0
        %v1589 = vadd.f32 0.0, %v1588
        %v1590 = vpop.f32.mrf.mxu0
        %v1591 = vadd.f32 0.0, %v1590
        %v1592 = vpop.f32.mrf.mxu0
        %v1593 = vadd.f32 0.0, %v1592
        %1594 = vmatprep.mubr.bf16.mxu0 %v995
        %1595 = vmatmul.mubr.bf16.gmra.mxu0 %v994
        %v1596 = vpop.f32.mrf.mxu0
        %v1597 = vadd.f32 0.0, %v1596
        %v1598 = vpop.f32.mrf.mxu0
        %v1599 = vadd.f32 0.0, %v1598
        %v1600 = vpop.f32.mrf.mxu0
        %v1601 = vadd.f32 0.0, %v1600
        %v1602 = vpop.f32.mrf.mxu0
        %v1603 = vadd.f32 0.0, %v1602
        %1604 = vmatprep.mubr.bf16.mxu0 %v997
        %1605 = vmatmul.mubr.bf16.gmra.mxu0 %v996
        %v1606 = vpop.f32.mrf.mxu0
        %v1607 = vadd.f32 0.0, %v1606
        %v1608 = vpop.f32.mrf.mxu0
        %v1609 = vadd.f32 0.0, %v1608
        %v1610 = vpop.f32.mrf.mxu0
        %v1611 = vadd.f32 0.0, %v1610
        %v1612 = vpop.f32.mrf.mxu0
        %v1613 = vadd.f32 0.0, %v1612
        %1614 = vmatprep.mubr.bf16.mxu0 %v999
        %1615 = vmatmul.mubr.bf16.gmra.mxu0 %v998
        %v1616 = vpop.f32.mrf.mxu0
        %v1617 = vadd.f32 0.0, %v1616
        %v1618 = vpop.f32.mrf.mxu0
        %v1619 = vadd.f32 0.0, %v1618
        %v1620 = vpop.f32.mrf.mxu0
        %v1621 = vadd.f32 0.0, %v1620
        %v1622 = vpop.f32.mrf.mxu0
        %v1623 = vadd.f32 0.0, %v1622
        %1624 = vmatprep.mubr.bf16.mxu0 %v1001
        %1625 = vmatmul.mubr.bf16.gmra.mxu0 %v1000
        %v1626 = vpop.f32.mrf.mxu0
        %v1627 = vadd.f32 0.0, %v1626
        %v1628 = vpop.f32.mrf.mxu0
        %v1629 = vadd.f32 0.0, %v1628
        %v1630 = vpop.f32.mrf.mxu0
        %v1631 = vadd.f32 0.0, %v1630
        %v1632 = vpop.f32.mrf.mxu0
        %v1633 = vadd.f32 0.0, %v1632
        %1634 = vmatprep.mubr.bf16.mxu0 %v1003
        %1635 = vmatmul.mubr.bf16.gmra.mxu0 %v1002
        %v1636 = vpop.f32.mrf.mxu0
        %v1637 = vadd.f32 0.0, %v1636
        %v1638 = vpop.f32.mrf.mxu0
        %v1639 = vadd.f32 0.0, %v1638
        %v1640 = vpop.f32.mrf.mxu0
        %v1641 = vadd.f32 0.0, %v1640
        %v1642 = vpop.f32.mrf.mxu0
        %v1643 = vadd.f32 0.0, %v1642
        %1644 = vmatprep.mubr.bf16.mxu0 %v1005
        %1645 = vmatmul.mubr.bf16.gmra.mxu0 %v1004
        %v1646 = vpop.f32.mrf.mxu0
        %v1647 = vadd.f32 0.0, %v1646
        %v1648 = vpop.f32.mrf.mxu0
        %v1649 = vadd.f32 0.0, %v1648
        %v1650 = vpop.f32.mrf.mxu0
        %v1651 = vadd.f32 0.0, %v1650
        %v1652 = vpop.f32.mrf.mxu0
        %v1653 = vadd.f32 0.0, %v1652
        %1654 = vmatprep.mubr.bf16.mxu0 %v1007
        %1655 = vmatmul.mubr.bf16.gmra.mxu0 %v1006
        %v1656 = vpop.f32.mrf.mxu0
        %v1657 = vadd.f32 0.0, %v1656
        %v1658 = vpop.f32.mrf.mxu0
        %v1659 = vadd.f32 0.0, %v1658
        %v1660 = vpop.f32.mrf.mxu0
        %v1661 = vadd.f32 0.0, %v1660
        %v1662 = vpop.f32.mrf.mxu0
        %v1663 = vadd.f32 0.0, %v1662
        %1664 = vmatprep.mubr.bf16.mxu0 %v1009
        %1665 = vmatmul.mubr.bf16.gmra.mxu0 %v1008
        %v1666 = vpop.f32.mrf.mxu0
        %v1667 = vadd.f32 0.0, %v1666
        %v1668 = vpop.f32.mrf.mxu0
        %v1669 = vadd.f32 0.0, %v1668
        %v1670 = vpop.f32.mrf.mxu0
        %v1671 = vadd.f32 0.0, %v1670
        %v1672 = vpop.f32.mrf.mxu0
        %v1673 = vadd.f32 0.0, %v1672
        %1674 = vmatprep.mubr.bf16.mxu0 %v1011
        %1675 = vmatmul.mubr.bf16.gmra.mxu0 %v1010
        %v1676 = vpop.f32.mrf.mxu0
        %v1677 = vadd.f32 0.0, %v1676
        %v1678 = vpop.f32.mrf.mxu0
        %v1679 = vadd.f32 0.0, %v1678
        %v1680 = vpop.f32.mrf.mxu0
        %v1681 = vadd.f32 0.0, %v1680
        %v1682 = vpop.f32.mrf.mxu0
        %v1683 = vadd.f32 0.0, %v1682
        %1684 = vdwg.mxu0
        %1685 = vmatprep.subr.bf16.mxu0 0
        %1686 = vmatpush1.bf16.msra.mxu0 %v1259
        %1687 = vmatprep.subr.bf16.mxu0 0
        %1688 = vmatpush1.bf16.msra.mxu0 %v1256
        %1689 = vmatprep.subr.bf16.mxu0 0
        %1690 = vmatpush1.bf16.msra.mxu0 %v1253
        %1691 = vmatprep.subr.bf16.mxu0 0
        %1692 = vmatpush1.bf16.msra.mxu0 %v1250
        %1693 = vmatprep.subr.bf16.mxu0 0
        %1694 = vmatpush1.bf16.msra.mxu0 %v1247
        %1695 = vmatprep.subr.bf16.mxu0 0
        %1696 = vmatpush1.bf16.msra.mxu0 %v1244
        %1697 = vmatprep.subr.bf16.mxu0 0
        %1698 = vmatpush1.bf16.msra.mxu0 %v1241
        %1699 = vmatprep.subr.bf16.mxu0 0
        %1700 = vmatpush1.bf16.msra.mxu0 %v1238
        %1701 = vmatprep.subr.bf16.mxu0 0
        %1702 = vmatpush2.bf16.msra.mxu0 %v1283
        %1703 = vmatprep.subr.bf16.mxu0 0
        %1704 = vmatpush2.bf16.msra.mxu0 %v1280
        %1705 = vmatprep.subr.bf16.mxu0 0
        %1706 = vmatpush2.bf16.msra.mxu0 %v1277
        %1707 = vmatprep.subr.bf16.mxu0 0
        %1708 = vmatpush2.bf16.msra.mxu0 %v1274
        %1709 = vmatprep.subr.bf16.mxu0 0
        %1710 = vmatpush2.bf16.msra.mxu0 %v1271
        %1711 = vmatprep.subr.bf16.mxu0 0
        %1712 = vmatpush2.bf16.msra.mxu0 %v1268
        %1713 = vmatprep.subr.bf16.mxu0 0
        %1714 = vmatpush2.bf16.msra.mxu0 %v1265
        %1715 = vmatprep.subr.bf16.mxu0 0
        %1716 = vmatpush2.bf16.msra.mxu0 %v1262
        %1717 = vmatprep.mubr.bf16.mxu0 %v949
        %1718 = vmatmul.mubr.bf16.gmra.mxu0 %v948
        %v1719 = vpop.f32.mrf.mxu0
        %v1720 = vadd.f32 0.0, %v1719
        %v1721 = vpop.f32.mrf.mxu0
        %v1722 = vpop.f32.mrf.mxu0
        %v1723 = vadd.f32 0.0, %v1722
        %v1724 = vpop.f32.mrf.mxu0
        %1725 = vmatprep.mubr.bf16.mxu0 %v951
        %1726 = vmatmul.mubr.bf16.gmra.mxu0 %v950
        %v1727 = vpop.f32.mrf.mxu0
        %v1728 = vadd.f32 0.0, %v1727
        %v1729 = vpop.f32.mrf.mxu0
        %v1730 = vpop.f32.mrf.mxu0
        %v1731 = vadd.f32 0.0, %v1730
        %v1732 = vpop.f32.mrf.mxu0
        %1733 = vmatprep.mubr.bf16.mxu0 %v953
        %1734 = vmatmul.mubr.bf16.gmra.mxu0 %v952
        %v1735 = vpop.f32.mrf.mxu0
        %v1736 = vadd.f32 0.0, %v1735
        %v1737 = vpop.f32.mrf.mxu0
        %v1738 = vpop.f32.mrf.mxu0
        %v1739 = vadd.f32 0.0, %v1738
        %v1740 = vpop.f32.mrf.mxu0
        %1741 = vmatprep.mubr.bf16.mxu0 %v955
        %1742 = vmatmul.mubr.bf16.gmra.mxu0 %v954
        %v1743 = vpop.f32.mrf.mxu0
        %v1744 = vadd.f32 0.0, %v1743
        %v1745 = vpop.f32.mrf.mxu0
        %v1746 = vpop.f32.mrf.mxu0
        %v1747 = vadd.f32 0.0, %v1746
        %v1748 = vpop.f32.mrf.mxu0
        %1749 = vmatprep.mubr.bf16.mxu0 %v957
        %1750 = vmatmul.mubr.bf16.gmra.mxu0 %v956
        %v1751 = vpop.f32.mrf.mxu0
        %v1752 = vadd.f32 0.0, %v1751
        %v1753 = vpop.f32.mrf.mxu0
        %v1754 = vpop.f32.mrf.mxu0
        %v1755 = vadd.f32 0.0, %v1754
        %v1756 = vpop.f32.mrf.mxu0
        %1757 = vmatprep.mubr.bf16.mxu0 %v959
        %1758 = vmatmul.mubr.bf16.gmra.mxu0 %v958
        %v1759 = vpop.f32.mrf.mxu0
        %v1760 = vadd.f32 0.0, %v1759
        %v1761 = vpop.f32.mrf.mxu0
        %v1762 = vpop.f32.mrf.mxu0
        %v1763 = vadd.f32 0.0, %v1762
        %v1764 = vpop.f32.mrf.mxu0
        %1765 = vmatprep.mubr.bf16.mxu0 %v961
        %1766 = vmatmul.mubr.bf16.gmra.mxu0 %v960
        %v1767 = vpop.f32.mrf.mxu0
        %v1768 = vadd.f32 0.0, %v1767
        %v1769 = vpop.f32.mrf.mxu0
        %v1770 = vpop.f32.mrf.mxu0
        %v1771 = vadd.f32 0.0, %v1770
        %v1772 = vpop.f32.mrf.mxu0
        %1773 = vmatprep.mubr.bf16.mxu0 %v963
        %1774 = vmatmul.mubr.bf16.gmra.mxu0 %v962
        %v1775 = vpop.f32.mrf.mxu0
        %v1776 = vadd.f32 0.0, %v1775
        %v1777 = vpop.f32.mrf.mxu0
        %v1778 = vpop.f32.mrf.mxu0
        %v1779 = vadd.f32 0.0, %v1778
        %v1780 = vpop.f32.mrf.mxu0
        %1781 = vmatprep.mubr.bf16.mxu0 %v965
        %1782 = vmatmul.mubr.bf16.gmra.mxu0 %v964
        %v1783 = vpop.f32.mrf.mxu0
        %v1784 = vadd.f32 0.0, %v1783
        %v1785 = vpop.f32.mrf.mxu0
        %v1786 = vpop.f32.mrf.mxu0
        %v1787 = vadd.f32 0.0, %v1786
        %v1788 = vpop.f32.mrf.mxu0
        %1789 = vmatprep.mubr.bf16.mxu0 %v967
        %1790 = vmatmul.mubr.bf16.gmra.mxu0 %v966
        %v1791 = vpop.f32.mrf.mxu0
        %v1792 = vadd.f32 0.0, %v1791
        %v1793 = vpop.f32.mrf.mxu0
        %v1794 = vpop.f32.mrf.mxu0
        %v1795 = vadd.f32 0.0, %v1794
        %v1796 = vpop.f32.mrf.mxu0
        %1797 = vmatprep.mubr.bf16.mxu0 %v969
        %1798 = vmatmul.mubr.bf16.gmra.mxu0 %v968
        %v1799 = vpop.f32.mrf.mxu0
        %v1800 = vadd.f32 0.0, %v1799
        %v1801 = vpop.f32.mrf.mxu0
        %v1802 = vpop.f32.mrf.mxu0
        %v1803 = vadd.f32 0.0, %v1802
        %v1804 = vpop.f32.mrf.mxu0
        %1805 = vmatprep.mubr.bf16.mxu0 %v971
        %1806 = vmatmul.mubr.bf16.gmra.mxu0 %v970
        %v1807 = vpop.f32.mrf.mxu0
        %v1808 = vadd.f32 0.0, %v1807
        %v1809 = vpop.f32.mrf.mxu0
        %v1810 = vpop.f32.mrf.mxu0
        %v1811 = vadd.f32 0.0, %v1810
        %v1812 = vpop.f32.mrf.mxu0
        %1813 = vmatprep.mubr.bf16.mxu0 %v973
        %1814 = vmatmul.mubr.bf16.gmra.mxu0 %v972
        %v1815 = vpop.f32.mrf.mxu0
        %v1816 = vadd.f32 0.0, %v1815
        %v1817 = vpop.f32.mrf.mxu0
        %v1818 = vpop.f32.mrf.mxu0
        %v1819 = vadd.f32 0.0, %v1818
        %v1820 = vpop.f32.mrf.mxu0
        %1821 = vmatprep.mubr.bf16.mxu0 %v975
        %1822 = vmatmul.mubr.bf16.gmra.mxu0 %v974
        %v1823 = vpop.f32.mrf.mxu0
        %v1824 = vadd.f32 0.0, %v1823
        %v1825 = vpop.f32.mrf.mxu0
        %v1826 = vpop.f32.mrf.mxu0
        %v1827 = vadd.f32 0.0, %v1826
        %v1828 = vpop.f32.mrf.mxu0
        %1829 = vmatprep.mubr.bf16.mxu0 %v977
        %1830 = vmatmul.mubr.bf16.gmra.mxu0 %v976
        %v1831 = vpop.f32.mrf.mxu0
        %v1832 = vadd.f32 0.0, %v1831
        %v1833 = vpop.f32.mrf.mxu0
        %v1834 = vpop.f32.mrf.mxu0
        %v1835 = vadd.f32 0.0, %v1834
        %v1836 = vpop.f32.mrf.mxu0
        %1837 = vmatprep.mubr.bf16.mxu0 %v979
        %1838 = vmatmul.mubr.bf16.gmra.mxu0 %v978
        %v1839 = vpop.f32.mrf.mxu0
        %v1840 = vadd.f32 0.0, %v1839
        %v1841 = vpop.f32.mrf.mxu0
        %v1842 = vpop.f32.mrf.mxu0
        %v1843 = vadd.f32 0.0, %v1842
        %v1844 = vpop.f32.mrf.mxu0
        %1845 = vmatprep.mubr.bf16.mxu0 %v981
        %1846 = vmatmul.mubr.bf16.gmra.mxu0 %v980
        %v1847 = vpop.f32.mrf.mxu0
        %v1848 = vadd.f32 0.0, %v1847
        %v1849 = vpop.f32.mrf.mxu0
        %v1850 = vpop.f32.mrf.mxu0
        %v1851 = vadd.f32 0.0, %v1850
        %v1852 = vpop.f32.mrf.mxu0
        %1853 = vmatprep.mubr.bf16.mxu0 %v983
        %1854 = vmatmul.mubr.bf16.gmra.mxu0 %v982
        %v1855 = vpop.f32.mrf.mxu0
        %v1856 = vadd.f32 0.0, %v1855
        %v1857 = vpop.f32.mrf.mxu0
        %v1858 = vpop.f32.mrf.mxu0
        %v1859 = vadd.f32 0.0, %v1858
        %v1860 = vpop.f32.mrf.mxu0
        %1861 = vmatprep.mubr.bf16.mxu0 %v985
        %1862 = vmatmul.mubr.bf16.gmra.mxu0 %v984
        %v1863 = vpop.f32.mrf.mxu0
        %v1864 = vadd.f32 0.0, %v1863
        %v1865 = vpop.f32.mrf.mxu0
        %v1866 = vpop.f32.mrf.mxu0
        %v1867 = vadd.f32 0.0, %v1866
        %v1868 = vpop.f32.mrf.mxu0
        %1869 = vmatprep.mubr.bf16.mxu0 %v987
        %1870 = vmatmul.mubr.bf16.gmra.mxu0 %v986
        %v1871 = vpop.f32.mrf.mxu0
        %v1872 = vadd.f32 0.0, %v1871
        %v1873 = vpop.f32.mrf.mxu0
        %v1874 = vpop.f32.mrf.mxu0
        %v1875 = vadd.f32 0.0, %v1874
        %v1876 = vpop.f32.mrf.mxu0
        %1877 = vmatprep.mubr.bf16.mxu0 %v989
        %1878 = vmatmul.mubr.bf16.gmra.mxu0 %v988
        %v1879 = vpop.f32.mrf.mxu0
        %v1880 = vadd.f32 0.0, %v1879
        %v1881 = vpop.f32.mrf.mxu0
        %v1882 = vpop.f32.mrf.mxu0
        %v1883 = vadd.f32 0.0, %v1882
        %v1884 = vpop.f32.mrf.mxu0
        %1885 = vmatprep.mubr.bf16.mxu0 %v991
        %1886 = vmatmul.mubr.bf16.gmra.mxu0 %v990
        %v1887 = vpop.f32.mrf.mxu0
        %v1888 = vadd.f32 0.0, %v1887
        %v1889 = vpop.f32.mrf.mxu0
        %v1890 = vpop.f32.mrf.mxu0
        %v1891 = vadd.f32 0.0, %v1890
        %v1892 = vpop.f32.mrf.mxu0
        %1893 = vmatprep.mubr.bf16.mxu0 %v993
        %1894 = vmatmul.mubr.bf16.gmra.mxu0 %v992
        %v1895 = vpop.f32.mrf.mxu0
        %v1896 = vadd.f32 0.0, %v1895
        %v1897 = vpop.f32.mrf.mxu0
        %v1898 = vpop.f32.mrf.mxu0
        %v1899 = vadd.f32 0.0, %v1898
        %v1900 = vpop.f32.mrf.mxu0
        %1901 = vmatprep.mubr.bf16.mxu0 %v995
        %1902 = vmatmul.mubr.bf16.gmra.mxu0 %v994
        %v1903 = vpop.f32.mrf.mxu0
        %v1904 = vadd.f32 0.0, %v1903
        %v1905 = vpop.f32.mrf.mxu0
        %v1906 = vpop.f32.mrf.mxu0
        %v1907 = vadd.f32 0.0, %v1906
        %v1908 = vpop.f32.mrf.mxu0
        %1909 = vmatprep.mubr.bf16.mxu0 %v997
        %1910 = vmatmul.mubr.bf16.gmra.mxu0 %v996
        %v1911 = vpop.f32.mrf.mxu0
        %v1912 = vadd.f32 0.0, %v1911
        %v1913 = vpop.f32.mrf.mxu0
        %v1914 = vpop.f32.mrf.mxu0
        %v1915 = vadd.f32 0.0, %v1914
        %v1916 = vpop.f32.mrf.mxu0
        %1917 = vmatprep.mubr.bf16.mxu0 %v999
        %1918 = vmatmul.mubr.bf16.gmra.mxu0 %v998
        %v1919 = vpop.f32.mrf.mxu0
        %v1920 = vadd.f32 0.0, %v1919
        %v1921 = vpop.f32.mrf.mxu0
        %v1922 = vpop.f32.mrf.mxu0
        %v1923 = vadd.f32 0.0, %v1922
        %v1924 = vpop.f32.mrf.mxu0
        %1925 = vmatprep.mubr.bf16.mxu0 %v1001
        %1926 = vmatmul.mubr.bf16.gmra.mxu0 %v1000
        %v1927 = vpop.f32.mrf.mxu0
        %v1928 = vadd.f32 0.0, %v1927
        %v1929 = vpop.f32.mrf.mxu0
        %v1930 = vpop.f32.mrf.mxu0
        %v1931 = vadd.f32 0.0, %v1930
        %v1932 = vpop.f32.mrf.mxu0
        %1933 = vmatprep.mubr.bf16.mxu0 %v1003
        %1934 = vmatmul.mubr.bf16.gmra.mxu0 %v1002
        %v1935 = vpop.f32.mrf.mxu0
        %v1936 = vadd.f32 0.0, %v1935
        %v1937 = vpop.f32.mrf.mxu0
        %v1938 = vpop.f32.mrf.mxu0
        %v1939 = vadd.f32 0.0, %v1938
        %v1940 = vpop.f32.mrf.mxu0
        %1941 = vmatprep.mubr.bf16.mxu0 %v1005
        %1942 = vmatmul.mubr.bf16.gmra.mxu0 %v1004
        %v1943 = vpop.f32.mrf.mxu0
        %v1944 = vadd.f32 0.0, %v1943
        %v1945 = vpop.f32.mrf.mxu0
        %v1946 = vpop.f32.mrf.mxu0
        %v1947 = vadd.f32 0.0, %v1946
        %v1948 = vpop.f32.mrf.mxu0
        %1949 = vmatprep.mubr.bf16.mxu0 %v1007
        %1950 = vmatmul.mubr.bf16.gmra.mxu0 %v1006
        %v1951 = vpop.f32.mrf.mxu0
        %v1952 = vadd.f32 0.0, %v1951
        %v1953 = vpop.f32.mrf.mxu0
        %v1954 = vpop.f32.mrf.mxu0
        %v1955 = vadd.f32 0.0, %v1954
        %v1956 = vpop.f32.mrf.mxu0
        %1957 = vmatprep.mubr.bf16.mxu0 %v1009
        %1958 = vmatmul.mubr.bf16.gmra.mxu0 %v1008
        %v1959 = vpop.f32.mrf.mxu0
        %v1960 = vadd.f32 0.0, %v1959
        %v1961 = vpop.f32.mrf.mxu0
        %v1962 = vpop.f32.mrf.mxu0
        %v1963 = vadd.f32 0.0, %v1962
        %v1964 = vpop.f32.mrf.mxu0
        %1965 = vmatprep.mubr.bf16.mxu0 %v1011
        %1966 = vmatmul.mubr.bf16.gmra.mxu0 %v1010
        %v1967 = vpop.f32.mrf.mxu0
        %v1968 = vadd.f32 0.0, %v1967
        %v1969 = vpop.f32.mrf.mxu0
        %v1970 = vpop.f32.mrf.mxu0
        %v1971 = vadd.f32 0.0, %v1970
        %v1972 = vpop.f32.mrf.mxu0
        %1973 = vdwg.mxu0
        %v1974 = vadd.f32 %v436, %v1367
        %v1975 = vadd.f32 %v437, %v1369
        %v1976 = vadd.f32 %v438, %v1720
        %v1977 = vadd.f32 %v439, %v1371
        %v1978 = vadd.f32 %v440, %v1373
        %v1979 = vadd.f32 %v441, %v1723
        %v1980 = vadd.f32 %v442, %v1377
        %v1981 = vadd.f32 %v443, %v1379
        %v1982 = vadd.f32 %v444, %v1728
        %v1983 = vadd.f32 %v445, %v1381
        %v1984 = vadd.f32 %v446, %v1383
        %v1985 = vadd.f32 %v447, %v1731
        %v1986 = vadd.f32 %v448, %v1387
        %v1987 = vadd.f32 %v449, %v1389
        %v1988 = vadd.f32 %v450, %v1736
        %v1989 = vadd.f32 %v451, %v1391
        %v1990 = vadd.f32 %v452, %v1393
        %v1991 = vadd.f32 %v453, %v1739
        %v1992 = vadd.f32 %v454, %v1397
        %v1993 = vadd.f32 %v455, %v1399
        %v1994 = vadd.f32 %v456, %v1744
        %v1995 = vadd.f32 %v457, %v1401
        %v1996 = vadd.f32 %v458, %v1403
        %v1997 = vadd.f32 %v459, %v1747
        %v1998 = vadd.f32 %v460, %v1407
        %v1999 = vadd.f32 %v461, %v1409
        %v2000 = vadd.f32 %v462, %v1752
        %v2001 = vadd.f32 %v463, %v1411
        %v2002 = vadd.f32 %v464, %v1413
        %v2003 = vadd.f32 %v465, %v1755
        %v2004 = vadd.f32 %v466, %v1417
        %v2005 = vadd.f32 %v467, %v1419
        %v2006 = vadd.f32 %v468, %v1760
        %v2007 = vadd.f32 %v469, %v1421
        %v2008 = vadd.f32 %v470, %v1423
        %v2009 = vadd.f32 %v471, %v1763
        %v2010 = vadd.f32 %v472, %v1427
        %v2011 = vadd.f32 %v473, %v1429
        %v2012 = vadd.f32 %v474, %v1768
        %v2013 = vadd.f32 %v475, %v1431
        %v2014 = vadd.f32 %v476, %v1433
        %v2015 = vadd.f32 %v477, %v1771
        %v2016 = vadd.f32 %v478, %v1437
        %v2017 = vadd.f32 %v479, %v1439
        %v2018 = vadd.f32 %v480, %v1776
        %v2019 = vadd.f32 %v481, %v1441
        %v2020 = vadd.f32 %v482, %v1443
        %v2021 = vadd.f32 %v483, %v1779
        %v2022 = vadd.f32 %v484, %v1447
        %v2023 = vadd.f32 %v485, %v1449
        %v2024 = vadd.f32 %v486, %v1784
        %v2025 = vadd.f32 %v487, %v1451
        %v2026 = vadd.f32 %v488, %v1453
        %v2027 = vadd.f32 %v489, %v1787
        %v2028 = vadd.f32 %v490, %v1457
        %v2029 = vadd.f32 %v491, %v1459
        %v2030 = vadd.f32 %v492, %v1792
        %v2031 = vadd.f32 %v493, %v1461
        %v2032 = vadd.f32 %v494, %v1463
        %v2033 = vadd.f32 %v495, %v1795
        %v2034 = vadd.f32 %v496, %v1467
        %v2035 = vadd.f32 %v497, %v1469
        %v2036 = vadd.f32 %v498, %v1800
        %v2037 = vadd.f32 %v499, %v1471
        %v2038 = vadd.f32 %v500, %v1473
        %v2039 = vadd.f32 %v501, %v1803
        %v2040 = vadd.f32 %v502, %v1477
        %v2041 = vadd.f32 %v503, %v1479
        %v2042 = vadd.f32 %v504, %v1808
        %v2043 = vadd.f32 %v505, %v1481
        %v2044 = vadd.f32 %v506, %v1483
        %v2045 = vadd.f32 %v507, %v1811
        %v2046 = vadd.f32 %v508, %v1487
        %v2047 = vadd.f32 %v509, %v1489
        %v2048 = vadd.f32 %v510, %v1816
        %v2049 = vadd.f32 %v511, %v1491
        %v2050 = vadd.f32 %v512, %v1493
        %v2051 = vadd.f32 %v513, %v1819
        %v2052 = vadd.f32 %v514, %v1497
        %v2053 = vadd.f32 %v515, %v1499
        %v2054 = vadd.f32 %v516, %v1824
        %v2055 = vadd.f32 %v517, %v1501
        %v2056 = vadd.f32 %v518, %v1503
        %v2057 = vadd.f32 %v519, %v1827
        %v2058 = vadd.f32 %v520, %v1507
        %v2059 = vadd.f32 %v521, %v1509
        %v2060 = vadd.f32 %v522, %v1832
        %v2061 = vadd.f32 %v523, %v1511
        %v2062 = vadd.f32 %v524, %v1513
        %v2063 = vadd.f32 %v525, %v1835
        %v2064 = vadd.f32 %v526, %v1517
        %v2065 = vadd.f32 %v527, %v1519
        %v2066 = vadd.f32 %v528, %v1840
        %v2067 = vadd.f32 %v529, %v1521
        %v2068 = vadd.f32 %v530, %v1523
        %v2069 = vadd.f32 %v531, %v1843
        %v2070 = vadd.f32 %v532, %v1527
        %v2071 = vadd.f32 %v533, %v1529
        %v2072 = vadd.f32 %v534, %v1848
        %v2073 = vadd.f32 %v535, %v1531
        %v2074 = vadd.f32 %v536, %v1533
        %v2075 = vadd.f32 %v537, %v1851
        %v2076 = vadd.f32 %v538, %v1537
        %v2077 = vadd.f32 %v539, %v1539
        %v2078 = vadd.f32 %v540, %v1856
        %v2079 = vadd.f32 %v541, %v1541
        %v2080 = vadd.f32 %v542, %v1543
        %v2081 = vadd.f32 %v543, %v1859
        %v2082 = vadd.f32 %v544, %v1547
        %v2083 = vadd.f32 %v545, %v1549
        %v2084 = vadd.f32 %v546, %v1864
        %v2085 = vadd.f32 %v547, %v1551
        %v2086 = vadd.f32 %v548, %v1553
        %v2087 = vadd.f32 %v549, %v1867
        %v2088 = vadd.f32 %v550, %v1557
        %v2089 = vadd.f32 %v551, %v1559
        %v2090 = vadd.f32 %v552, %v1872
        %v2091 = vadd.f32 %v553, %v1561
        %v2092 = vadd.f32 %v554, %v1563
        %v2093 = vadd.f32 %v555, %v1875
        %v2094 = vadd.f32 %v556, %v1567
        %v2095 = vadd.f32 %v557, %v1569
        %v2096 = vadd.f32 %v558, %v1880
        %v2097 = vadd.f32 %v559, %v1571
        %v2098 = vadd.f32 %v560, %v1573
        %v2099 = vadd.f32 %v561, %v1883
        %v2100 = vadd.f32 %v562, %v1577
        %v2101 = vadd.f32 %v563, %v1579
        %v2102 = vadd.f32 %v564, %v1888
        %v2103 = vadd.f32 %v565, %v1581
        %v2104 = vadd.f32 %v566, %v1583
        %v2105 = vadd.f32 %v567, %v1891
        %v2106 = vadd.f32 %v568, %v1587
        %v2107 = vadd.f32 %v569, %v1589
        %v2108 = vadd.f32 %v570, %v1896
        %v2109 = vadd.f32 %v571, %v1591
        %v2110 = vadd.f32 %v572, %v1593
        %v2111 = vadd.f32 %v573, %v1899
        %v2112 = vadd.f32 %v574, %v1597
        %v2113 = vadd.f32 %v575, %v1599
        %v2114 = vadd.f32 %v576, %v1904
        %v2115 = vadd.f32 %v577, %v1601
        %v2116 = vadd.f32 %v578, %v1603
        %v2117 = vadd.f32 %v579, %v1907
        %v2118 = vadd.f32 %v580, %v1607
        %v2119 = vadd.f32 %v581, %v1609
        %v2120 = vadd.f32 %v582, %v1912
        %v2121 = vadd.f32 %v583, %v1611
        %v2122 = vadd.f32 %v584, %v1613
        %v2123 = vadd.f32 %v585, %v1915
        %v2124 = vadd.f32 %v586, %v1617
        %v2125 = vadd.f32 %v587, %v1619
        %v2126 = vadd.f32 %v588, %v1920
        %v2127 = vadd.f32 %v589, %v1621
        %v2128 = vadd.f32 %v590, %v1623
        %v2129 = vadd.f32 %v591, %v1923
        %v2130 = vadd.f32 %v592, %v1627
        %v2131 = vadd.f32 %v593, %v1629
        %v2132 = vadd.f32 %v594, %v1928
        %v2133 = vadd.f32 %v595, %v1631
        %v2134 = vadd.f32 %v596, %v1633
        %v2135 = vadd.f32 %v597, %v1931
        %v2136 = vadd.f32 %v598, %v1637
        %v2137 = vadd.f32 %v599, %v1639
        %v2138 = vadd.f32 %v600, %v1936
        %v2139 = vadd.f32 %v601, %v1641
        %v2140 = vadd.f32 %v602, %v1643
        %v2141 = vadd.f32 %v603, %v1939
        %v2142 = vadd.f32 %v604, %v1647
        %v2143 = vadd.f32 %v605, %v1649
        %v2144 = vadd.f32 %v606, %v1944
        %v2145 = vadd.f32 %v607, %v1651
        %v2146 = vadd.f32 %v608, %v1653
        %v2147 = vadd.f32 %v609, %v1947
        %v2148 = vadd.f32 %v610, %v1657
        %v2149 = vadd.f32 %v611, %v1659
        %v2150 = vadd.f32 %v612, %v1952
        %v2151 = vadd.f32 %v613, %v1661
        %v2152 = vadd.f32 %v614, %v1663
        %v2153 = vadd.f32 %v615, %v1955
        %v2154 = vadd.f32 %v616, %v1667
        %v2155 = vadd.f32 %v617, %v1669
        %v2156 = vadd.f32 %v618, %v1960
        %v2157 = vadd.f32 %v619, %v1671
        %v2158 = vadd.f32 %v620, %v1673
        %v2159 = vadd.f32 %v621, %v1963
        %v2160 = vadd.f32 %v622, %v1677
        %v2161 = vadd.f32 %v623, %v1679
        %v2162 = vadd.f32 %v624, %v1968
        %v2163 = vadd.f32 %v625, %v1681
        %v2164 = vadd.f32 %v626, %v1683
        %v2165 = vadd.f32 %v627, %v1971
        %2166 = vst [vmem:[#allocation2] sm:$0xff] %v1974
        %2167 = vst [vmem:[#allocation2 + $0x8] sm:$0xff] %v1975
        %2168 = vst [vmem:[#allocation2 + $0x10] sm:$0xff] %v1976
        %2169 = vst [vmem:[#allocation2 + $0x18] sm:$0xff] %v1977
        %2170 = vst [vmem:[#allocation2 + $0x20] sm:$0xff] %v1978
        %2171 = vst [vmem:[#allocation2 + $0x28] sm:$0xff] %v1979
        %2172 = vst [vmem:[#allocation2 + $0x30] sm:$0xff] %v1980
        %2173 = vst [vmem:[#allocation2 + $0x38] sm:$0xff] %v1981
        %2174 = vst [vmem:[#allocation2 + $0x40] sm:$0xff] %v1982
        %2175 = vst [vmem:[#allocation2 + $0x48] sm:$0xff] %v1983
        %2176 = vst [vmem:[#allocation2 + $0x50] sm:$0xff] %v1984
        %2177 = vst [vmem:[#allocation2 + $0x58] sm:$0xff] %v1985
        %2178 = vst [vmem:[#allocation2 + $0x60] sm:$0xff] %v1986
        %2179 = vst [vmem:[#allocation2 + $0x68] sm:$0xff] %v1987
        %2180 = vst [vmem:[#allocation2 + $0x70] sm:$0xff] %v1988
        %2181 = vst [vmem:[#allocation2 + $0x78] sm:$0xff] %v1989
        %2182 = vst [vmem:[#allocation2 + $0x80] sm:$0xff] %v1990
        %2183 = vst [vmem:[#allocation2 + $0x88] sm:$0xff] %v1991
        %2184 = vst [vmem:[#allocation2 + $0x90] sm:$0xff] %v1992
        %2185 = vst [vmem:[#allocation2 + $0x98] sm:$0xff] %v1993
        %2186 = vst [vmem:[#allocation2 + $0xa0] sm:$0xff] %v1994
        %2187 = vst [vmem:[#allocation2 + $0xa8] sm:$0xff] %v1995
        %2188 = vst [vmem:[#allocation2 + $0xb0] sm:$0xff] %v1996
        %2189 = vst [vmem:[#allocation2 + $0xb8] sm:$0xff] %v1997
        %2190 = vst [vmem:[#allocation2 + $0xc0] sm:$0xff] %v1998
        %2191 = vst [vmem:[#allocation2 + $0xc8] sm:$0xff] %v1999
        %2192 = vst [vmem:[#allocation2 + $0xd0] sm:$0xff] %v2000
        %2193 = vst [vmem:[#allocation2 + $0xd8] sm:$0xff] %v2001
        %2194 = vst [vmem:[#allocation2 + $0xe0] sm:$0xff] %v2002
        %2195 = vst [vmem:[#allocation2 + $0xe8] sm:$0xff] %v2003
        %2196 = vst [vmem:[#allocation2 + $0xf0] sm:$0xff] %v2004
        %2197 = vst [vmem:[#allocation2 + $0xf8] sm:$0xff] %v2005
        %2198 = vst [vmem:[#allocation2 + $0x100] sm:$0xff] %v2006
        %2199 = vst [vmem:[#allocation2 + $0x108] sm:$0xff] %v2007
        %2200 = vst [vmem:[#allocation2 + $0x110] sm:$0xff] %v2008
        %2201 = vst [vmem:[#allocation2 + $0x118] sm:$0xff] %v2009
        %2202 = vst [vmem:[#allocation2 + $0x120] sm:$0xff] %v2010
        %2203 = vst [vmem:[#allocation2 + $0x128] sm:$0xff] %v2011
        %2204 = vst [vmem:[#allocation2 + $0x130] sm:$0xff] %v2012
        %2205 = vst [vmem:[#allocation2 + $0x138] sm:$0xff] %v2013
        %2206 = vst [vmem:[#allocation2 + $0x140] sm:$0xff] %v2014
        %2207 = vst [vmem:[#allocation2 + $0x148] sm:$0xff] %v2015
        %2208 = vst [vmem:[#allocation2 + $0x150] sm:$0xff] %v2016
        %2209 = vst [vmem:[#allocation2 + $0x158] sm:$0xff] %v2017
        %2210 = vst [vmem:[#allocation2 + $0x160] sm:$0xff] %v2018
        %2211 = vst [vmem:[#allocation2 + $0x168] sm:$0xff] %v2019
        %2212 = vst [vmem:[#allocation2 + $0x170] sm:$0xff] %v2020
        %2213 = vst [vmem:[#allocation2 + $0x178] sm:$0xff] %v2021
        %2214 = vst [vmem:[#allocation2 + $0x180] sm:$0xff] %v2022
        %2215 = vst [vmem:[#allocation2 + $0x188] sm:$0xff] %v2023
        %2216 = vst [vmem:[#allocation2 + $0x190] sm:$0xff] %v2024
        %2217 = vst [vmem:[#allocation2 + $0x198] sm:$0xff] %v2025
        %2218 = vst [vmem:[#allocation2 + $0x1a0] sm:$0xff] %v2026
        %2219 = vst [vmem:[#allocation2 + $0x1a8] sm:$0xff] %v2027
        %2220 = vst [vmem:[#allocation2 + $0x1b0] sm:$0xff] %v2028
        %2221 = vst [vmem:[#allocation2 + $0x1b8] sm:$0xff] %v2029
        %2222 = vst [vmem:[#allocation2 + $0x1c0] sm:$0xff] %v2030
        %2223 = vst [vmem:[#allocation2 + $0x1c8] sm:$0xff] %v2031
        %2224 = vst [vmem:[#allocation2 + $0x1d0] sm:$0xff] %v2032
        %2225 = vst [vmem:[#allocation2 + $0x1d8] sm:$0xff] %v2033
        %2226 = vst [vmem:[#allocation2 + $0x1e0] sm:$0xff] %v2034
        %2227 = vst [vmem:[#allocation2 + $0x1e8] sm:$0xff] %v2035
        %2228 = vst [vmem:[#allocation2 + $0x1f0] sm:$0xff] %v2036
        %2229 = vst [vmem:[#allocation2 + $0x1f8] sm:$0xff] %v2037
        %2230 = vst [vmem:[#allocation2 + $0x200] sm:$0xff] %v2038
        %2231 = vst [vmem:[#allocation2 + $0x208] sm:$0xff] %v2039
        %2232 = vst [vmem:[#allocation2 + $0x210] sm:$0xff] %v2040
        %2233 = vst [vmem:[#allocation2 + $0x218] sm:$0xff] %v2041
        %2234 = vst [vmem:[#allocation2 + $0x220] sm:$0xff] %v2042
        %2235 = vst [vmem:[#allocation2 + $0x228] sm:$0xff] %v2043
        %2236 = vst [vmem:[#allocation2 + $0x230] sm:$0xff] %v2044
        %2237 = vst [vmem:[#allocation2 + $0x238] sm:$0xff] %v2045
        %2238 = vst [vmem:[#allocation2 + $0x240] sm:$0xff] %v2046
        %2239 = vst [vmem:[#allocation2 + $0x248] sm:$0xff] %v2047
        %2240 = vst [vmem:[#allocation2 + $0x250] sm:$0xff] %v2048
        %2241 = vst [vmem:[#allocation2 + $0x258] sm:$0xff] %v2049
        %2242 = vst [vmem:[#allocation2 + $0x260] sm:$0xff] %v2050
        %2243 = vst [vmem:[#allocation2 + $0x268] sm:$0xff] %v2051
        %2244 = vst [vmem:[#allocation2 + $0x270] sm:$0xff] %v2052
        %2245 = vst [vmem:[#allocation2 + $0x278] sm:$0xff] %v2053
        %2246 = vst [vmem:[#allocation2 + $0x280] sm:$0xff] %v2054
        %2247 = vst [vmem:[#allocation2 + $0x288] sm:$0xff] %v2055
        %2248 = vst [vmem:[#allocation2 + $0x290] sm:$0xff] %v2056
        %2249 = vst [vmem:[#allocation2 + $0x298] sm:$0xff] %v2057
        %2250 = vst [vmem:[#allocation2 + $0x2a0] sm:$0xff] %v2058
        %2251 = vst [vmem:[#allocation2 + $0x2a8] sm:$0xff] %v2059
        %2252 = vst [vmem:[#allocation2 + $0x2b0] sm:$0xff] %v2060
        %2253 = vst [vmem:[#allocation2 + $0x2b8] sm:$0xff] %v2061
        %2254 = vst [vmem:[#allocation2 + $0x2c0] sm:$0xff] %v2062
        %2255 = vst [vmem:[#allocation2 + $0x2c8] sm:$0xff] %v2063
        %2256 = vst [vmem:[#allocation2 + $0x2d0] sm:$0xff] %v2064
        %2257 = vst [vmem:[#allocation2 + $0x2d8] sm:$0xff] %v2065
        %2258 = vst [vmem:[#allocation2 + $0x2e0] sm:$0xff] %v2066
        %2259 = vst [vmem:[#allocation2 + $0x2e8] sm:$0xff] %v2067
        %2260 = vst [vmem:[#allocation2 + $0x2f0] sm:$0xff] %v2068
        %2261 = vst [vmem:[#allocation2 + $0x2f8] sm:$0xff] %v2069
        %2262 = vst [vmem:[#allocation2 + $0x300] sm:$0xff] %v2070
        %2263 = vst [vmem:[#allocation2 + $0x308] sm:$0xff] %v2071
        %2264 = vst [vmem:[#allocation2 + $0x310] sm:$0xff] %v2072
        %2265 = vst [vmem:[#allocation2 + $0x318] sm:$0xff] %v2073
        %2266 = vst [vmem:[#allocation2 + $0x320] sm:$0xff] %v2074
        %2267 = vst [vmem:[#allocation2 + $0x328] sm:$0xff] %v2075
        %2268 = vst [vmem:[#allocation2 + $0x330] sm:$0xff] %v2076
        %2269 = vst [vmem:[#allocation2 + $0x338] sm:$0xff] %v2077
        %2270 = vst [vmem:[#allocation2 + $0x340] sm:$0xff] %v2078
        %2271 = vst [vmem:[#allocation2 + $0x348] sm:$0xff] %v2079
        %2272 = vst [vmem:[#allocation2 + $0x350] sm:$0xff] %v2080
        %2273 = vst [vmem:[#allocation2 + $0x358] sm:$0xff] %v2081
        %2274 = vst [vmem:[#allocation2 + $0x360] sm:$0xff] %v2082
        %2275 = vst [vmem:[#allocation2 + $0x368] sm:$0xff] %v2083
        %2276 = vst [vmem:[#allocation2 + $0x370] sm:$0xff] %v2084
        %2277 = vst [vmem:[#allocation2 + $0x378] sm:$0xff] %v2085
        %2278 = vst [vmem:[#allocation2 + $0x380] sm:$0xff] %v2086
        %2279 = vst [vmem:[#allocation2 + $0x388] sm:$0xff] %v2087
        %2280 = vst [vmem:[#allocation2 + $0x390] sm:$0xff] %v2088
        %2281 = vst [vmem:[#allocation2 + $0x398] sm:$0xff] %v2089
        %2282 = vst [vmem:[#allocation2 + $0x3a0] sm:$0xff] %v2090
        %2283 = vst [vmem:[#allocation2 + $0x3a8] sm:$0xff] %v2091
        %2284 = vst [vmem:[#allocation2 + $0x3b0] sm:$0xff] %v2092
        %2285 = vst [vmem:[#allocation2 + $0x3b8] sm:$0xff] %v2093
        %2286 = vst [vmem:[#allocation2 + $0x3c0] sm:$0xff] %v2094
        %2287 = vst [vmem:[#allocation2 + $0x3c8] sm:$0xff] %v2095
        %2288 = vst [vmem:[#allocation2 + $0x3d0] sm:$0xff] %v2096
        %2289 = vst [vmem:[#allocation2 + $0x3d8] sm:$0xff] %v2097
        %2290 = vst [vmem:[#allocation2 + $0x3e0] sm:$0xff] %v2098
        %2291 = vst [vmem:[#allocation2 + $0x3e8] sm:$0xff] %v2099
        %2292 = vst [vmem:[#allocation2 + $0x3f0] sm:$0xff] %v2100
        %2293 = vst [vmem:[#allocation2 + $0x3f8] sm:$0xff] %v2101
        %2294 = vst [vmem:[#allocation2 + $0x400] sm:$0xff] %v2102
        %2295 = vst [vmem:[#allocation2 + $0x408] sm:$0xff] %v2103
        %2296 = vst [vmem:[#allocation2 + $0x410] sm:$0xff] %v2104
        %2297 = vst [vmem:[#allocation2 + $0x418] sm:$0xff] %v2105
        %2298 = vst [vmem:[#allocation2 + $0x420] sm:$0xff] %v2106
        %2299 = vst [vmem:[#allocation2 + $0x428] sm:$0xff] %v2107
        %2300 = vst [vmem:[#allocation2 + $0x430] sm:$0xff] %v2108
        %2301 = vst [vmem:[#allocation2 + $0x438] sm:$0xff] %v2109
        %2302 = vst [vmem:[#allocation2 + $0x440] sm:$0xff] %v2110
        %2303 = vst [vmem:[#allocation2 + $0x448] sm:$0xff] %v2111
        %2304 = vst [vmem:[#allocation2 + $0x450] sm:$0xff] %v2112
        %2305 = vst [vmem:[#allocation2 + $0x458] sm:$0xff] %v2113
        %2306 = vst [vmem:[#allocation2 + $0x460] sm:$0xff] %v2114
        %2307 = vst [vmem:[#allocation2 + $0x468] sm:$0xff] %v2115
        %2308 = vst [vmem:[#allocation2 + $0x470] sm:$0xff] %v2116
        %2309 = vst [vmem:[#allocation2 + $0x478] sm:$0xff] %v2117
        %2310 = vst [vmem:[#allocation2 + $0x480] sm:$0xff] %v2118
        %2311 = vst [vmem:[#allocation2 + $0x488] sm:$0xff] %v2119
        %2312 = vst [vmem:[#allocation2 + $0x490] sm:$0xff] %v2120
        %2313 = vst [vmem:[#allocation2 + $0x498] sm:$0xff] %v2121
        %2314 = vst [vmem:[#allocation2 + $0x4a0] sm:$0xff] %v2122
        %2315 = vst [vmem:[#allocation2 + $0x4a8] sm:$0xff] %v2123
        %2316 = vst [vmem:[#allocation2 + $0x4b0] sm:$0xff] %v2124
        %2317 = vst [vmem:[#allocation2 + $0x4b8] sm:$0xff] %v2125
        %2318 = vst [vmem:[#allocation2 + $0x4c0] sm:$0xff] %v2126
        %2319 = vst [vmem:[#allocation2 + $0x4c8] sm:$0xff] %v2127
        %2320 = vst [vmem:[#allocation2 + $0x4d0] sm:$0xff] %v2128
        %2321 = vst [vmem:[#allocation2 + $0x4d8] sm:$0xff] %v2129
        %2322 = vst [vmem:[#allocation2 + $0x4e0] sm:$0xff] %v2130
        %2323 = vst [vmem:[#allocation2 + $0x4e8] sm:$0xff] %v2131
        %2324 = vst [vmem:[#allocation2 + $0x4f0] sm:$0xff] %v2132
        %2325 = vst [vmem:[#allocation2 + $0x4f8] sm:$0xff] %v2133
        %2326 = vst [vmem:[#allocation2 + $0x500] sm:$0xff] %v2134
        %2327 = vst [vmem:[#allocation2 + $0x508] sm:$0xff] %v2135
        %2328 = vst [vmem:[#allocation2 + $0x510] sm:$0xff] %v2136
        %2329 = vst [vmem:[#allocation2 + $0x518] sm:$0xff] %v2137
        %2330 = vst [vmem:[#allocation2 + $0x520] sm:$0xff] %v2138
        %2331 = vst [vmem:[#allocation2 + $0x528] sm:$0xff] %v2139
        %2332 = vst [vmem:[#allocation2 + $0x530] sm:$0xff] %v2140
        %2333 = vst [vmem:[#allocation2 + $0x538] sm:$0xff] %v2141
        %2334 = vst [vmem:[#allocation2 + $0x540] sm:$0xff] %v2142
        %2335 = vst [vmem:[#allocation2 + $0x548] sm:$0xff] %v2143
        %2336 = vst [vmem:[#allocation2 + $0x550] sm:$0xff] %v2144
        %2337 = vst [vmem:[#allocation2 + $0x558] sm:$0xff] %v2145
        %2338 = vst [vmem:[#allocation2 + $0x560] sm:$0xff] %v2146
        %2339 = vst [vmem:[#allocation2 + $0x568] sm:$0xff] %v2147
        %2340 = vst [vmem:[#allocation2 + $0x570] sm:$0xff] %v2148
        %2341 = vst [vmem:[#allocation2 + $0x578] sm:$0xff] %v2149
        %2342 = vst [vmem:[#allocation2 + $0x580] sm:$0xff] %v2150
        %2343 = vst [vmem:[#allocation2 + $0x588] sm:$0xff] %v2151
        %2344 = vst [vmem:[#allocation2 + $0x590] sm:$0xff] %v2152
        %2345 = vst [vmem:[#allocation2 + $0x598] sm:$0xff] %v2153
        %2346 = vst [vmem:[#allocation2 + $0x5a0] sm:$0xff] %v2154
        %2347 = vst [vmem:[#allocation2 + $0x5a8] sm:$0xff] %v2155
        %2348 = vst [vmem:[#allocation2 + $0x5b0] sm:$0xff] %v2156
        %2349 = vst [vmem:[#allocation2 + $0x5b8] sm:$0xff] %v2157
        %2350 = vst [vmem:[#allocation2 + $0x5c0] sm:$0xff] %v2158
        %2351 = vst [vmem:[#allocation2 + $0x5c8] sm:$0xff] %v2159
        %2352 = vst [vmem:[#allocation2 + $0x5d0] sm:$0xff] %v2160
        %2353 = vst [vmem:[#allocation2 + $0x5d8] sm:$0xff] %v2161
        %2354 = vst [vmem:[#allocation2 + $0x5e0] sm:$0xff] %v2162
        %2355 = vst [vmem:[#allocation2 + $0x5e8] sm:$0xff] %v2163
        %2356 = vst [vmem:[#allocation2 + $0x5f0] sm:$0xff] %v2164
        %2357 = vst [vmem:[#allocation2 + $0x5f8] sm:$0xff] %v2165
        // Predicated region
        $region41: #{tpu_custom_call.1} parent=27 // pred_check
          %p2358 = pneg %p240
        $region42: #{tpu_custom_call.1} parent=27 // pred_check_branch
          %2360 = sbr.rel (%p2358) target = $region44
        $region43: #{tpu_custom_call.1} parent=27 // pred_region
          %v2361 = vld [vmem:[#allocation2] sm:$0xff]
          %v2362 = vld [vmem:[#allocation2 + $0x8] sm:$0xff]
          %v2363 = vld [vmem:[#allocation2 + $0x10] sm:$0xff]
          %v2364 = vld [vmem:[#allocation2 + $0x18] sm:$0xff]
          %v2365 = vld [vmem:[#allocation2 + $0x20] sm:$0xff]
          %v2366 = vld [vmem:[#allocation2 + $0x28] sm:$0xff]
          %v2367 = vld [vmem:[#allocation2 + $0x30] sm:$0xff]
          %v2368 = vld [vmem:[#allocation2 + $0x38] sm:$0xff]
          %v2369 = vld [vmem:[#allocation2 + $0x40] sm:$0xff]
          %v2370 = vld [vmem:[#allocation2 + $0x48] sm:$0xff]
          %v2371 = vld [vmem:[#allocation2 + $0x50] sm:$0xff]
          %v2372 = vld [vmem:[#allocation2 + $0x58] sm:$0xff]
          %v2373 = vld [vmem:[#allocation2 + $0x60] sm:$0xff]
          %v2374 = vld [vmem:[#allocation2 + $0x68] sm:$0xff]
          %v2375 = vld [vmem:[#allocation2 + $0x70] sm:$0xff]
          %v2376 = vld [vmem:[#allocation2 + $0x78] sm:$0xff]
          %v2377 = vld [vmem:[#allocation2 + $0x80] sm:$0xff]
          %v2378 = vld [vmem:[#allocation2 + $0x88] sm:$0xff]
          %v2379 = vld [vmem:[#allocation2 + $0x90] sm:$0xff]
          %v2380 = vld [vmem:[#allocation2 + $0x98] sm:$0xff]
          %v2381 = vld [vmem:[#allocation2 + $0xa0] sm:$0xff]
          %v2382 = vld [vmem:[#allocation2 + $0xa8] sm:$0xff]
          %v2383 = vld [vmem:[#allocation2 + $0xb0] sm:$0xff]
          %v2384 = vld [vmem:[#allocation2 + $0xb8] sm:$0xff]
          %v2385 = vld [vmem:[#allocation2 + $0xc0] sm:$0xff]
          %v2386 = vld [vmem:[#allocation2 + $0xc8] sm:$0xff]
          %v2387 = vld [vmem:[#allocation2 + $0xd0] sm:$0xff]
          %v2388 = vld [vmem:[#allocation2 + $0xd8] sm:$0xff]
          %v2389 = vld [vmem:[#allocation2 + $0xe0] sm:$0xff]
          %v2390 = vld [vmem:[#allocation2 + $0xe8] sm:$0xff]
          %v2391 = vld [vmem:[#allocation2 + $0xf0] sm:$0xff]
          %v2392 = vld [vmem:[#allocation2 + $0xf8] sm:$0xff]
          %v2393 = vld [vmem:[#allocation2 + $0x100] sm:$0xff]
          %v2394 = vld [vmem:[#allocation2 + $0x108] sm:$0xff]
          %v2395 = vld [vmem:[#allocation2 + $0x110] sm:$0xff]
          %v2396 = vld [vmem:[#allocation2 + $0x118] sm:$0xff]
          %v2397 = vld [vmem:[#allocation2 + $0x120] sm:$0xff]
          %v2398 = vld [vmem:[#allocation2 + $0x128] sm:$0xff]
          %v2399 = vld [vmem:[#allocation2 + $0x130] sm:$0xff]
          %v2400 = vld [vmem:[#allocation2 + $0x138] sm:$0xff]
          %v2401 = vld [vmem:[#allocation2 + $0x140] sm:$0xff]
          %v2402 = vld [vmem:[#allocation2 + $0x148] sm:$0xff]
          %v2403 = vld [vmem:[#allocation2 + $0x150] sm:$0xff]
          %v2404 = vld [vmem:[#allocation2 + $0x158] sm:$0xff]
          %v2405 = vld [vmem:[#allocation2 + $0x160] sm:$0xff]
          %v2406 = vld [vmem:[#allocation2 + $0x168] sm:$0xff]
          %v2407 = vld [vmem:[#allocation2 + $0x170] sm:$0xff]
          %v2408 = vld [vmem:[#allocation2 + $0x178] sm:$0xff]
          %v2409 = vld [vmem:[#allocation2 + $0x180] sm:$0xff]
          %v2410 = vld [vmem:[#allocation2 + $0x188] sm:$0xff]
          %v2411 = vld [vmem:[#allocation2 + $0x190] sm:$0xff]
          %v2412 = vld [vmem:[#allocation2 + $0x198] sm:$0xff]
          %v2413 = vld [vmem:[#allocation2 + $0x1a0] sm:$0xff]
          %v2414 = vld [vmem:[#allocation2 + $0x1a8] sm:$0xff]
          %v2415 = vld [vmem:[#allocation2 + $0x1b0] sm:$0xff]
          %v2416 = vld [vmem:[#allocation2 + $0x1b8] sm:$0xff]
          %v2417 = vld [vmem:[#allocation2 + $0x1c0] sm:$0xff]
          %v2418 = vld [vmem:[#allocation2 + $0x1c8] sm:$0xff]
          %v2419 = vld [vmem:[#allocation2 + $0x1d0] sm:$0xff]
          %v2420 = vld [vmem:[#allocation2 + $0x1d8] sm:$0xff]
          %v2421 = vld [vmem:[#allocation2 + $0x1e0] sm:$0xff]
          %v2422 = vld [vmem:[#allocation2 + $0x1e8] sm:$0xff]
          %v2423 = vld [vmem:[#allocation2 + $0x1f0] sm:$0xff]
          %v2424 = vld [vmem:[#allocation2 + $0x1f8] sm:$0xff]
          %v2425 = vld [vmem:[#allocation2 + $0x200] sm:$0xff]
          %v2426 = vld [vmem:[#allocation2 + $0x208] sm:$0xff]
          %v2427 = vld [vmem:[#allocation2 + $0x210] sm:$0xff]
          %v2428 = vld [vmem:[#allocation2 + $0x218] sm:$0xff]
          %v2429 = vld [vmem:[#allocation2 + $0x220] sm:$0xff]
          %v2430 = vld [vmem:[#allocation2 + $0x228] sm:$0xff]
          %v2431 = vld [vmem:[#allocation2 + $0x230] sm:$0xff]
          %v2432 = vld [vmem:[#allocation2 + $0x238] sm:$0xff]
          %v2433 = vld [vmem:[#allocation2 + $0x240] sm:$0xff]
          %v2434 = vld [vmem:[#allocation2 + $0x248] sm:$0xff]
          %v2435 = vld [vmem:[#allocation2 + $0x250] sm:$0xff]
          %v2436 = vld [vmem:[#allocation2 + $0x258] sm:$0xff]
          %v2437 = vld [vmem:[#allocation2 + $0x260] sm:$0xff]
          %v2438 = vld [vmem:[#allocation2 + $0x268] sm:$0xff]
          %v2439 = vld [vmem:[#allocation2 + $0x270] sm:$0xff]
          %v2440 = vld [vmem:[#allocation2 + $0x278] sm:$0xff]
          %v2441 = vld [vmem:[#allocation2 + $0x280] sm:$0xff]
          %v2442 = vld [vmem:[#allocation2 + $0x288] sm:$0xff]
          %v2443 = vld [vmem:[#allocation2 + $0x290] sm:$0xff]
          %v2444 = vld [vmem:[#allocation2 + $0x298] sm:$0xff]
          %v2445 = vld [vmem:[#allocation2 + $0x2a0] sm:$0xff]
          %v2446 = vld [vmem:[#allocation2 + $0x2a8] sm:$0xff]
          %v2447 = vld [vmem:[#allocation2 + $0x2b0] sm:$0xff]
          %v2448 = vld [vmem:[#allocation2 + $0x2b8] sm:$0xff]
          %v2449 = vld [vmem:[#allocation2 + $0x2c0] sm:$0xff]
          %v2450 = vld [vmem:[#allocation2 + $0x2c8] sm:$0xff]
          %v2451 = vld [vmem:[#allocation2 + $0x2d0] sm:$0xff]
          %v2452 = vld [vmem:[#allocation2 + $0x2d8] sm:$0xff]
          %v2453 = vld [vmem:[#allocation2 + $0x2e0] sm:$0xff]
          %v2454 = vld [vmem:[#allocation2 + $0x2e8] sm:$0xff]
          %v2455 = vld [vmem:[#allocation2 + $0x2f0] sm:$0xff]
          %v2456 = vld [vmem:[#allocation2 + $0x2f8] sm:$0xff]
          %v2457 = vld [vmem:[#allocation2 + $0x300] sm:$0xff]
          %v2458 = vld [vmem:[#allocation2 + $0x308] sm:$0xff]
          %v2459 = vld [vmem:[#allocation2 + $0x310] sm:$0xff]
          %v2460 = vld [vmem:[#allocation2 + $0x318] sm:$0xff]
          %v2461 = vld [vmem:[#allocation2 + $0x320] sm:$0xff]
          %v2462 = vld [vmem:[#allocation2 + $0x328] sm:$0xff]
          %v2463 = vld [vmem:[#allocation2 + $0x330] sm:$0xff]
          %v2464 = vld [vmem:[#allocation2 + $0x338] sm:$0xff]
          %v2465 = vld [vmem:[#allocation2 + $0x340] sm:$0xff]
          %v2466 = vld [vmem:[#allocation2 + $0x348] sm:$0xff]
          %v2467 = vld [vmem:[#allocation2 + $0x350] sm:$0xff]
          %v2468 = vld [vmem:[#allocation2 + $0x358] sm:$0xff]
          %v2469 = vld [vmem:[#allocation2 + $0x360] sm:$0xff]
          %v2470 = vld [vmem:[#allocation2 + $0x368] sm:$0xff]
          %v2471 = vld [vmem:[#allocation2 + $0x370] sm:$0xff]
          %v2472 = vld [vmem:[#allocation2 + $0x378] sm:$0xff]
          %v2473 = vld [vmem:[#allocation2 + $0x380] sm:$0xff]
          %v2474 = vld [vmem:[#allocation2 + $0x388] sm:$0xff]
          %v2475 = vld [vmem:[#allocation2 + $0x390] sm:$0xff]
          %v2476 = vld [vmem:[#allocation2 + $0x398] sm:$0xff]
          %v2477 = vld [vmem:[#allocation2 + $0x3a0] sm:$0xff]
          %v2478 = vld [vmem:[#allocation2 + $0x3a8] sm:$0xff]
          %v2479 = vld [vmem:[#allocation2 + $0x3b0] sm:$0xff]
          %v2480 = vld [vmem:[#allocation2 + $0x3b8] sm:$0xff]
          %v2481 = vld [vmem:[#allocation2 + $0x3c0] sm:$0xff]
          %v2482 = vld [vmem:[#allocation2 + $0x3c8] sm:$0xff]
          %v2483 = vld [vmem:[#allocation2 + $0x3d0] sm:$0xff]
          %v2484 = vld [vmem:[#allocation2 + $0x3d8] sm:$0xff]
          %v2485 = vld [vmem:[#allocation2 + $0x3e0] sm:$0xff]
          %v2486 = vld [vmem:[#allocation2 + $0x3e8] sm:$0xff]
          %v2487 = vld [vmem:[#allocation2 + $0x3f0] sm:$0xff]
          %v2488 = vld [vmem:[#allocation2 + $0x3f8] sm:$0xff]
          %v2489 = vld [vmem:[#allocation2 + $0x400] sm:$0xff]
          %v2490 = vld [vmem:[#allocation2 + $0x408] sm:$0xff]
          %v2491 = vld [vmem:[#allocation2 + $0x410] sm:$0xff]
          %v2492 = vld [vmem:[#allocation2 + $0x418] sm:$0xff]
          %v2493 = vld [vmem:[#allocation2 + $0x420] sm:$0xff]
          %v2494 = vld [vmem:[#allocation2 + $0x428] sm:$0xff]
          %v2495 = vld [vmem:[#allocation2 + $0x430] sm:$0xff]
          %v2496 = vld [vmem:[#allocation2 + $0x438] sm:$0xff]
          %v2497 = vld [vmem:[#allocation2 + $0x440] sm:$0xff]
          %v2498 = vld [vmem:[#allocation2 + $0x448] sm:$0xff]
          %v2499 = vld [vmem:[#allocation2 + $0x450] sm:$0xff]
          %v2500 = vld [vmem:[#allocation2 + $0x458] sm:$0xff]
          %v2501 = vld [vmem:[#allocation2 + $0x460] sm:$0xff]
          %v2502 = vld [vmem:[#allocation2 + $0x468] sm:$0xff]
          %v2503 = vld [vmem:[#allocation2 + $0x470] sm:$0xff]
          %v2504 = vld [vmem:[#allocation2 + $0x478] sm:$0xff]
          %v2505 = vld [vmem:[#allocation2 + $0x480] sm:$0xff]
          %v2506 = vld [vmem:[#allocation2 + $0x488] sm:$0xff]
          %v2507 = vld [vmem:[#allocation2 + $0x490] sm:$0xff]
          %v2508 = vld [vmem:[#allocation2 + $0x498] sm:$0xff]
          %v2509 = vld [vmem:[#allocation2 + $0x4a0] sm:$0xff]
          %v2510 = vld [vmem:[#allocation2 + $0x4a8] sm:$0xff]
          %v2511 = vld [vmem:[#allocation2 + $0x4b0] sm:$0xff]
          %v2512 = vld [vmem:[#allocation2 + $0x4b8] sm:$0xff]
          %v2513 = vld [vmem:[#allocation2 + $0x4c0] sm:$0xff]
          %v2514 = vld [vmem:[#allocation2 + $0x4c8] sm:$0xff]
          %v2515 = vld [vmem:[#allocation2 + $0x4d0] sm:$0xff]
          %v2516 = vld [vmem:[#allocation2 + $0x4d8] sm:$0xff]
          %v2517 = vld [vmem:[#allocation2 + $0x4e0] sm:$0xff]
          %v2518 = vld [vmem:[#allocation2 + $0x4e8] sm:$0xff]
          %v2519 = vld [vmem:[#allocation2 + $0x4f0] sm:$0xff]
          %v2520 = vld [vmem:[#allocation2 + $0x4f8] sm:$0xff]
          %v2521 = vld [vmem:[#allocation2 + $0x500] sm:$0xff]
          %v2522 = vld [vmem:[#allocation2 + $0x508] sm:$0xff]
          %v2523 = vld [vmem:[#allocation2 + $0x510] sm:$0xff]
          %v2524 = vld [vmem:[#allocation2 + $0x518] sm:$0xff]
          %v2525 = vld [vmem:[#allocation2 + $0x520] sm:$0xff]
          %v2526 = vld [vmem:[#allocation2 + $0x528] sm:$0xff]
          %v2527 = vld [vmem:[#allocation2 + $0x530] sm:$0xff]
          %v2528 = vld [vmem:[#allocation2 + $0x538] sm:$0xff]
          %v2529 = vld [vmem:[#allocation2 + $0x540] sm:$0xff]
          %v2530 = vld [vmem:[#allocation2 + $0x548] sm:$0xff]
          %v2531 = vld [vmem:[#allocation2 + $0x550] sm:$0xff]
          %v2532 = vld [vmem:[#allocation2 + $0x558] sm:$0xff]
          %v2533 = vld [vmem:[#allocation2 + $0x560] sm:$0xff]
          %v2534 = vld [vmem:[#allocation2 + $0x568] sm:$0xff]
          %v2535 = vld [vmem:[#allocation2 + $0x570] sm:$0xff]
          %v2536 = vld [vmem:[#allocation2 + $0x578] sm:$0xff]
          %v2537 = vld [vmem:[#allocation2 + $0x580] sm:$0xff]
          %v2538 = vld [vmem:[#allocation2 + $0x588] sm:$0xff]
          %v2539 = vld [vmem:[#allocation2 + $0x590] sm:$0xff]
          %v2540 = vld [vmem:[#allocation2 + $0x598] sm:$0xff]
          %v2541 = vld [vmem:[#allocation2 + $0x5a0] sm:$0xff]
          %v2542 = vld [vmem:[#allocation2 + $0x5a8] sm:$0xff]
          %v2543 = vld [vmem:[#allocation2 + $0x5b0] sm:$0xff]
          %v2544 = vld [vmem:[#allocation2 + $0x5b8] sm:$0xff]
          %v2545 = vld [vmem:[#allocation2 + $0x5c0] sm:$0xff]
          %v2546 = vld [vmem:[#allocation2 + $0x5c8] sm:$0xff]
          %v2547 = vld [vmem:[#allocation2 + $0x5d0] sm:$0xff]
          %v2548 = vld [vmem:[#allocation2 + $0x5d8] sm:$0xff]
          %v2549 = vld [vmem:[#allocation2 + $0x5e0] sm:$0xff]
          %v2550 = vld [vmem:[#allocation2 + $0x5e8] sm:$0xff]
          %v2551 = vld [vmem:[#allocation2 + $0x5f0] sm:$0xff]
          %v2552 = vld [vmem:[#allocation2 + $0x5f8] sm:$0xff]
          %v2553 = vpack.c.bf16 %v2364, %v2361
          %v2554 = vpack.c.bf16 %v2365, %v2362
          %v2555 = vpack.c.bf16 %v2366, %v2363
          %v2556 = vpack.c.bf16 %v2370, %v2367
          %v2557 = vpack.c.bf16 %v2371, %v2368
          %v2558 = vpack.c.bf16 %v2372, %v2369
          %v2559 = vpack.c.bf16 %v2376, %v2373
          %v2560 = vpack.c.bf16 %v2377, %v2374
          %v2561 = vpack.c.bf16 %v2378, %v2375
          %v2562 = vpack.c.bf16 %v2382, %v2379
          %v2563 = vpack.c.bf16 %v2383, %v2380
          %v2564 = vpack.c.bf16 %v2384, %v2381
          %v2565 = vpack.c.bf16 %v2388, %v2385
          %v2566 = vpack.c.bf16 %v2389, %v2386
          %v2567 = vpack.c.bf16 %v2390, %v2387
          %v2568 = vpack.c.bf16 %v2394, %v2391
          %v2569 = vpack.c.bf16 %v2395, %v2392
          %v2570 = vpack.c.bf16 %v2396, %v2393
          %v2571 = vpack.c.bf16 %v2400, %v2397
          %v2572 = vpack.c.bf16 %v2401, %v2398
          %v2573 = vpack.c.bf16 %v2402, %v2399
          %v2574 = vpack.c.bf16 %v2406, %v2403
          %v2575 = vpack.c.bf16 %v2407, %v2404
          %v2576 = vpack.c.bf16 %v2408, %v2405
          %v2577 = vpack.c.bf16 %v2412, %v2409
          %v2578 = vpack.c.bf16 %v2413, %v2410
          %v2579 = vpack.c.bf16 %v2414, %v2411
          %v2580 = vpack.c.bf16 %v2418, %v2415
          %v2581 = vpack.c.bf16 %v2419, %v2416
          %v2582 = vpack.c.bf16 %v2420, %v2417
          %v2583 = vpack.c.bf16 %v2424, %v2421
          %v2584 = vpack.c.bf16 %v2425, %v2422
          %v2585 = vpack.c.bf16 %v2426, %v2423
          %v2586 = vpack.c.bf16 %v2430, %v2427
          %v2587 = vpack.c.bf16 %v2431, %v2428
          %v2588 = vpack.c.bf16 %v2432, %v2429
          %v2589 = vpack.c.bf16 %v2436, %v2433
          %v2590 = vpack.c.bf16 %v2437, %v2434
          %v2591 = vpack.c.bf16 %v2438, %v2435
          %v2592 = vpack.c.bf16 %v2442, %v2439
          %v2593 = vpack.c.bf16 %v2443, %v2440
          %v2594 = vpack.c.bf16 %v2444, %v2441
          %v2595 = vpack.c.bf16 %v2448, %v2445
          %v2596 = vpack.c.bf16 %v2449, %v2446
          %v2597 = vpack.c.bf16 %v2450, %v2447
          %v2598 = vpack.c.bf16 %v2454, %v2451
          %v2599 = vpack.c.bf16 %v2455, %v2452
          %v2600 = vpack.c.bf16 %v2456, %v2453
          %v2601 = vpack.c.bf16 %v2460, %v2457
          %v2602 = vpack.c.bf16 %v2461, %v2458
          %v2603 = vpack.c.bf16 %v2462, %v2459
          %v2604 = vpack.c.bf16 %v2466, %v2463
          %v2605 = vpack.c.bf16 %v2467, %v2464
          %v2606 = vpack.c.bf16 %v2468, %v2465
          %v2607 = vpack.c.bf16 %v2472, %v2469
          %v2608 = vpack.c.bf16 %v2473, %v2470
          %v2609 = vpack.c.bf16 %v2474, %v2471
          %v2610 = vpack.c.bf16 %v2478, %v2475
          %v2611 = vpack.c.bf16 %v2479, %v2476
          %v2612 = vpack.c.bf16 %v2480, %v2477
          %v2613 = vpack.c.bf16 %v2484, %v2481
          %v2614 = vpack.c.bf16 %v2485, %v2482
          %v2615 = vpack.c.bf16 %v2486, %v2483
          %v2616 = vpack.c.bf16 %v2490, %v2487
          %v2617 = vpack.c.bf16 %v2491, %v2488
          %v2618 = vpack.c.bf16 %v2492, %v2489
          %v2619 = vpack.c.bf16 %v2496, %v2493
          %v2620 = vpack.c.bf16 %v2497, %v2494
          %v2621 = vpack.c.bf16 %v2498, %v2495
          %v2622 = vpack.c.bf16 %v2502, %v2499
          %v2623 = vpack.c.bf16 %v2503, %v2500
          %v2624 = vpack.c.bf16 %v2504, %v2501
          %v2625 = vpack.c.bf16 %v2508, %v2505
          %v2626 = vpack.c.bf16 %v2509, %v2506
          %v2627 = vpack.c.bf16 %v2510, %v2507
          %v2628 = vpack.c.bf16 %v2514, %v2511
          %v2629 = vpack.c.bf16 %v2515, %v2512
          %v2630 = vpack.c.bf16 %v2516, %v2513
          %v2631 = vpack.c.bf16 %v2520, %v2517
          %v2632 = vpack.c.bf16 %v2521, %v2518
          %v2633 = vpack.c.bf16 %v2522, %v2519
          %v2634 = vpack.c.bf16 %v2526, %v2523
          %v2635 = vpack.c.bf16 %v2527, %v2524
          %v2636 = vpack.c.bf16 %v2528, %v2525
          %v2637 = vpack.c.bf16 %v2532, %v2529
          %v2638 = vpack.c.bf16 %v2533, %v2530
          %v2639 = vpack.c.bf16 %v2534, %v2531
          %v2640 = vpack.c.bf16 %v2538, %v2535
          %v2641 = vpack.c.bf16 %v2539, %v2536
          %v2642 = vpack.c.bf16 %v2540, %v2537
          %v2643 = vpack.c.bf16 %v2544, %v2541
          %v2644 = vpack.c.bf16 %v2545, %v2542
          %v2645 = vpack.c.bf16 %v2546, %v2543
          %v2646 = vpack.c.bf16 %v2550, %v2547
          %v2647 = vpack.c.bf16 %v2551, %v2548
          %v2648 = vpack.c.bf16 %v2552, %v2549
          %v2745 = vunpack.c.l.b16 %v2553
          %v2746 = vunpack.c.l.b16 %v2554
          %v2747 = vunpack.c.l.b16 %v2555
          %v2748 = vunpack.c.h.b16 %v2553
          %v2749 = vunpack.c.h.b16 %v2554
          %v2750 = vunpack.c.h.b16 %v2555
          %v2751 = vunpack.c.l.b16 %v2556
          %v2752 = vunpack.c.l.b16 %v2557
          %v2753 = vunpack.c.l.b16 %v2558
          %v2754 = vunpack.c.h.b16 %v2556
          %v2755 = vunpack.c.h.b16 %v2557
          %v2756 = vunpack.c.h.b16 %v2558
          %v2757 = vunpack.c.l.b16 %v2559
          %v2758 = vunpack.c.l.b16 %v2560
          %v2759 = vunpack.c.l.b16 %v2561
          %v2760 = vunpack.c.h.b16 %v2559
          %v2761 = vunpack.c.h.b16 %v2560
          %v2762 = vunpack.c.h.b16 %v2561
          %v2763 = vunpack.c.l.b16 %v2562
          %v2764 = vunpack.c.l.b16 %v2563
          %v2765 = vunpack.c.l.b16 %v2564
          %v2766 = vunpack.c.h.b16 %v2562
          %v2767 = vunpack.c.h.b16 %v2563
          %v2768 = vunpack.c.h.b16 %v2564
          %v2769 = vunpack.c.l.b16 %v2565
          %v2770 = vunpack.c.l.b16 %v2566
          %v2771 = vunpack.c.l.b16 %v2567
          %v2772 = vunpack.c.h.b16 %v2565
          %v2773 = vunpack.c.h.b16 %v2566
          %v2774 = vunpack.c.h.b16 %v2567
          %v2775 = vunpack.c.l.b16 %v2568
          %v2776 = vunpack.c.l.b16 %v2569
          %v2777 = vunpack.c.l.b16 %v2570
          %v2778 = vunpack.c.h.b16 %v2568
          %v2779 = vunpack.c.h.b16 %v2569
          %v2780 = vunpack.c.h.b16 %v2570
          %v2781 = vunpack.c.l.b16 %v2571
          %v2782 = vunpack.c.l.b16 %v2572
          %v2783 = vunpack.c.l.b16 %v2573
          %v2784 = vunpack.c.h.b16 %v2571
          %v2785 = vunpack.c.h.b16 %v2572
          %v2786 = vunpack.c.h.b16 %v2573
          %v2787 = vunpack.c.l.b16 %v2574
          %v2788 = vunpack.c.l.b16 %v2575
          %v2789 = vunpack.c.l.b16 %v2576
          %v2790 = vunpack.c.h.b16 %v2574
          %v2791 = vunpack.c.h.b16 %v2575
          %v2792 = vunpack.c.h.b16 %v2576
          %v2793 = vunpack.c.l.b16 %v2577
          %v2794 = vunpack.c.l.b16 %v2578
          %v2795 = vunpack.c.l.b16 %v2579
          %v2796 = vunpack.c.h.b16 %v2577
          %v2797 = vunpack.c.h.b16 %v2578
          %v2798 = vunpack.c.h.b16 %v2579
          %v2799 = vunpack.c.l.b16 %v2580
          %v2800 = vunpack.c.l.b16 %v2581
          %v2801 = vunpack.c.l.b16 %v2582
          %v2802 = vunpack.c.h.b16 %v2580
          %v2803 = vunpack.c.h.b16 %v2581
          %v2804 = vunpack.c.h.b16 %v2582
          %v2805 = vunpack.c.l.b16 %v2583
          %v2806 = vunpack.c.l.b16 %v2584
          %v2807 = vunpack.c.l.b16 %v2585
          %v2808 = vunpack.c.h.b16 %v2583
          %v2809 = vunpack.c.h.b16 %v2584
          %v2810 = vunpack.c.h.b16 %v2585
          %v2811 = vunpack.c.l.b16 %v2586
          %v2812 = vunpack.c.l.b16 %v2587
          %v2813 = vunpack.c.l.b16 %v2588
          %v2814 = vunpack.c.h.b16 %v2586
          %v2815 = vunpack.c.h.b16 %v2587
          %v2816 = vunpack.c.h.b16 %v2588
          %v2817 = vunpack.c.l.b16 %v2589
          %v2818 = vunpack.c.l.b16 %v2590
          %v2819 = vunpack.c.l.b16 %v2591
          %v2820 = vunpack.c.h.b16 %v2589
          %v2821 = vunpack.c.h.b16 %v2590
          %v2822 = vunpack.c.h.b16 %v2591
          %v2823 = vunpack.c.l.b16 %v2592
          %v2824 = vunpack.c.l.b16 %v2593
          %v2825 = vunpack.c.l.b16 %v2594
          %v2826 = vunpack.c.h.b16 %v2592
          %v2827 = vunpack.c.h.b16 %v2593
          %v2828 = vunpack.c.h.b16 %v2594
          %v2829 = vunpack.c.l.b16 %v2595
          %v2830 = vunpack.c.l.b16 %v2596
          %v2831 = vunpack.c.l.b16 %v2597
          %v2832 = vunpack.c.h.b16 %v2595
          %v2833 = vunpack.c.h.b16 %v2596
          %v2834 = vunpack.c.h.b16 %v2597
          %v2835 = vunpack.c.l.b16 %v2598
          %v2836 = vunpack.c.l.b16 %v2599
          %v2837 = vunpack.c.l.b16 %v2600
          %v2838 = vunpack.c.h.b16 %v2598
          %v2839 = vunpack.c.h.b16 %v2599
          %v2840 = vunpack.c.h.b16 %v2600
          %v2841 = vunpack.c.l.b16 %v2601
          %v2842 = vunpack.c.l.b16 %v2602
          %v2843 = vunpack.c.l.b16 %v2603
          %v2844 = vunpack.c.h.b16 %v2601
          %v2845 = vunpack.c.h.b16 %v2602
          %v2846 = vunpack.c.h.b16 %v2603
          %v2847 = vunpack.c.l.b16 %v2604
          %v2848 = vunpack.c.l.b16 %v2605
          %v2849 = vunpack.c.l.b16 %v2606
          %v2850 = vunpack.c.h.b16 %v2604
          %v2851 = vunpack.c.h.b16 %v2605
          %v2852 = vunpack.c.h.b16 %v2606
          %v2853 = vunpack.c.l.b16 %v2607
          %v2854 = vunpack.c.l.b16 %v2608
          %v2855 = vunpack.c.l.b16 %v2609
          %v2856 = vunpack.c.h.b16 %v2607
          %v2857 = vunpack.c.h.b16 %v2608
          %v2858 = vunpack.c.h.b16 %v2609
          %v2859 = vunpack.c.l.b16 %v2610
          %v2860 = vunpack.c.l.b16 %v2611
          %v2861 = vunpack.c.l.b16 %v2612
          %v2862 = vunpack.c.h.b16 %v2610
          %v2863 = vunpack.c.h.b16 %v2611
          %v2864 = vunpack.c.h.b16 %v2612
          %v2865 = vunpack.c.l.b16 %v2613
          %v2866 = vunpack.c.l.b16 %v2614
          %v2867 = vunpack.c.l.b16 %v2615
          %v2868 = vunpack.c.h.b16 %v2613
          %v2869 = vunpack.c.h.b16 %v2614
          %v2870 = vunpack.c.h.b16 %v2615
          %v2871 = vunpack.c.l.b16 %v2616
          %v2872 = vunpack.c.l.b16 %v2617
          %v2873 = vunpack.c.l.b16 %v2618
          %v2874 = vunpack.c.h.b16 %v2616
          %v2875 = vunpack.c.h.b16 %v2617
          %v2876 = vunpack.c.h.b16 %v2618
          %v2877 = vunpack.c.l.b16 %v2619
          %v2878 = vunpack.c.l.b16 %v2620
          %v2879 = vunpack.c.l.b16 %v2621
          %v2880 = vunpack.c.h.b16 %v2619
          %v2881 = vunpack.c.h.b16 %v2620
          %v2882 = vunpack.c.h.b16 %v2621
          %v2883 = vunpack.c.l.b16 %v2622
          %v2884 = vunpack.c.l.b16 %v2623
          %v2885 = vunpack.c.l.b16 %v2624
          %v2886 = vunpack.c.h.b16 %v2622
          %v2887 = vunpack.c.h.b16 %v2623
          %v2888 = vunpack.c.h.b16 %v2624
          %v2889 = vunpack.c.l.b16 %v2625
          %v2890 = vunpack.c.l.b16 %v2626
          %v2891 = vunpack.c.l.b16 %v2627
          %v2892 = vunpack.c.h.b16 %v2625
          %v2893 = vunpack.c.h.b16 %v2626
          %v2894 = vunpack.c.h.b16 %v2627
          %v2895 = vunpack.c.l.b16 %v2628
          %v2896 = vunpack.c.l.b16 %v2629
          %v2897 = vunpack.c.l.b16 %v2630
          %v2898 = vunpack.c.h.b16 %v2628
          %v2899 = vunpack.c.h.b16 %v2629
          %v2900 = vunpack.c.h.b16 %v2630
          %v2901 = vunpack.c.l.b16 %v2631
          %v2902 = vunpack.c.l.b16 %v2632
          %v2903 = vunpack.c.l.b16 %v2633
          %v2904 = vunpack.c.h.b16 %v2631
          %v2905 = vunpack.c.h.b16 %v2632
          %v2906 = vunpack.c.h.b16 %v2633
          %v2907 = vunpack.c.l.b16 %v2634
          %v2908 = vunpack.c.l.b16 %v2635
          %v2909 = vunpack.c.l.b16 %v2636
          %v2910 = vunpack.c.h.b16 %v2634
          %v2911 = vunpack.c.h.b16 %v2635
          %v2912 = vunpack.c.h.b16 %v2636
          %v2913 = vunpack.c.l.b16 %v2637
          %v2914 = vunpack.c.l.b16 %v2638
          %v2915 = vunpack.c.l.b16 %v2639
          %v2916 = vunpack.c.h.b16 %v2637
          %v2917 = vunpack.c.h.b16 %v2638
          %v2918 = vunpack.c.h.b16 %v2639
          %v2919 = vunpack.c.l.b16 %v2640
          %v2920 = vunpack.c.l.b16 %v2641
          %v2921 = vunpack.c.l.b16 %v2642
          %v2922 = vunpack.c.h.b16 %v2640
          %v2923 = vunpack.c.h.b16 %v2641
          %v2924 = vunpack.c.h.b16 %v2642
          %v2925 = vunpack.c.l.b16 %v2643
          %v2926 = vunpack.c.l.b16 %v2644
          %v2927 = vunpack.c.l.b16 %v2645
          %v2928 = vunpack.c.h.b16 %v2643
          %v2929 = vunpack.c.h.b16 %v2644
          %v2930 = vunpack.c.h.b16 %v2645
          %v2931 = vunpack.c.l.b16 %v2646
          %v2932 = vunpack.c.l.b16 %v2647
          %v2933 = vunpack.c.l.b16 %v2648
          %v2934 = vunpack.c.h.b16 %v2646
          %v2935 = vunpack.c.h.b16 %v2647
          %v2936 = vunpack.c.h.b16 %v2648
          %v2937 = vpack.c.b16 %v2746, %v2745
          %v2938 = vpack.c.b16 %v2747, %v2747
          %v2939 = vpack.c.b16 %v2749, %v2748
          %v2940 = vpack.c.b16 %v2750, %v2750
          %v2941 = vpack.c.b16 %v2752, %v2751
          %v2942 = vpack.c.b16 %v2753, %v2753
          %v2943 = vpack.c.b16 %v2755, %v2754
          %v2944 = vpack.c.b16 %v2756, %v2756
          %v2945 = vpack.c.b16 %v2758, %v2757
          %v2946 = vpack.c.b16 %v2759, %v2759
          %v2947 = vpack.c.b16 %v2761, %v2760
          %v2948 = vpack.c.b16 %v2762, %v2762
          %v2949 = vpack.c.b16 %v2764, %v2763
          %v2950 = vpack.c.b16 %v2765, %v2765
          %v2951 = vpack.c.b16 %v2767, %v2766
          %v2952 = vpack.c.b16 %v2768, %v2768
          %v2953 = vpack.c.b16 %v2770, %v2769
          %v2954 = vpack.c.b16 %v2771, %v2771
          %v2955 = vpack.c.b16 %v2773, %v2772
          %v2956 = vpack.c.b16 %v2774, %v2774
          %v2957 = vpack.c.b16 %v2776, %v2775
          %v2958 = vpack.c.b16 %v2777, %v2777
          %v2959 = vpack.c.b16 %v2779, %v2778
          %v2960 = vpack.c.b16 %v2780, %v2780
          %v2961 = vpack.c.b16 %v2782, %v2781
          %v2962 = vpack.c.b16 %v2783, %v2783
          %v2963 = vpack.c.b16 %v2785, %v2784
          %v2964 = vpack.c.b16 %v2786, %v2786
          %v2965 = vpack.c.b16 %v2788, %v2787
          %v2966 = vpack.c.b16 %v2789, %v2789
          %v2967 = vpack.c.b16 %v2791, %v2790
          %v2968 = vpack.c.b16 %v2792, %v2792
          %v2969 = vpack.c.b16 %v2794, %v2793
          %v2970 = vpack.c.b16 %v2795, %v2795
          %v2971 = vpack.c.b16 %v2797, %v2796
          %v2972 = vpack.c.b16 %v2798, %v2798
          %v2973 = vpack.c.b16 %v2800, %v2799
          %v2974 = vpack.c.b16 %v2801, %v2801
          %v2975 = vpack.c.b16 %v2803, %v2802
          %v2976 = vpack.c.b16 %v2804, %v2804
          %v2977 = vpack.c.b16 %v2806, %v2805
          %v2978 = vpack.c.b16 %v2807, %v2807
          %v2979 = vpack.c.b16 %v2809, %v2808
          %v2980 = vpack.c.b16 %v2810, %v2810
          %v2981 = vpack.c.b16 %v2812, %v2811
          %v2982 = vpack.c.b16 %v2813, %v2813
          %v2983 = vpack.c.b16 %v2815, %v2814
          %v2984 = vpack.c.b16 %v2816, %v2816
          %v2985 = vpack.c.b16 %v2818, %v2817
          %v2986 = vpack.c.b16 %v2819, %v2819
          %v2987 = vpack.c.b16 %v2821, %v2820
          %v2988 = vpack.c.b16 %v2822, %v2822
          %v2989 = vpack.c.b16 %v2824, %v2823
          %v2990 = vpack.c.b16 %v2825, %v2825
          %v2991 = vpack.c.b16 %v2827, %v2826
          %v2992 = vpack.c.b16 %v2828, %v2828
          %v2993 = vpack.c.b16 %v2830, %v2829
          %v2994 = vpack.c.b16 %v2831, %v2831
          %v2995 = vpack.c.b16 %v2833, %v2832
          %v2996 = vpack.c.b16 %v2834, %v2834
          %v2997 = vpack.c.b16 %v2836, %v2835
          %v2998 = vpack.c.b16 %v2837, %v2837
          %v2999 = vpack.c.b16 %v2839, %v2838
          %v3000 = vpack.c.b16 %v2840, %v2840
          %v3001 = vpack.c.b16 %v2842, %v2841
          %v3002 = vpack.c.b16 %v2843, %v2843
          %v3003 = vpack.c.b16 %v2845, %v2844
          %v3004 = vpack.c.b16 %v2846, %v2846
          %v3005 = vpack.c.b16 %v2848, %v2847
          %v3006 = vpack.c.b16 %v2849, %v2849
          %v3007 = vpack.c.b16 %v2851, %v2850
          %v3008 = vpack.c.b16 %v2852, %v2852
          %v3009 = vpack.c.b16 %v2854, %v2853
          %v3010 = vpack.c.b16 %v2855, %v2855
          %v3011 = vpack.c.b16 %v2857, %v2856
          %v3012 = vpack.c.b16 %v2858, %v2858
          %v3013 = vpack.c.b16 %v2860, %v2859
          %v3014 = vpack.c.b16 %v2861, %v2861
          %v3015 = vpack.c.b16 %v2863, %v2862
          %v3016 = vpack.c.b16 %v2864, %v2864
          %v3017 = vpack.c.b16 %v2866, %v2865
          %v3018 = vpack.c.b16 %v2867, %v2867
          %v3019 = vpack.c.b16 %v2869, %v2868
          %v3020 = vpack.c.b16 %v2870, %v2870
          %v3021 = vpack.c.b16 %v2872, %v2871
          %v3022 = vpack.c.b16 %v2873, %v2873
          %v3023 = vpack.c.b16 %v2875, %v2874
          %v3024 = vpack.c.b16 %v2876, %v2876
          %v3025 = vpack.c.b16 %v2878, %v2877
          %v3026 = vpack.c.b16 %v2879, %v2879
          %v3027 = vpack.c.b16 %v2881, %v2880
          %v3028 = vpack.c.b16 %v2882, %v2882
          %v3029 = vpack.c.b16 %v2884, %v2883
          %v3030 = vpack.c.b16 %v2885, %v2885
          %v3031 = vpack.c.b16 %v2887, %v2886
          %v3032 = vpack.c.b16 %v2888, %v2888
          %v3033 = vpack.c.b16 %v2890, %v2889
          %v3034 = vpack.c.b16 %v2891, %v2891
          %v3035 = vpack.c.b16 %v2893, %v2892
          %v3036 = vpack.c.b16 %v2894, %v2894
          %v3037 = vpack.c.b16 %v2896, %v2895
          %v3038 = vpack.c.b16 %v2897, %v2897
          %v3039 = vpack.c.b16 %v2899, %v2898
          %v3040 = vpack.c.b16 %v2900, %v2900
          %v3041 = vpack.c.b16 %v2902, %v2901
          %v3042 = vpack.c.b16 %v2903, %v2903
          %v3043 = vpack.c.b16 %v2905, %v2904
          %v3044 = vpack.c.b16 %v2906, %v2906
          %v3045 = vpack.c.b16 %v2908, %v2907
          %v3046 = vpack.c.b16 %v2909, %v2909
          %v3047 = vpack.c.b16 %v2911, %v2910
          %v3048 = vpack.c.b16 %v2912, %v2912
          %v3049 = vpack.c.b16 %v2914, %v2913
          %v3050 = vpack.c.b16 %v2915, %v2915
          %v3051 = vpack.c.b16 %v2917, %v2916
          %v3052 = vpack.c.b16 %v2918, %v2918
          %v3053 = vpack.c.b16 %v2920, %v2919
          %v3054 = vpack.c.b16 %v2921, %v2921
          %v3055 = vpack.c.b16 %v2923, %v2922
          %v3056 = vpack.c.b16 %v2924, %v2924
          %v3057 = vpack.c.b16 %v2926, %v2925
          %v3058 = vpack.c.b16 %v2927, %v2927
          %v3059 = vpack.c.b16 %v2929, %v2928
          %v3060 = vpack.c.b16 %v2930, %v2930
          %v3061 = vpack.c.b16 %v2932, %v2931
          %v3062 = vpack.c.b16 %v2933, %v2933
          %v3063 = vpack.c.b16 %v2935, %v2934
          %v3064 = vpack.c.b16 %v2936, %v2936
          %3193 = vst [vmem:[%s232] sm:$0xff] %v2937
          %3194 = vst [vmem:[%s232 + $0x8] sm:$0xf] %v2938
          %3195 = vst [vmem:[%s232 + $0xc] sm:$0xff] %v2939
          %3196 = vst [vmem:[%s232 + $0x14] sm:$0xf] %v2940
          %3197 = vst [vmem:[%s232 + $0x18] sm:$0xff] %v2941
          %3198 = vst [vmem:[%s232 + $0x20] sm:$0xf] %v2942
          %3199 = vst [vmem:[%s232 + $0x24] sm:$0xff] %v2943
          %3200 = vst [vmem:[%s232 + $0x2c] sm:$0xf] %v2944
          %3201 = vst [vmem:[%s232 + $0x30] sm:$0xff] %v2945
          %3202 = vst [vmem:[%s232 + $0x38] sm:$0xf] %v2946
          %3203 = vst [vmem:[%s232 + $0x3c] sm:$0xff] %v2947
          %3204 = vst [vmem:[%s232 + $0x44] sm:$0xf] %v2948
          %3205 = vst [vmem:[%s232 + $0x48] sm:$0xff] %v2949
          %3206 = vst [vmem:[%s232 + $0x50] sm:$0xf] %v2950
          %3207 = vst [vmem:[%s232 + $0x54] sm:$0xff] %v2951
          %3208 = vst [vmem:[%s232 + $0x5c] sm:$0xf] %v2952
          %3209 = vst [vmem:[%s232 + $0x60] sm:$0xff] %v2953
          %3210 = vst [vmem:[%s232 + $0x68] sm:$0xf] %v2954
          %3211 = vst [vmem:[%s232 + $0x6c] sm:$0xff] %v2955
          %3212 = vst [vmem:[%s232 + $0x74] sm:$0xf] %v2956
          %3213 = vst [vmem:[%s232 + $0x78] sm:$0xff] %v2957
          %3214 = vst [vmem:[%s232 + $0x80] sm:$0xf] %v2958
          %3215 = vst [vmem:[%s232 + $0x84] sm:$0xff] %v2959
          %3216 = vst [vmem:[%s232 + $0x8c] sm:$0xf] %v2960
          %3217 = vst [vmem:[%s232 + $0x90] sm:$0xff] %v2961
          %3218 = vst [vmem:[%s232 + $0x98] sm:$0xf] %v2962
          %3219 = vst [vmem:[%s232 + $0x9c] sm:$0xff] %v2963
          %3220 = vst [vmem:[%s232 + $0xa4] sm:$0xf] %v2964
          %3221 = vst [vmem:[%s232 + $0xa8] sm:$0xff] %v2965
          %3222 = vst [vmem:[%s232 + $0xb0] sm:$0xf] %v2966
          %3223 = vst [vmem:[%s232 + $0xb4] sm:$0xff] %v2967
          %3224 = vst [vmem:[%s232 + $0xbc] sm:$0xf] %v2968
          %3225 = vst [vmem:[%s232 + $0xc0] sm:$0xff] %v2969
          %3226 = vst [vmem:[%s232 + $0xc8] sm:$0xf] %v2970
          %3227 = vst [vmem:[%s232 + $0xcc] sm:$0xff] %v2971
          %3228 = vst [vmem:[%s232 + $0xd4] sm:$0xf] %v2972
          %3229 = vst [vmem:[%s232 + $0xd8] sm:$0xff] %v2973
          %3230 = vst [vmem:[%s232 + $0xe0] sm:$0xf] %v2974
          %3231 = vst [vmem:[%s232 + $0xe4] sm:$0xff] %v2975
          %3232 = vst [vmem:[%s232 + $0xec] sm:$0xf] %v2976
          %3233 = vst [vmem:[%s232 + $0xf0] sm:$0xff] %v2977
          %3234 = vst [vmem:[%s232 + $0xf8] sm:$0xf] %v2978
          %3235 = vst [vmem:[%s232 + $0xfc] sm:$0xff] %v2979
          %3236 = vst [vmem:[%s232 + $0x104] sm:$0xf] %v2980
          %3237 = vst [vmem:[%s232 + $0x108] sm:$0xff] %v2981
          %3238 = vst [vmem:[%s232 + $0x110] sm:$0xf] %v2982
          %3239 = vst [vmem:[%s232 + $0x114] sm:$0xff] %v2983
          %3240 = vst [vmem:[%s232 + $0x11c] sm:$0xf] %v2984
          %3241 = vst [vmem:[%s232 + $0x120] sm:$0xff] %v2985
          %3242 = vst [vmem:[%s232 + $0x128] sm:$0xf] %v2986
          %3243 = vst [vmem:[%s232 + $0x12c] sm:$0xff] %v2987
          %3244 = vst [vmem:[%s232 + $0x134] sm:$0xf] %v2988
          %3245 = vst [vmem:[%s232 + $0x138] sm:$0xff] %v2989
          %3246 = vst [vmem:[%s232 + $0x140] sm:$0xf] %v2990
          %3247 = vst [vmem:[%s232 + $0x144] sm:$0xff] %v2991
          %3248 = vst [vmem:[%s232 + $0x14c] sm:$0xf] %v2992
          %3249 = vst [vmem:[%s232 + $0x150] sm:$0xff] %v2993
          %3250 = vst [vmem:[%s232 + $0x158] sm:$0xf] %v2994
          %3251 = vst [vmem:[%s232 + $0x15c] sm:$0xff] %v2995
          %3252 = vst [vmem:[%s232 + $0x164] sm:$0xf] %v2996
          %3253 = vst [vmem:[%s232 + $0x168] sm:$0xff] %v2997
          %3254 = vst [vmem:[%s232 + $0x170] sm:$0xf] %v2998
          %3255 = vst [vmem:[%s232 + $0x174] sm:$0xff] %v2999
          %3256 = vst [vmem:[%s232 + $0x17c] sm:$0xf] %v3000
          %3257 = vst [vmem:[%s232 + $0x180] sm:$0xff] %v3001
          %3258 = vst [vmem:[%s232 + $0x188] sm:$0xf] %v3002
          %3259 = vst [vmem:[%s232 + $0x18c] sm:$0xff] %v3003
          %3260 = vst [vmem:[%s232 + $0x194] sm:$0xf] %v3004
          %3261 = vst [vmem:[%s232 + $0x198] sm:$0xff] %v3005
          %3262 = vst [vmem:[%s232 + $0x1a0] sm:$0xf] %v3006
          %3263 = vst [vmem:[%s232 + $0x1a4] sm:$0xff] %v3007
          %3264 = vst [vmem:[%s232 + $0x1ac] sm:$0xf] %v3008
          %3265 = vst [vmem:[%s232 + $0x1b0] sm:$0xff] %v3009
          %3266 = vst [vmem:[%s232 + $0x1b8] sm:$0xf] %v3010
          %3267 = vst [vmem:[%s232 + $0x1bc] sm:$0xff] %v3011
          %3268 = vst [vmem:[%s232 + $0x1c4] sm:$0xf] %v3012
          %3269 = vst [vmem:[%s232 + $0x1c8] sm:$0xff] %v3013
          %3270 = vst [vmem:[%s232 + $0x1d0] sm:$0xf] %v3014
          %3271 = vst [vmem:[%s232 + $0x1d4] sm:$0xff] %v3015
          %3272 = vst [vmem:[%s232 + $0x1dc] sm:$0xf] %v3016
          %3273 = vst [vmem:[%s232 + $0x1e0] sm:$0xff] %v3017
          %3274 = vst [vmem:[%s232 + $0x1e8] sm:$0xf] %v3018
          %3275 = vst [vmem:[%s232 + $0x1ec] sm:$0xff] %v3019
          %3276 = vst [vmem:[%s232 + $0x1f4] sm:$0xf] %v3020
          %3277 = vst [vmem:[%s232 + $0x1f8] sm:$0xff] %v3021
          %3278 = vst [vmem:[%s232 + $0x200] sm:$0xf] %v3022
          %3279 = vst [vmem:[%s232 + $0x204] sm:$0xff] %v3023
          %3280 = vst [vmem:[%s232 + $0x20c] sm:$0xf] %v3024
          %3281 = vst [vmem:[%s232 + $0x210] sm:$0xff] %v3025
          %3282 = vst [vmem:[%s232 + $0x218] sm:$0xf] %v3026
          %3283 = vst [vmem:[%s232 + $0x21c] sm:$0xff] %v3027
          %3284 = vst [vmem:[%s232 + $0x224] sm:$0xf] %v3028
          %3285 = vst [vmem:[%s232 + $0x228] sm:$0xff] %v3029
          %3286 = vst [vmem:[%s232 + $0x230] sm:$0xf] %v3030
          %3287 = vst [vmem:[%s232 + $0x234] sm:$0xff] %v3031
          %3288 = vst [vmem:[%s232 + $0x23c] sm:$0xf] %v3032
          %3289 = vst [vmem:[%s232 + $0x240] sm:$0xff] %v3033
          %3290 = vst [vmem:[%s232 + $0x248] sm:$0xf] %v3034
          %3291 = vst [vmem:[%s232 + $0x24c] sm:$0xff] %v3035
          %3292 = vst [vmem:[%s232 + $0x254] sm:$0xf] %v3036
          %3293 = vst [vmem:[%s232 + $0x258] sm:$0xff] %v3037
          %3294 = vst [vmem:[%s232 + $0x260] sm:$0xf] %v3038
          %3295 = vst [vmem:[%s232 + $0x264] sm:$0xff] %v3039
          %3296 = vst [vmem:[%s232 + $0x26c] sm:$0xf] %v3040
          %3297 = vst [vmem:[%s232 + $0x270] sm:$0xff] %v3041
          %3298 = vst [vmem:[%s232 + $0x278] sm:$0xf] %v3042
          %3299 = vst [vmem:[%s232 + $0x27c] sm:$0xff] %v3043
          %3300 = vst [vmem:[%s232 + $0x284] sm:$0xf] %v3044
          %3301 = vst [vmem:[%s232 + $0x288] sm:$0xff] %v3045
          %3302 = vst [vmem:[%s232 + $0x290] sm:$0xf] %v3046
          %3303 = vst [vmem:[%s232 + $0x294] sm:$0xff] %v3047
          %3304 = vst [vmem:[%s232 + $0x29c] sm:$0xf] %v3048
          %3305 = vst [vmem:[%s232 + $0x2a0] sm:$0xff] %v3049
          %3306 = vst [vmem:[%s232 + $0x2a8] sm:$0xf] %v3050
          %3307 = vst [vmem:[%s232 + $0x2ac] sm:$0xff] %v3051
          %3308 = vst [vmem:[%s232 + $0x2b4] sm:$0xf] %v3052
          %3309 = vst [vmem:[%s232 + $0x2b8] sm:$0xff] %v3053
          %3310 = vst [vmem:[%s232 + $0x2c0] sm:$0xf] %v3054
          %3311 = vst [vmem:[%s232 + $0x2c4] sm:$0xff] %v3055
          %3312 = vst [vmem:[%s232 + $0x2cc] sm:$0xf] %v3056
          %3313 = vst [vmem:[%s232 + $0x2d0] sm:$0xff] %v3057
          %3314 = vst [vmem:[%s232 + $0x2d8] sm:$0xf] %v3058
          %3315 = vst [vmem:[%s232 + $0x2dc] sm:$0xff] %v3059
          %3316 = vst [vmem:[%s232 + $0x2e4] sm:$0xf] %v3060
          %3317 = vst [vmem:[%s232 + $0x2e8] sm:$0xff] %v3061
          %3318 = vst [vmem:[%s232 + $0x2f0] sm:$0xf] %v3062
          %3319 = vst [vmem:[%s232 + $0x2f4] sm:$0xff] %v3063
          %3320 = vst [vmem:[%s232 + $0x2fc] sm:$0xf] %v3064
        $region44: #{tpu_custom_call.1} parent=27 // pred_fallthru
          _
        %s3321 = sand.u32 %s107, 1
        %s3322 = scalar_lea.sflag [#allocation5], %s3321
        %s3323 = sand.u32 %s107, 1
        %s3324 = smul.addr %s3323, 768
        %s3325 = scalar_lea.vmem [#allocation8], %s3324
        // Predicated region
        $region45: #{tpu_custom_call.1} parent=27 // pred_check
          %p3326 = pneg %p117
        $region46: #{tpu_custom_call.1} parent=27 // pred_check_branch
          %3328 = sbr.rel (%p3326) target = $region48
        $region47: #{tpu_custom_call.1} parent=27 // pred_region
          %s3329 = smul.u32 64, %s27
          %s3330 = smul.u32 3, %s28
          %s3332 = ssub.s32 12288, 12288
          %3333 = vsyncadd %s3322, %s3332
          %s3334 = smul.addr %s3329, 6
          %s3335 = sadd.s32 %s3330, %s3334
          %s3336 = smul.addr %s3335, 64
          %s3337 = scalar_lea.hbm %s2, %s3336
          %s3338 = sshll.u32 %s3325, 4
          %s3339 = int_to_ptr.vmem [resolvable:$true] %s3338
          %3344 = dma.vmem_to_hbm [thread:$0]  %s3339, 12288, %s3337, %s3322, 192, 384, 12
        $region48: #{tpu_custom_call.1} parent=27 // pred_fallthru
          _
      $region28: #{tpu_custom_call.1} parent=5 // pred_fallthru
        _
      %p3345 = scmp.le.s32.totalorder 2, %s17
      // Predicated region
      $region49: #{tpu_custom_call.1} parent=5 // pred_check
        %p3346 = pneg %p3345
      $region50: #{tpu_custom_call.1} parent=5 // pred_check_branch
        %3348 = sbr.rel (%p3346) target = $region52
      $region51: #{tpu_custom_call.1} parent=5 // pred_region
        %s3349 = ssub.s32 %s17, 2
        // Predicated region
        $region53: #{tpu_custom_call.1} parent=51 // pred_check
          %p3350 = pneg %p123
        $region54: #{tpu_custom_call.1} parent=51 // pred_check_branch
          %3352 = sbr.rel (%p3350) target = $region56
        $region55: #{tpu_custom_call.1} parent=51 // pred_region
          %s3353 = sand.u32 %s108, 1
          %s3354 = scalar_lea.sflag [#allocation5], %s3353
          %s3355 = sand.u32 %s108, 1
          %s3356 = smul.addr %s3355, 768
          %s3357 = scalar_lea.vmem [#allocation8], %s3356
          %3358 = dma.done %s3354, 12288
        $region56: #{tpu_custom_call.1} parent=51 // pred_fallthru
          _
      $region52: #{tpu_custom_call.1} parent=5 // pred_fallthru
        _
    $region6: #{tpu_custom_call.1} parent=1 // loop_footer
      %s21 = sadd.s32 1, %s17
    $region7: #{tpu_custom_call.1} parent=1 // loop_footer_branch
      %16 = sbr.rel target = $region3
    $region8: #{tpu_custom_call.1} parent=1 // loop_exit
      _
    %3359 = vsyncpa [#allocation4], 1
    %s3360 = scalar_lea.sflag [#allocation4], 1
    %3361 = vsyncpa %s3360, 1
    %3362 = vsyncpa [#allocation7], 1
    %s3363 = scalar_lea.sflag [#allocation7], 1
    %3364 = vsyncpa %s3363, 1
    %3365 = vsyncpa [#allocation5], 1
    %s3366 = scalar_lea.sflag [#allocation5], 1
    %3367 = vsyncpa %s3366, 1

</llo_original>
